<compile_context>
chip_gen: v6e
topology: v6e:2x2x1
jax: 0.10.0
libtpu: 0.0.40
codegen_flags: <defaults>
</compile_context>

<pallas_src>
import functools

import jax
import jax.numpy as jnp
from jax.experimental import pallas as pl
from jax.experimental.pallas import tpu as pltpu

EPS = 1e-5
# 32 MiB: above the v5e/v6e scoped defaults, leaves headroom inside v7x's 64 MiB physical VMEM.
_VMEM_LIMIT = 32 * 1024 * 1024
# On v7x use (pltpu.CORE_PARALLEL,) to actually shard the grid across the 2 TensorCores.
_DIM_SEM = ("parallel",)


def _cdiv(a, b):
    return -(-a // b)


def _round_up(x, m):
    return _cdiv(x, m) * m


# ---------------------------------------------------------------------------
# Kernels
# ---------------------------------------------------------------------------
def _fused_linear_kernel(*refs, n_rows):
    """out = concat(row_inputs, -1) @ W + b  — single K-stacked MXU pass, f32 accumulate."""
    row_refs = refs[:n_rows]
    w_ref, b_ref, o_ref = refs[n_rows], refs[n_rows + 1], refs[-1]
    if n_rows == 1:
        x = row_refs[0][...]
    else:
        x = jnp.concatenate([r[...] for r in row_refs], axis=-1)
    o_ref[...] = (jnp.dot(x, w_ref[...], preferred_element_type=jnp.float32)
                  + b_ref[...]).astype(o_ref.dtype)


def _proj_res_ln_kernel(a_ref, res_ref, wo_ref, bo_ref, g_ref, be_ref, o_ref):
    """out = LayerNorm(res + a @ Wo + bo)   (dropout = identity)."""
    x = (res_ref[...].astype(jnp.float32)
         + jnp.dot(a_ref[...], wo_ref[...], preferred_element_type=jnp.float32)
         + bo_ref[...])
    m = jnp.mean(x, axis=-1, keepdims=True)
    var = jnp.mean(jnp.square(x - m), axis=-1, keepdims=True)
    o_ref[...] = ((x - m) * jax.lax.rsqrt(var + EPS) * g_ref[...]
                  + be_ref[...]).astype(o_ref.dtype)


def _ffn_ln_kernel(x_ref, w1_ref, b1_ref, w2_ref, b2_ref, g_ref, be_ref, o_ref):
    """out = LayerNorm(x + relu(x @ W1 + b1) @ W2 + b2)."""
    x = x_ref[...]
    h = jnp.maximum(jnp.dot(x, w1_ref[...], preferred_element_type=jnp.float32)
                    + b1_ref[...], 0.0)
    z = jnp.dot(h.astype(w2_ref.dtype), w2_ref[...],
                preferred_element_type=jnp.float32) + b2_ref[...]
    y = x.astype(jnp.float32) + z
    m = jnp.mean(y, axis=-1, keepdims=True)
    var = jnp.mean(jnp.square(y - m), axis=-1, keepdims=True)
    o_ref[...] = ((y - m) * jax.lax.rsqrt(var + EPS) * g_ref[...]
                  + be_ref[...]).astype(o_ref.dtype)


def _softmax_rows(s):
    s = s - jnp.max(s, axis=-1, keepdims=True)
    e = jnp.exp(s)
    # reciprocal + multiply instead of divide (off the VALU slots).
    return e * pl.reciprocal(jnp.sum(e, axis=-1, keepdims=True), approx=False)


def _self_attn_kernel(qkv_ref, o_ref, *, nhead, dh, scale):
    """qkv_ref: (tb, L, 3D) packed [q | k | v]; output (tb, L, D); heads split in-kernel."""
    D = nhead * dh
    x = qkv_ref[...]
    outs = []
    for h in range(nhead):
        lo, hi = h * dh, (h + 1) * dh
        q = x[:, :, lo:hi]
        k = x[:, :, D + lo:D + hi]
        v = x[:, :, 2 * D + lo:2 * D + hi]
        s = jnp.einsum('bqd,bkd->bqk', q, k, preferred_element_type=jnp.float32) * scale
        p = _softmax_rows(s).astype(x.dtype)
        outs.append(jnp.einsum('bqk,bkd->bqd', p, v, preferred_element_type=jnp.float32))
    # TODO(synk): attn_mask / key_padding_mask not supported (None-only path).
    o_ref[...] = jnp.concatenate(outs, axis=-1).astype(o_ref.dtype)


def _cross_attn_kernel(q_ref, kv_ref, o_ref, *, nhead, dh, scale):
    """q_ref: (tb, L, 2D) = [q_content | q_sine]; kv_ref: (tb, S, 3D) = [k_base | k_pos | v].

    Per-head concat of the PyTorch module is computed as a sum of two per-head dot products
    (concat along the contraction dim == sum of dots), so 2x-wide q/k are never materialized.
    """
    D = nhead * dh
    q = q_ref[...]
    kv = kv_ref[...]
    outs = []
    for h in range(nhead):
        lo, hi = h * dh, (h + 1) * dh
        s = jnp.einsum('bqd,bkd->bqk', q[:, :, lo:hi], kv[:, :, lo:hi],
                       preferred_element_type=jnp.float32)
        s = s + jnp.einsum('bqd,bkd->bqk', q[:, :, D + lo:D + hi], kv[:, :, D + lo:D + hi],
                           preferred_element_type=jnp.float32)
        p = _softmax_rows(s * scale).astype(kv.dtype)
        outs.append(jnp.einsum('bqk,bkd->bqd', p, kv[:, :, 2 * D + lo:2 * D + hi],
                               preferred_element_type=jnp.float32))
    o_ref[...] = jnp.concatenate(outs, axis=-1).astype(o_ref.dtype)


# ---------------------------------------------------------------------------
# pallas_call wrappers
# ---------------------------------------------------------------------------
def _row_call(kernel, row_inputs, const_inputs, dout, *, out_dtype, tm=256, min_steps=4):
    """Run kernel(row_refs..., const_refs..., o_ref) tiled over rows.

    grid = cdiv(M, tile); no host-side pad/slice — Pallas partial-block handling covers the
    ragged tail (all kernels here are per-row independent, OOB rows are never written back).
    """
    M = row_inputs[0].shape[0]
    align = 8 if jnp.dtype(row_inputs[0].dtype).itemsize == 4 else 16
    tm = max(align, min(_round_up(tm, align), _round_up(_cdiv(M, min_steps), align)))
    nsteps = _cdiv(M, tm)

    def row_spec(ncol):
        return pl.BlockSpec((tm, ncol), lambda i: (i, 0))

    in_specs = ([row_spec(x.shape[1]) for x in row_inputs]
                + [pl.BlockSpec(c.shape, lambda i: (0, 0)) for c in const_inputs])

    return pl.pallas_call(
        kernel,
        out_shape=jax.ShapeDtypeStruct((M, dout), out_dtype),
        grid_spec=pltpu.PrefetchScalarGridSpec(
            num_scalar_prefetch=0,
            grid=(nsteps,),
            in_specs=in_specs,
            out_specs=row_spec(dout)),
        compiler_params=pltpu.CompilerParams(
            dimension_semantics=_DIM_SEM,
            vmem_limit_bytes=_VMEM_LIMIT),
    )(*row_inputs, *const_inputs)


def _attn_call(kernel, inputs_3d, q_len, dout, out_dtype, *, tb=None,
               per_step_budget=8 * 1024 * 1024):
    """Attention over (B, seq, D*) slabs, gridded over batch blocks of size tb."""
    B = inputs_3d[0].shape[0]
    if tb is None:
        tb = max(1, B // 2)                      # >= 2 grid steps when possible

        def footprint(t):
            by = sum(t * a.shape[1] * a.shape[2] * jnp.dtype(a.dtype).itemsize
                     for a in inputs_3d)
            by += t * q_len * dout * jnp.dtype(out_dtype).itemsize
            return 2 * by                        # double-buffered pipeline

        while tb > 1 and footprint(tb) > per_step_budget:
            tb = _cdiv(tb, 2)
    nsteps = _cdiv(B, tb)
    in_specs = [pl.BlockSpec((tb,) + a.shape[1:], lambda i: (i, 0, 0)) for a in inputs_3d]
    return pl.pallas_call(
        kernel,
        out_shape=jax.ShapeDtypeStruct((B, q_len, dout), out_dtype),
        grid_spec=pltpu.PrefetchScalarGridSpec(
            num_scalar_prefetch=0,
            grid=(nsteps,),
            in_specs=in_specs,
            out_specs=pl.BlockSpec((tb, q_len, dout), lambda i: (i, 0, 0))),
        compiler_params=pltpu.CompilerParams(
            dimension_semantics=_DIM_SEM,
            vmem_limit_bytes=_VMEM_LIMIT),
    )(*inputs_3d)


# ---------------------------------------------------------------------------
# Full decoder layer (eval mode)
# ---------------------------------------------------------------------------
def vt_decoder_layer(tgt, memory, pos, query_pos, query_sine_embed, params, *,
                     nhead, is_first=False, compute_dtype=None, tm=256):
    L, B, D = tgt.shape
    S = memory.shape[0]
    H = nhead
    dh = D // H
    P = params
    cd = jnp.dtype(compute_dtype) if compute_dtype is not None else tgt.dtype

    def cw(name):                       # weight (in, out) in compute dtype
        return P[name + '_w'].astype(cd)

    def fb(name):                       # bias (1, out) kept in f32
        return P[name + '_b'].astype(jnp.float32)

    def f32(x):
        return x.astype(jnp.float32)

    zDD = jnp.zeros((D, D), cd)

    def bm2d(x):                        # (seq, B, D) -> (B*seq, D) batch-major rows
        return jnp.transpose(x, (1, 0, 2)).reshape(B * x.shape[0], D).astype(cd)

    x2d = bm2d(tgt)                     # residual / content stream
    qpos2d = bm2d(query_pos)
    qsin2d = bm2d(query_sine_embed)
    mem2d = bm2d(memory)
    pos2d = bm2d(pos)

    # -------- self-attention: fused [tgt | query_pos] @ W -> [q | k | v] --------
    # (weight stacking is a one-time prep in production; done inline here.)
    W_sa = jnp.concatenate([
        jnp.concatenate([cw('sa_qc'), cw('sa_kc'), cw('sa_v')], axis=1),
        jnp.concatenate([cw('sa_qp'), cw('sa_kp'), zDD], axis=1)], axis=0)        # (2D, 3D)
    b_sa = jnp.concatenate([fb('sa_qc') + fb('sa_qp'),
                            fb('sa_kc') + fb('sa_kp'),
                            fb('sa_v')], axis=1)                                   # (1, 3D)
    qkv = _row_call(functools.partial(_fused_linear_kernel, n_rows=2),
                    [x2d, qpos2d], [W_sa, b_sa], 3 * D, out_dtype=cd, tm=tm)       # (B*L, 3D)

    sa_out = _attn_call(
        functools.partial(_self_attn_kernel, nhead=H, dh=dh, scale=float(dh) ** -0.5),
        [qkv.reshape(B, L, 3 * D)], L, D, cd)                                      # (B, L, D)

    x2d = _row_call(_proj_res_ln_kernel,
                    [sa_out.reshape(B * L, D), x2d],
                    [cw('sa_out'), fb('sa_out'), f32(P['g1']), f32(P['be1'])],
                    D, out_dtype=cd, tm=tm)

    # -------- cross-attention --------
    if is_first:    # keep_query_pos=False; is_first mirrors the PyTorch flag
        W_q = jnp.concatenate([
            jnp.concatenate([cw('ca_qc'), zDD], axis=1),
            jnp.concatenate([cw('ca_qp'), zDD], axis=1),
            jnp.concatenate([zDD, cw('ca_qs')], axis=1)], axis=0)                  # (3D, 2D)
        b_q = jnp.concatenate([fb('ca_qc') + fb('ca_qp'), fb('ca_qs')], axis=1)
        q_rows, nq = [x2d, qpos2d, qsin2d], 3
    else:
        W_q = jnp.concatenate([
            jnp.concatenate([cw('ca_qc'), zDD], axis=1),
            jnp.concatenate([zDD, cw('ca_qs')], axis=1)], axis=0)                  # (2D, 2D)
        b_q = jnp.concatenate([fb('ca_qc'), fb('ca_qs')], axis=1)
        q_rows, nq = [x2d, qsin2d], 2
    qcat = _row_call(functools.partial(_fused_linear_kernel, n_rows=nq),
                     q_rows, [W_q, b_q], 2 * D, out_dtype=cd, tm=tm)               # (B*L, 2D)

    W_kv = jnp.concatenate([
        jnp.concatenate([cw('ca_kc'), zDD, cw('ca_v')], axis=1),
        jnp.concatenate([cw('ca_kp') if is_first else zDD, cw('ca_kp'), zDD], axis=1)],
        axis=0)                                                                     # (2D, 3D)
    b_kv = jnp.concatenate([fb('ca_kc') + (fb('ca_kp') if is_first else 0.0),
                            fb('ca_kp'), fb('ca_v')], axis=1)
    kv = _row_call(functools.partial(_fused_linear_kernel, n_rows=2),
                   [mem2d, pos2d], [W_kv, b_kv], 3 * D, out_dtype=cd, tm=tm)        # (B*S, 3D)

    ca_out = _attn_call(
        functools.partial(_cross_attn_kernel, nhead=H, dh=dh, scale=float(2 * dh) ** -0.5),
        [qcat.reshape(B, L, 2 * D), kv.reshape(B, S, 3 * D)], L, D, cd)             # (B, L, D)

    x2d = _row_call(_proj_res_ln_kernel,
                    [ca_out.reshape(B * L, D), x2d],
                    [cw('ca_out'), fb('ca_out'), f32(P['g2']), f32(P['be2'])],
                    D, out_dtype=cd, tm=tm)

    # -------- FFN --------
    x2d = _row_call(_ffn_ln_kernel,
                    [x2d],
                    [P['w1'].astype(cd), P['b1'].astype(jnp.float32),
                     P['w2'].astype(cd), P['b2'].astype(jnp.float32),
                     f32(P['g3']), f32(P['be3'])],
                    D, out_dtype=cd, tm=tm)

    return jnp.transpose(x2d.reshape(B, L, D), (1, 0, 2)).astype(tgt.dtype)


# ---------------------------------------------------------------------------
# Pure-JAX reference mirroring the PyTorch forward (eval mode)
# ---------------------------------------------------------------------------
def reference(tgt, memory, pos, query_pos, query_sine_embed, P, *, nhead, is_first):
    L, B, D = tgt.shape
    S = memory.shape[0]
    dh = D // nhead

    def lin(x, name):
        return x @ P[name + '_w'] + P[name + '_b']

    def ln(x, g, b):
        m = jnp.mean(x, axis=-1, keepdims=True)
        v = jnp.mean((x - m) ** 2, axis=-1, keepdims=True)
        return (x - m) / jnp.sqrt(v + EPS) * g + b

    def mha(q, k, v, out_name):
        Lq, Bq, Dq = q.shape
        Sk = k.shape[0]
        Dv = v.shape[2]
        hd = Dq // nhead
        vd = Dv // nhead
        scale = float(hd) ** -0.5
        qh = (q * scale).reshape(Lq, Bq, nhead, hd).transpose(1, 2, 0, 3)
        kh = k.reshape(Sk, Bq, nhead, hd).transpose(1, 2, 0, 3)
        vh = v.reshape(Sk, Bq, nhead, vd).transpose(1, 2, 0, 3)
        s = jnp.einsum('bhqd,bhkd->bhqk', qh, kh)
        p = jax.nn.softmax(s, axis=-1)
        o = jnp.einsum('bhqk,bhkd->bhqd', p, vh)
        o = o.transpose(2, 0, 1, 3).reshape(Lq, Bq, nhead * vd)
        return o @ P[out_name + '_w'] + P[out_name + '_b']

    # self-attention
    q = lin(tgt, 'sa_qc') + lin(query_pos, 'sa_qp')
    k = lin(tgt, 'sa_kc') + lin(query_pos, 'sa_kp')
    v = lin(tgt, 'sa_v')
    x = ln(tgt + mha(q, k, v, 'sa_out'), P['g1'], P['be1'])

    # cross-attention
    q_content = lin(x, 'ca_qc')
    k_content = lin(memory, 'ca_kc')
    v = lin(memory, 'ca_v')
    k_pos = lin(pos, 'ca_kp')
    if is_first:
        q = q_content + lin(query_pos, 'ca_qp')
        k = k_content + k_pos
    else:
        q = q_content
        k = k_content
    qse = lin(query_sine_embed, 'ca_qs')
    q = jnp.concatenate(
        [q.reshape(L, B, nhead, dh), qse.reshape(L, B, nhead, dh)], axis=3
    ).reshape(L, B, 2 * D)
    k = jnp.concatenate(
        [k.reshape(S, B, nhead, dh), k_pos.reshape(S, B, nhead, dh)], axis=3
    ).reshape(S, B, 2 * D)
    x = ln(x + mha(q, k, v, 'ca_out'), P['g2'], P['be2'])

    # FFN
    y = jax.nn.relu(x @ P['w1'] + P['b1']) @ P['w2'] + P['b2']
    return ln(x + y, P['g3'], P['be3'])


if __name__ == "__main__":
    # num_queries, memory_len, batch, d_model, nhead, dim_feedforward
    L, S, B, D, H, FF = 8, 16, 2, 32, 4, 64

    key = jax.random.PRNGKey(0)
    keys = iter(jax.random.split(key, 64))

    def rnd(shape, scale=0.1):
        return scale * jax.random.normal(next(keys), shape, jnp.float32)

    params = {}
    for name in ['sa_qc', 'sa_qp', 'sa_kc', 'sa_kp', 'sa_v', 'sa_out',
                 'ca_qc', 'ca_qp', 'ca_kc', 'ca_kp', 'ca_v', 'ca_qs', 'ca_out']:
        params[name + '_w'] = rnd((D, D))      # stored as (in, out) = torch weight.T
        params[name + '_b'] = rnd((1, D))
    params['w1'] = rnd((D, FF)); params['b1'] = rnd((1, FF))
    params['w2'] = rnd((FF, D)); params['b2'] = rnd((1, D))
    for i in (1, 2, 3):
        params[f'g{i}'] = 1.0 + 0.05 * jax.random.normal(next(keys), (1, D), jnp.float32)
        params[f'be{i}'] = 0.05 * jax.random.normal(next(keys), (1, D), jnp.float32)

    tgt = jax.random.normal(next(keys), (L, B, D), jnp.float32)
    memory = jax.random.normal(next(keys), (S, B, D), jnp.float32)
    pos = jax.random.normal(next(keys), (S, B, D), jnp.float32)
    query_pos = jax.random.normal(next(keys), (L, B, D), jnp.float32)
    query_sine_embed = jax.random.normal(next(keys), (L, B, D), jnp.float32)

    ref = reference(tgt, memory, pos, query_pos, query_sine_embed, params,
                    nhead=H, is_first=True)

    # f32 compute path (tight check against the f32 reference)
    layer_f32 = jax.jit(functools.partial(vt_decoder_layer, nhead=H, is_first=True))
    out = layer_f32(tgt, memory, pos, query_pos, query_sine_embed, params)
    out = jax.block_until_ready(out)
    assert out.shape == (L, B, D)
    err = float(jnp.max(jnp.abs(out - ref)))
    assert jnp.allclose(out, ref, atol=2e-3, rtol=2e-3), f"f32 mismatch vs reference: {err}"

    # bf16 compute path (halves HBM traffic, doubles MXU rate; f32 accumulate + f32 LN stats)
    layer_bf16 = jax.jit(functools.partial(vt_decoder_layer, nhead=H, is_first=True,
                                           compute_dtype=jnp.bfloat16))
    out16 = layer_bf16(tgt, memory, pos, query_pos, query_sine_embed, params)
    out16 = jax.block_until_ready(out16)
    err16 = float(jnp.max(jnp.abs(out16.astype(jnp.float32) - ref)))
    assert bool(jnp.all(jnp.isfinite(out16))) and err16 < 0.1, \
        f"bf16 mismatch vs reference: {err16}"

    print("KERNEL_OK")
</pallas_src>

<mosaic_0001>
module attributes {stable_mosaic.version = 11 : i64} {
  func.func @_self_attn_kernel(%arg0: i32, %arg1: memref<1x8x96xf32, #tpu.memory_space<vmem>>, %arg2: memref<1x8x32xf32, #tpu.memory_space<vmem>>) attributes {dimension_semantics = [#tpu.dimension_semantics<parallel>], iteration_bounds = array<i64: 2>, scalar_prefetch = 0 : i64, scratch_operands = 0 : i64, tpu.core_type = #tpu.core_type<tc>, window_params = [{transform_indices = @transform_0, window_bounds = array<i64: 1, 8, 96>}, {transform_indices = @transform_1, window_bounds = array<i64: 1, 8, 32>}]} {
    %c0 = arith.constant 0 : index
    %c0_0 = arith.constant 0 : index
    %c0_1 = arith.constant 0 : index
    %0 = vector.load %arg1[%c0, %c0_0, %c0_1] : memref<1x8x96xf32, #tpu.memory_space<vmem>>, vector<1x8x96xf32>
    %1 = vector.extract_strided_slice %0 {offsets = [0, 0, 0], sizes = [1, 8, 8], strides = [1, 1, 1]} : vector<1x8x96xf32> to vector<1x8x8xf32>
    %2 = vector.extract_strided_slice %0 {offsets = [0, 0, 32], sizes = [1, 8, 8], strides = [1, 1, 1]} : vector<1x8x96xf32> to vector<1x8x8xf32>
    %3 = vector.extract_strided_slice %0 {offsets = [0, 0, 64], sizes = [1, 8, 8], strides = [1, 1, 1]} : vector<1x8x96xf32> to vector<1x8x8xf32>
    "tpu.trace_start"() <{level = 10 : i32, message = "bqd,bkd->bqk"}> : () -> ()
    %cst = arith.constant dense<0.000000e+00> : vector<1x8x8xf32>
    %4 = tpu.matmul %1, %2, %cst {dimension_numbers = #tpu.dot_dimension_numbers<[2], [2], [1], [1], [0, 0, 0, 1, 1, 1], [0], [0]>} : vector<1x8x8xf32>, vector<1x8x8xf32>, vector<1x8x8xf32> -> vector<1x8x8xf32>
    "tpu.trace_stop"() : () -> ()
    %cst_2 = arith.constant 0.353553385 : f32
    %5 = vector.broadcast %cst_2 : f32 to vector<1x8x8xf32>
    %6 = arith.mulf %4, %5 : vector<1x8x8xf32>
    %cst_3 = arith.constant dense<0xFF800000> : vector<1x8xf32>
    %7 = vector.multi_reduction <maximumf>, %6, %cst_3 [2] : vector<1x8x8xf32> to vector<1x8xf32>
    %8 = vector.shape_cast %7 : vector<1x8xf32> to vector<1x8x1xf32>
    %9 = vector.broadcast %8 : vector<1x8x1xf32> to vector<1x8x8xf32>
    %10 = arith.subf %6, %9 : vector<1x8x8xf32>
    %11 = math.exp %10 : vector<1x8x8xf32>
    %cst_4 = arith.constant dense<0.000000e+00> : vector<1x8xf32>
    %12 = vector.multi_reduction <add>, %11, %cst_4 [2] : vector<1x8x8xf32> to vector<1x8xf32>
    %13 = vector.shape_cast %12 : vector<1x8xf32> to vector<1x8x1xf32>
    %14 = tpu.reciprocal %13 : vector<1x8x1xf32> -> vector<1x8x1xf32>
    %15 = vector.broadcast %14 : vector<1x8x1xf32> to vector<1x8x8xf32>
    %16 = arith.mulf %11, %15 : vector<1x8x8xf32>
    "tpu.trace_start"() <{level = 10 : i32, message = "bqk,bkd->bqd"}> : () -> ()
    %cst_5 = arith.constant dense<0.000000e+00> : vector<1x8x8xf32>
    %17 = tpu.matmul %16, %3, %cst_5 {dimension_numbers = #tpu.dot_dimension_numbers<[2], [1], [1], [2], [0, 0, 0, 1, 1, 2], [0], [0]>} : vector<1x8x8xf32>, vector<1x8x8xf32>, vector<1x8x8xf32> -> vector<1x8x8xf32>
    "tpu.trace_stop"() : () -> ()
    %18 = vector.extract_strided_slice %0 {offsets = [0, 0, 8], sizes = [1, 8, 8], strides = [1, 1, 1]} : vector<1x8x96xf32> to vector<1x8x8xf32>
    %19 = vector.extract_strided_slice %0 {offsets = [0, 0, 40], sizes = [1, 8, 8], strides = [1, 1, 1]} : vector<1x8x96xf32> to vector<1x8x8xf32>
    %20 = vector.extract_strided_slice %0 {offsets = [0, 0, 72], sizes = [1, 8, 8], strides = [1, 1, 1]} : vector<1x8x96xf32> to vector<1x8x8xf32>
    "tpu.trace_start"() <{level = 10 : i32, message = "bqd,bkd->bqk"}> : () -> ()
    %cst_6 = arith.constant dense<0.000000e+00> : vector<1x8x8xf32>
    %21 = tpu.matmul %18, %19, %cst_6 {dimension_numbers = #tpu.dot_dimension_numbers<[2], [2], [1], [1], [0, 0, 0, 1, 1, 1], [0], [0]>} : vector<1x8x8xf32>, vector<1x8x8xf32>, vector<1x8x8xf32> -> vector<1x8x8xf32>
    "tpu.trace_stop"() : () -> ()
    %cst_7 = arith.constant 0.353553385 : f32
    %22 = vector.broadcast %cst_7 : f32 to vector<1x8x8xf32>
    %23 = arith.mulf %21, %22 : vector<1x8x8xf32>
    %cst_8 = arith.constant dense<0xFF800000> : vector<1x8xf32>
    %24 = vector.multi_reduction <maximumf>, %23, %cst_8 [2] : vector<1x8x8xf32> to vector<1x8xf32>
    %25 = vector.shape_cast %24 : vector<1x8xf32> to vector<1x8x1xf32>
    %26 = vector.broadcast %25 : vector<1x8x1xf32> to vector<1x8x8xf32>
    %27 = arith.subf %23, %26 : vector<1x8x8xf32>
    %28 = math.exp %27 : vector<1x8x8xf32>
    %cst_9 = arith.constant dense<0.000000e+00> : vector<1x8xf32>
    %29 = vector.multi_reduction <add>, %28, %cst_9 [2] : vector<1x8x8xf32> to vector<1x8xf32>
    %30 = vector.shape_cast %29 : vector<1x8xf32> to vector<1x8x1xf32>
    %31 = tpu.reciprocal %30 : vector<1x8x1xf32> -> vector<1x8x1xf32>
    %32 = vector.broadcast %31 : vector<1x8x1xf32> to vector<1x8x8xf32>
    %33 = arith.mulf %28, %32 : vector<1x8x8xf32>
    "tpu.trace_start"() <{level = 10 : i32, message = "bqk,bkd->bqd"}> : () -> ()
    %cst_10 = arith.constant dense<0.000000e+00> : vector<1x8x8xf32>
    %34 = tpu.matmul %33, %20, %cst_10 {dimension_numbers = #tpu.dot_dimension_numbers<[2], [1], [1], [2], [0, 0, 0, 1, 1, 2], [0], [0]>} : vector<1x8x8xf32>, vector<1x8x8xf32>, vector<1x8x8xf32> -> vector<1x8x8xf32>
    "tpu.trace_stop"() : () -> ()
    %35 = vector.extract_strided_slice %0 {offsets = [0, 0, 16], sizes = [1, 8, 8], strides = [1, 1, 1]} : vector<1x8x96xf32> to vector<1x8x8xf32>
    %36 = vector.extract_strided_slice %0 {offsets = [0, 0, 48], sizes = [1, 8, 8], strides = [1, 1, 1]} : vector<1x8x96xf32> to vector<1x8x8xf32>
    %37 = vector.extract_strided_slice %0 {offsets = [0, 0, 80], sizes = [1, 8, 8], strides = [1, 1, 1]} : vector<1x8x96xf32> to vector<1x8x8xf32>
    "tpu.trace_start"() <{level = 10 : i32, message = "bqd,bkd->bqk"}> : () -> ()
    %cst_11 = arith.constant dense<0.000000e+00> : vector<1x8x8xf32>
    %38 = tpu.matmul %35, %36, %cst_11 {dimension_numbers = #tpu.dot_dimension_numbers<[2], [2], [1], [1], [0, 0, 0, 1, 1, 1], [0], [0]>} : vector<1x8x8xf32>, vector<1x8x8xf32>, vector<1x8x8xf32> -> vector<1x8x8xf32>
    "tpu.trace_stop"() : () -> ()
    %cst_12 = arith.constant 0.353553385 : f32
    %39 = vector.broadcast %cst_12 : f32 to vector<1x8x8xf32>
    %40 = arith.mulf %38, %39 : vector<1x8x8xf32>
    %cst_13 = arith.constant dense<0xFF800000> : vector<1x8xf32>
    %41 = vector.multi_reduction <maximumf>, %40, %cst_13 [2] : vector<1x8x8xf32> to vector<1x8xf32>
    %42 = vector.shape_cast %41 : vector<1x8xf32> to vector<1x8x1xf32>
    %43 = vector.broadcast %42 : vector<1x8x1xf32> to vector<1x8x8xf32>
    %44 = arith.subf %40, %43 : vector<1x8x8xf32>
    %45 = math.exp %44 : vector<1x8x8xf32>
    %cst_14 = arith.constant dense<0.000000e+00> : vector<1x8xf32>
    %46 = vector.multi_reduction <add>, %45, %cst_14 [2] : vector<1x8x8xf32> to vector<1x8xf32>
    %47 = vector.shape_cast %46 : vector<1x8xf32> to vector<1x8x1xf32>
    %48 = tpu.reciprocal %47 : vector<1x8x1xf32> -> vector<1x8x1xf32>
    %49 = vector.broadcast %48 : vector<1x8x1xf32> to vector<1x8x8xf32>
    %50 = arith.mulf %45, %49 : vector<1x8x8xf32>
    "tpu.trace_start"() <{level = 10 : i32, message = "bqk,bkd->bqd"}> : () -> ()
    %cst_15 = arith.constant dense<0.000000e+00> : vector<1x8x8xf32>
    %51 = tpu.matmul %50, %37, %cst_15 {dimension_numbers = #tpu.dot_dimension_numbers<[2], [1], [1], [2], [0, 0, 0, 1, 1, 2], [0], [0]>} : vector<1x8x8xf32>, vector<1x8x8xf32>, vector<1x8x8xf32> -> vector<1x8x8xf32>
    "tpu.trace_stop"() : () -> ()
    %52 = vector.extract_strided_slice %0 {offsets = [0, 0, 24], sizes = [1, 8, 8], strides = [1, 1, 1]} : vector<1x8x96xf32> to vector<1x8x8xf32>
    %53 = vector.extract_strided_slice %0 {offsets = [0, 0, 56], sizes = [1, 8, 8], strides = [1, 1, 1]} : vector<1x8x96xf32> to vector<1x8x8xf32>
    %54 = vector.extract_strided_slice %0 {offsets = [0, 0, 88], sizes = [1, 8, 8], strides = [1, 1, 1]} : vector<1x8x96xf32> to vector<1x8x8xf32>
    "tpu.trace_start"() <{level = 10 : i32, message = "bqd,bkd->bqk"}> : () -> ()
    %cst_16 = arith.constant dense<0.000000e+00> : vector<1x8x8xf32>
    %55 = tpu.matmul %52, %53, %cst_16 {dimension_numbers = #tpu.dot_dimension_numbers<[2], [2], [1], [1], [0, 0, 0, 1, 1, 1], [0], [0]>} : vector<1x8x8xf32>, vector<1x8x8xf32>, vector<1x8x8xf32> -> vector<1x8x8xf32>
    "tpu.trace_stop"() : () -> ()
    %cst_17 = arith.constant 0.353553385 : f32
    %56 = vector.broadcast %cst_17 : f32 to vector<1x8x8xf32>
    %57 = arith.mulf %55, %56 : vector<1x8x8xf32>
    %cst_18 = arith.constant dense<0xFF800000> : vector<1x8xf32>
    %58 = vector.multi_reduction <maximumf>, %57, %cst_18 [2] : vector<1x8x8xf32> to vector<1x8xf32>
    %59 = vector.shape_cast %58 : vector<1x8xf32> to vector<1x8x1xf32>
    %60 = vector.broadcast %59 : vector<1x8x1xf32> to vector<1x8x8xf32>
    %61 = arith.subf %57, %60 : vector<1x8x8xf32>
    %62 = math.exp %61 : vector<1x8x8xf32>
    %cst_19 = arith.constant dense<0.000000e+00> : vector<1x8xf32>
    %63 = vector.multi_reduction <add>, %62, %cst_19 [2] : vector<1x8x8xf32> to vector<1x8xf32>
    %64 = vector.shape_cast %63 : vector<1x8xf32> to vector<1x8x1xf32>
    %65 = tpu.reciprocal %64 : vector<1x8x1xf32> -> vector<1x8x1xf32>
    %66 = vector.broadcast %65 : vector<1x8x1xf32> to vector<1x8x8xf32>
    %67 = arith.mulf %62, %66 : vector<1x8x8xf32>
    "tpu.trace_start"() <{level = 10 : i32, message = "bqk,bkd->bqd"}> : () -> ()
    %cst_20 = arith.constant dense<0.000000e+00> : vector<1x8x8xf32>
    %68 = tpu.matmul %67, %54, %cst_20 {dimension_numbers = #tpu.dot_dimension_numbers<[2], [1], [1], [2], [0, 0, 0, 1, 1, 2], [0], [0]>} : vector<1x8x8xf32>, vector<1x8x8xf32>, vector<1x8x8xf32> -> vector<1x8x8xf32>
    "tpu.trace_stop"() : () -> ()
    %69 = tpu.concatenate %17, %34, %51, %68 in 2 : vector<1x8x8xf32>, vector<1x8x8xf32>, vector<1x8x8xf32>, vector<1x8x8xf32> -> vector<1x8x32xf32>
    %c0_21 = arith.constant 0 : index
    %c0_22 = arith.constant 0 : index
    %c0_23 = arith.constant 0 : index
    %70 = vector.load %arg2[%c0_21, %c0_22, %c0_23] : memref<1x8x32xf32, #tpu.memory_space<vmem>>, vector<1x8x32xf32>
    tpu.vector_store %arg2[%c0_21, %c0_22, %c0_23], %69 {strides = array<i32>} : memref<1x8x32xf32, #tpu.memory_space<vmem>>, vector<1x8x32xf32>,
    return
  }
  func.func @transform_0(%arg0: i32) -> (i32, i32, i32) {
    %c0_i32 = arith.constant 0 : i32
    %c0_i32_0 = arith.constant 0 : i32
    %c0_i32_1 = arith.constant 0 : i32
    return %arg0, %c0_i32, %c0_i32_0 : i32, i32, i32
  }
  func.func @transform_1(%arg0: i32) -> (i32, i32, i32) {
    %c0_i32 = arith.constant 0 : i32
    %c0_i32_0 = arith.constant 0 : i32
    %c0_i32_1 = arith.constant 0 : i32
    return %arg0, %c0_i32, %c0_i32_0 : i32, i32, i32
  }
}

module attributes {stable_mosaic.version = 11 : i64} {
  func.func @_fused_linear_kernel(%arg0: i32, %arg1: memref<8x32xf32, #tpu.memory_space<vmem>>, %arg2: memref<8x32xf32, #tpu.memory_space<vmem>>, %arg3: memref<64x96xf32, #tpu.memory_space<vmem>>, %arg4: memref<1x96xf32, #tpu.memory_space<vmem>>, %arg5: memref<8x96xf32, #tpu.memory_space<vmem>>) attributes {dimension_semantics = [#tpu.dimension_semantics<parallel>], iteration_bounds = array<i64: 2>, scalar_prefetch = 0 : i64, scratch_operands = 0 : i64, tpu.core_type = #tpu.core_type<tc>, window_params = [{transform_indices = @transform_0, window_bounds = array<i64: 8, 32>}, {transform_indices = @transform_1, window_bounds = array<i64: 8, 32>}, {pipeline_mode = #tpu.pipeline_mode<synchronous>, transform_indices = @transform_2, window_bounds = array<i64: 64, 96>}, {pipeline_mode = #tpu.pipeline_mode<synchronous>, transform_indices = @transform_3, window_bounds = array<i64: 1, 96>}, {transform_indices = @transform_4, window_bounds = array<i64: 8, 96>}]} {
    %c0 = arith.constant 0 : index
    %c0_0 = arith.constant 0 : index
    %0 = vector.load %arg1[%c0, %c0_0] : memref<8x32xf32, #tpu.memory_space<vmem>>, vector<8x32xf32>
    %c0_1 = arith.constant 0 : index
    %c0_2 = arith.constant 0 : index
    %1 = vector.load %arg2[%c0_1, %c0_2] : memref<8x32xf32, #tpu.memory_space<vmem>>, vector<8x32xf32>
    %2 = tpu.concatenate %0, %1 in 1 : vector<8x32xf32>, vector<8x32xf32> -> vector<8x64xf32>
    %c0_3 = arith.constant 0 : index
    %c0_4 = arith.constant 0 : index
    %3 = vector.load %arg3[%c0_3, %c0_4] : memref<64x96xf32, #tpu.memory_space<vmem>>, vector<64x96xf32>
    %cst = arith.constant dense<0.000000e+00> : vector<8x96xf32>
    %4 = tpu.matmul %2, %3, %cst {dimension_numbers = #tpu.dot_dimension_numbers<[1], [0], [0], [1], [0, 0, 1, 1], [], []>} : vector<8x64xf32>, vector<64x96xf32>, vector<8x96xf32> -> vector<8x96xf32>
    %c0_5 = arith.constant 0 : index
    %c0_6 = arith.constant 0 : index
    %5 = vector.load %arg4[%c0_5, %c0_6] : memref<1x96xf32, #tpu.memory_space<vmem>>, vector<1x96xf32>
    %6 = vector.broadcast %5 : vector<1x96xf32> to vector<8x96xf32>
    %7 = arith.addf %4, %6 : vector<8x96xf32>
    %c0_7 = arith.constant 0 : index
    %c0_8 = arith.constant 0 : index
    %8 = vector.load %arg5[%c0_7, %c0_8] : memref<8x96xf32, #tpu.memory_space<vmem>>, vector<8x96xf32>
    tpu.vector_store %arg5[%c0_7, %c0_8], %7 {strides = array<i32>} : memref<8x96xf32, #tpu.memory_space<vmem>>, vector<8x96xf32>,
    return
  }
  func.func @transform_0(%arg0: i32) -> (i32, i32) {
    %c0_i32 = arith.constant 0 : i32
    %c0_i32_0 = arith.constant 0 : i32
    return %arg0, %c0_i32 : i32, i32
  }
  func.func @transform_1(%arg0: i32) -> (i32, i32) {
    %c0_i32 = arith.constant 0 : i32
    %c0_i32_0 = arith.constant 0 : i32
    return %arg0, %c0_i32 : i32, i32
  }
  func.func @transform_2(%arg0: i32) -> (i32, i32) {
    %c0_i32 = arith.constant 0 : i32
    %c0_i32_0 = arith.constant 0 : i32
    %c0_i32_1 = arith.constant 0 : i32
    return %c0_i32, %c0_i32_0 : i32, i32
  }
  func.func @transform_3(%arg0: i32) -> (i32, i32) {
    %c0_i32 = arith.constant 0 : i32
    %c0_i32_0 = arith.constant 0 : i32
    %c0_i32_1 = arith.constant 0 : i32
    return %c0_i32, %c0_i32_0 : i32, i32
  }
  func.func @transform_4(%arg0: i32) -> (i32, i32) {
    %c0_i32 = arith.constant 0 : i32
    %c0_i32_0 = arith.constant 0 : i32
    return %arg0, %c0_i32 : i32, i32
  }
}

module attributes {stable_mosaic.version = 11 : i64} {
  func.func @_proj_res_ln_kernel(%arg0: i32, %arg1: memref<8x32xf32, #tpu.memory_space<vmem>>, %arg2: memref<8x32xf32, #tpu.memory_space<vmem>>, %arg3: memref<32x32xf32, #tpu.memory_space<vmem>>, %arg4: memref<1x32xf32, #tpu.memory_space<vmem>>, %arg5: memref<1x32xf32, #tpu.memory_space<vmem>>, %arg6: memref<1x32xf32, #tpu.memory_space<vmem>>, %arg7: memref<8x32xf32, #tpu.memory_space<vmem>>) attributes {dimension_semantics = [#tpu.dimension_semantics<parallel>], iteration_bounds = array<i64: 2>, scalar_prefetch = 0 : i64, scratch_operands = 0 : i64, tpu.core_type = #tpu.core_type<tc>, window_params = [{transform_indices = @transform_0, window_bounds = array<i64: 8, 32>}, {transform_indices = @transform_1, window_bounds = array<i64: 8, 32>}, {pipeline_mode = #tpu.pipeline_mode<synchronous>, transform_indices = @transform_2, window_bounds = array<i64: 32, 32>}, {pipeline_mode = #tpu.pipeline_mode<synchronous>, transform_indices = @transform_3, window_bounds = array<i64: 1, 32>}, {pipeline_mode = #tpu.pipeline_mode<synchronous>, transform_indices = @transform_4, window_bounds = array<i64: 1, 32>}, {pipeline_mode = #tpu.pipeline_mode<synchronous>, transform_indices = @transform_5, window_bounds = array<i64: 1, 32>}, {transform_indices = @transform_6, window_bounds = array<i64: 8, 32>}]} {
    %c0 = arith.constant 0 : index
    %c0_0 = arith.constant 0 : index
    %0 = vector.load %arg2[%c0, %c0_0] : memref<8x32xf32, #tpu.memory_space<vmem>>, vector<8x32xf32>
    %c0_1 = arith.constant 0 : index
    %c0_2 = arith.constant 0 : index
    %1 = vector.load %arg1[%c0_1, %c0_2] : memref<8x32xf32, #tpu.memory_space<vmem>>, vector<8x32xf32>
    %c0_3 = arith.constant 0 : index
    %c0_4 = arith.constant 0 : index
    %2 = vector.load %arg3[%c0_3, %c0_4] : memref<32x32xf32, #tpu.memory_space<vmem>>, vector<32x32xf32>
    %cst = arith.constant dense<0.000000e+00> : vector<8x32xf32>
    %3 = tpu.matmul %1, %2, %cst {dimension_numbers = #tpu.dot_dimension_numbers<[1], [0], [0], [1], [0, 0, 1, 1], [], []>} : vector<8x32xf32>, vector<32x32xf32>, vector<8x32xf32> -> vector<8x32xf32>
    %4 = arith.addf %0, %3 : vector<8x32xf32>
    %c0_5 = arith.constant 0 : index
    %c0_6 = arith.constant 0 : index
    %5 = vector.load %arg4[%c0_5, %c0_6] : memref<1x32xf32, #tpu.memory_space<vmem>>, vector<1x32xf32>
    %6 = vector.broadcast %5 : vector<1x32xf32> to vector<8x32xf32>
    %7 = arith.addf %4, %6 : vector<8x32xf32>
    %cst_7 = arith.constant dense<0.000000e+00> : vector<8xf32>
    %8 = vector.multi_reduction <add>, %7, %cst_7 [1] : vector<8x32xf32> to vector<8xf32>
    %9 = vector.shape_cast %8 : vector<8xf32> to vector<8x1xf32>
    %cst_8 = arith.constant 3.200000e+01 : f32
    %10 = vector.broadcast %cst_8 : f32 to vector<8x1xf32>
    %11 = arith.divf %9, %10 : vector<8x1xf32>
    %12 = vector.broadcast %11 : vector<8x1xf32> to vector<8x32xf32>
    %13 = arith.subf %7, %12 : vector<8x32xf32>
    %14 = arith.mulf %13, %13 : vector<8x32xf32>
    %cst_9 = arith.constant dense<0.000000e+00> : vector<8xf32>
    %15 = vector.multi_reduction <add>, %14, %cst_9 [1] : vector<8x32xf32> to vector<8xf32>
    %16 = vector.shape_cast %15 : vector<8xf32> to vector<8x1xf32>
    %cst_10 = arith.constant 3.200000e+01 : f32
    %17 = vector.broadcast %cst_10 : f32 to vector<8x1xf32>
    %18 = arith.divf %16, %17 : vector<8x1xf32>
    %19 = vector.broadcast %11 : vector<8x1xf32> to vector<8x32xf32>
    %20 = arith.subf %7, %19 : vector<8x32xf32>
    %cst_11 = arith.constant 9.99999974E-6 : f32
    %21 = vector.broadcast %cst_11 : f32 to vector<8x1xf32>
    %22 = arith.addf %18, %21 : vector<8x1xf32>
    %23 = math.rsqrt %22 : vector<8x1xf32>
    %24 = vector.broadcast %23 : vector<8x1xf32> to vector<8x32xf32>
    %25 = arith.mulf %20, %24 : vector<8x32xf32>
    %c0_12 = arith.constant 0 : index
    %c0_13 = arith.constant 0 : index
    %26 = vector.load %arg5[%c0_12, %c0_13] : memref<1x32xf32, #tpu.memory_space<vmem>>, vector<1x32xf32>
    %27 = vector.broadcast %26 : vector<1x32xf32> to vector<8x32xf32>
    %28 = arith.mulf %25, %27 : vector<8x32xf32>
    %c0_14 = arith.constant 0 : index
    %c0_15 = arith.constant 0 : index
    %29 = vector.load %arg6[%c0_14, %c0_15] : memref<1x32xf32, #tpu.memory_space<vmem>>, vector<1x32xf32>
    %30 = vector.broadcast %29 : vector<1x32xf32> to vector<8x32xf32>
    %31 = arith.addf %28, %30 : vector<8x32xf32>
    %c0_16 = arith.constant 0 : index
    %c0_17 = arith.constant 0 : index
    %32 = vector.load %arg7[%c0_16, %c0_17] : memref<8x32xf32, #tpu.memory_space<vmem>>, vector<8x32xf32>
    tpu.vector_store %arg7[%c0_16, %c0_17], %31 {strides = array<i32>} : memref<8x32xf32, #tpu.memory_space<vmem>>, vector<8x32xf32>,
    return
  }
  func.func @transform_0(%arg0: i32) -> (i32, i32) {
    %c0_i32 = arith.constant 0 : i32
    %c0_i32_0 = arith.constant 0 : i32
    return %arg0, %c0_i32 : i32, i32
  }
  func.func @transform_1(%arg0: i32) -> (i32, i32) {
    %c0_i32 = arith.constant 0 : i32
    %c0_i32_0 = arith.constant 0 : i32
    return %arg0, %c0_i32 : i32, i32
  }
  func.func @transform_2(%arg0: i32) -> (i32, i32) {
    %c0_i32 = arith.constant 0 : i32
    %c0_i32_0 = arith.constant 0 : i32
    %c0_i32_1 = arith.constant 0 : i32
    return %c0_i32, %c0_i32_0 : i32, i32
  }
  func.func @transform_3(%arg0: i32) -> (i32, i32) {
    %c0_i32 = arith.constant 0 : i32
    %c0_i32_0 = arith.constant 0 : i32
    %c0_i32_1 = arith.constant 0 : i32
    return %c0_i32, %c0_i32_0 : i32, i32
  }
  func.func @transform_4(%arg0: i32) -> (i32, i32) {
    %c0_i32 = arith.constant 0 : i32
    %c0_i32_0 = arith.constant 0 : i32
    %c0_i32_1 = arith.constant 0 : i32
    return %c0_i32, %c0_i32_0 : i32, i32
  }
  func.func @transform_5(%arg0: i32) -> (i32, i32) {
    %c0_i32 = arith.constant 0 : i32
    %c0_i32_0 = arith.constant 0 : i32
    %c0_i32_1 = arith.constant 0 : i32
    return %c0_i32, %c0_i32_0 : i32, i32
  }
  func.func @transform_6(%arg0: i32) -> (i32, i32) {
    %c0_i32 = arith.constant 0 : i32
    %c0_i32_0 = arith.constant 0 : i32
    return %arg0, %c0_i32 : i32, i32
  }
}

module attributes {stable_mosaic.version = 11 : i64} {
  func.func @_fused_linear_kernel(%arg0: i32, %arg1: memref<8x32xf32, #tpu.memory_space<vmem>>, %arg2: memref<8x32xf32, #tpu.memory_space<vmem>>, %arg3: memref<8x32xf32, #tpu.memory_space<vmem>>, %arg4: memref<96x64xf32, #tpu.memory_space<vmem>>, %arg5: memref<1x64xf32, #tpu.memory_space<vmem>>, %arg6: memref<8x64xf32, #tpu.memory_space<vmem>>) attributes {dimension_semantics = [#tpu.dimension_semantics<parallel>], iteration_bounds = array<i64: 2>, scalar_prefetch = 0 : i64, scratch_operands = 0 : i64, tpu.core_type = #tpu.core_type<tc>, window_params = [{transform_indices = @transform_0, window_bounds = array<i64: 8, 32>}, {transform_indices = @transform_1, window_bounds = array<i64: 8, 32>}, {transform_indices = @transform_2, window_bounds = array<i64: 8, 32>}, {pipeline_mode = #tpu.pipeline_mode<synchronous>, transform_indices = @transform_3, window_bounds = array<i64: 96, 64>}, {pipeline_mode = #tpu.pipeline_mode<synchronous>, transform_indices = @transform_4, window_bounds = array<i64: 1, 64>}, {transform_indices = @transform_5, window_bounds = array<i64: 8, 64>}]} {
    %c0 = arith.constant 0 : index
    %c0_0 = arith.constant 0 : index
    %0 = vector.load %arg1[%c0, %c0_0] : memref<8x32xf32, #tpu.memory_space<vmem>>, vector<8x32xf32>
    %c0_1 = arith.constant 0 : index
    %c0_2 = arith.constant 0 : index
    %1 = vector.load %arg2[%c0_1, %c0_2] : memref<8x32xf32, #tpu.memory_space<vmem>>, vector<8x32xf32>
    %c0_3 = arith.constant 0 : index
    %c0_4 = arith.constant 0 : index
    %2 = vector.load %arg3[%c0_3, %c0_4] : memref<8x32xf32, #tpu.memory_space<vmem>>, vector<8x32xf32>
    %3 = tpu.concatenate %0, %1, %2 in 1 : vector<8x32xf32>, vector<8x32xf32>, vector<8x32xf32> -> vector<8x96xf32>
    %c0_5 = arith.constant 0 : index
    %c0_6 = arith.constant 0 : index
    %4 = vector.load %arg4[%c0_5, %c0_6] : memref<96x64xf32, #tpu.memory_space<vmem>>, vector<96x64xf32>
    %cst = arith.constant dense<0.000000e+00> : vector<8x64xf32>
    %5 = tpu.matmul %3, %4, %cst {dimension_numbers = #tpu.dot_dimension_numbers<[1], [0], [0], [1], [0, 0, 1, 1], [], []>} : vector<8x96xf32>, vector<96x64xf32>, vector<8x64xf32> -> vector<8x64xf32>
    %c0_7 = arith.constant 0 : index
    %c0_8 = arith.constant 0 : index
    %6 = vector.load %arg5[%c0_7, %c0_8] : memref<1x64xf32, #tpu.memory_space<vmem>>, vector<1x64xf32>
    %7 = vector.broadcast %6 : vector<1x64xf32> to vector<8x64xf32>
    %8 = arith.addf %5, %7 : vector<8x64xf32>
    %c0_9 = arith.constant 0 : index
    %c0_10 = arith.constant 0 : index
    %9 = vector.load %arg6[%c0_9, %c0_10] : memref<8x64xf32, #tpu.memory_space<vmem>>, vector<8x64xf32>
    tpu.vector_store %arg6[%c0_9, %c0_10], %8 {strides = array<i32>} : memref<8x64xf32, #tpu.memory_space<vmem>>, vector<8x64xf32>,
    return
  }
  func.func @transform_0(%arg0: i32) -> (i32, i32) {
    %c0_i32 = arith.constant 0 : i32
    %c0_i32_0 = arith.constant 0 : i32
    return %arg0, %c0_i32 : i32, i32
  }
  func.func @transform_1(%arg0: i32) -> (i32, i32) {
    %c0_i32 = arith.constant 0 : i32
    %c0_i32_0 = arith.constant 0 : i32
    return %arg0, %c0_i32 : i32, i32
  }
  func.func @transform_2(%arg0: i32) -> (i32, i32) {
    %c0_i32 = arith.constant 0 : i32
    %c0_i32_0 = arith.constant 0 : i32
    return %arg0, %c0_i32 : i32, i32
  }
  func.func @transform_3(%arg0: i32) -> (i32, i32) {
    %c0_i32 = arith.constant 0 : i32
    %c0_i32_0 = arith.constant 0 : i32
    %c0_i32_1 = arith.constant 0 : i32
    return %c0_i32, %c0_i32_0 : i32, i32
  }
  func.func @transform_4(%arg0: i32) -> (i32, i32) {
    %c0_i32 = arith.constant 0 : i32
    %c0_i32_0 = arith.constant 0 : i32
    %c0_i32_1 = arith.constant 0 : i32
    return %c0_i32, %c0_i32_0 : i32, i32
  }
  func.func @transform_5(%arg0: i32) -> (i32, i32) {
    %c0_i32 = arith.constant 0 : i32
    %c0_i32_0 = arith.constant 0 : i32
    return %arg0, %c0_i32 : i32, i32
  }
}

module attributes {stable_mosaic.version = 11 : i64} {
  func.func @_fused_linear_kernel(%arg0: i32, %arg1: memref<8x32xf32, #tpu.memory_space<vmem>>, %arg2: memref<8x32xf32, #tpu.memory_space<vmem>>, %arg3: memref<64x96xf32, #tpu.memory_space<vmem>>, %arg4: memref<1x96xf32, #tpu.memory_space<vmem>>, %arg5: memref<8x96xf32, #tpu.memory_space<vmem>>) attributes {dimension_semantics = [#tpu.dimension_semantics<parallel>], iteration_bounds = array<i64: 4>, scalar_prefetch = 0 : i64, scratch_operands = 0 : i64, tpu.core_type = #tpu.core_type<tc>, window_params = [{transform_indices = @transform_0, window_bounds = array<i64: 8, 32>}, {transform_indices = @transform_1, window_bounds = array<i64: 8, 32>}, {pipeline_mode = #tpu.pipeline_mode<synchronous>, transform_indices = @transform_2, window_bounds = array<i64: 64, 96>}, {pipeline_mode = #tpu.pipeline_mode<synchronous>, transform_indices = @transform_3, window_bounds = array<i64: 1, 96>}, {transform_indices = @transform_4, window_bounds = array<i64: 8, 96>}]} {
    %c0 = arith.constant 0 : index
    %c0_0 = arith.constant 0 : index
    %0 = vector.load %arg1[%c0, %c0_0] : memref<8x32xf32, #tpu.memory_space<vmem>>, vector<8x32xf32>
    %c0_1 = arith.constant 0 : index
    %c0_2 = arith.constant 0 : index
    %1 = vector.load %arg2[%c0_1, %c0_2] : memref<8x32xf32, #tpu.memory_space<vmem>>, vector<8x32xf32>
    %2 = tpu.concatenate %0, %1 in 1 : vector<8x32xf32>, vector<8x32xf32> -> vector<8x64xf32>
    %c0_3 = arith.constant 0 : index
    %c0_4 = arith.constant 0 : index
    %3 = vector.load %arg3[%c0_3, %c0_4] : memref<64x96xf32, #tpu.memory_space<vmem>>, vector<64x96xf32>
    %cst = arith.constant dense<0.000000e+00> : vector<8x96xf32>
    %4 = tpu.matmul %2, %3, %cst {dimension_numbers = #tpu.dot_dimension_numbers<[1], [0], [0], [1], [0, 0, 1, 1], [], []>} : vector<8x64xf32>, vector<64x96xf32>, vector<8x96xf32> -> vector<8x96xf32>
    %c0_5 = arith.constant 0 : index
    %c0_6 = arith.constant 0 : index
    %5 = vector.load %arg4[%c0_5, %c0_6] : memref<1x96xf32, #tpu.memory_space<vmem>>, vector<1x96xf32>
    %6 = vector.broadcast %5 : vector<1x96xf32> to vector<8x96xf32>
    %7 = arith.addf %4, %6 : vector<8x96xf32>
    %c0_7 = arith.constant 0 : index
    %c0_8 = arith.constant 0 : index
    %8 = vector.load %arg5[%c0_7, %c0_8] : memref<8x96xf32, #tpu.memory_space<vmem>>, vector<8x96xf32>
    tpu.vector_store %arg5[%c0_7, %c0_8], %7 {strides = array<i32>} : memref<8x96xf32, #tpu.memory_space<vmem>>, vector<8x96xf32>,
    return
  }
  func.func @transform_0(%arg0: i32) -> (i32, i32) {
    %c0_i32 = arith.constant 0 : i32
    %c0_i32_0 = arith.constant 0 : i32
    return %arg0, %c0_i32 : i32, i32
  }
  func.func @transform_1(%arg0: i32) -> (i32, i32) {
    %c0_i32 = arith.constant 0 : i32
    %c0_i32_0 = arith.constant 0 : i32
    return %arg0, %c0_i32 : i32, i32
  }
  func.func @transform_2(%arg0: i32) -> (i32, i32) {
    %c0_i32 = arith.constant 0 : i32
    %c0_i32_0 = arith.constant 0 : i32
    %c0_i32_1 = arith.constant 0 : i32
    return %c0_i32, %c0_i32_0 : i32, i32
  }
  func.func @transform_3(%arg0: i32) -> (i32, i32) {
    %c0_i32 = arith.constant 0 : i32
    %c0_i32_0 = arith.constant 0 : i32
    %c0_i32_1 = arith.constant 0 : i32
    return %c0_i32, %c0_i32_0 : i32, i32
  }
  func.func @transform_4(%arg0: i32) -> (i32, i32) {
    %c0_i32 = arith.constant 0 : i32
    %c0_i32_0 = arith.constant 0 : i32
    return %arg0, %c0_i32 : i32, i32
  }
}

module attributes {stable_mosaic.version = 11 : i64} {
  func.func @_cross_attn_kernel(%arg0: i32, %arg1: memref<1x8x64xf32, #tpu.memory_space<vmem>>, %arg2: memref<1x16x96xf32, #tpu.memory_space<vmem>>, %arg3: memref<1x8x32xf32, #tpu.memory_space<vmem>>) attributes {dimension_semantics = [#tpu.dimension_semantics<parallel>], iteration_bounds = array<i64: 2>, scalar_prefetch = 0 : i64, scratch_operands = 0 : i64, tpu.core_type = #tpu.core_type<tc>, window_params = [{transform_indices = @transform_0, window_bounds = array<i64: 1, 8, 64>}, {transform_indices = @transform_1, window_bounds = array<i64: 1, 16, 96>}, {transform_indices = @transform_2, window_bounds = array<i64: 1, 8, 32>}]} {
    %c0 = arith.constant 0 : index
    %c0_0 = arith.constant 0 : index
    %c0_1 = arith.constant 0 : index
    %0 = vector.load %arg1[%c0, %c0_0, %c0_1] : memref<1x8x64xf32, #tpu.memory_space<vmem>>, vector<1x8x64xf32>
    %c0_2 = arith.constant 0 : index
    %c0_3 = arith.constant 0 : index
    %c0_4 = arith.constant 0 : index
    %1 = vector.load %arg2[%c0_2, %c0_3, %c0_4] : memref<1x16x96xf32, #tpu.memory_space<vmem>>, vector<1x16x96xf32>
    %2 = vector.extract_strided_slice %0 {offsets = [0, 0, 0], sizes = [1, 8, 8], strides = [1, 1, 1]} : vector<1x8x64xf32> to vector<1x8x8xf32>
    %3 = vector.extract_strided_slice %1 {offsets = [0, 0, 0], sizes = [1, 16, 8], strides = [1, 1, 1]} : vector<1x16x96xf32> to vector<1x16x8xf32>
    "tpu.trace_start"() <{level = 10 : i32, message = "bqd,bkd->bqk"}> : () -> ()
    %cst = arith.constant dense<0.000000e+00> : vector<1x8x16xf32>
    %4 = tpu.matmul %2, %3, %cst {dimension_numbers = #tpu.dot_dimension_numbers<[2], [2], [1], [1], [0, 0, 0, 1, 1, 1], [0], [0]>} : vector<1x8x8xf32>, vector<1x16x8xf32>, vector<1x8x16xf32> -> vector<1x8x16xf32>
    "tpu.trace_stop"() : () -> ()
    %5 = vector.extract_strided_slice %0 {offsets = [0, 0, 32], sizes = [1, 8, 8], strides = [1, 1, 1]} : vector<1x8x64xf32> to vector<1x8x8xf32>
    %6 = vector.extract_strided_slice %1 {offsets = [0, 0, 32], sizes = [1, 16, 8], strides = [1, 1, 1]} : vector<1x16x96xf32> to vector<1x16x8xf32>
    "tpu.trace_start"() <{level = 10 : i32, message = "bqd,bkd->bqk"}> : () -> ()
    %cst_5 = arith.constant dense<0.000000e+00> : vector<1x8x16xf32>
    %7 = tpu.matmul %5, %6, %cst_5 {dimension_numbers = #tpu.dot_dimension_numbers<[2], [2], [1], [1], [0, 0, 0, 1, 1, 1], [0], [0]>} : vector<1x8x8xf32>, vector<1x16x8xf32>, vector<1x8x16xf32> -> vector<1x8x16xf32>
    "tpu.trace_stop"() : () -> ()
    %8 = arith.addf %4, %7 : vector<1x8x16xf32>
    %cst_6 = arith.constant 2.500000e-01 : f32
    %9 = vector.broadcast %cst_6 : f32 to vector<1x8x16xf32>
    %10 = arith.mulf %8, %9 : vector<1x8x16xf32>
    %cst_7 = arith.constant dense<0xFF800000> : vector<1x8xf32>
    %11 = vector.multi_reduction <maximumf>, %10, %cst_7 [2] : vector<1x8x16xf32> to vector<1x8xf32>
    %12 = vector.shape_cast %11 : vector<1x8xf32> to vector<1x8x1xf32>
    %13 = vector.broadcast %12 : vector<1x8x1xf32> to vector<1x8x16xf32>
    %14 = arith.subf %10, %13 : vector<1x8x16xf32>
    %15 = math.exp %14 : vector<1x8x16xf32>
    %cst_8 = arith.constant dense<0.000000e+00> : vector<1x8xf32>
    %16 = vector.multi_reduction <add>, %15, %cst_8 [2] : vector<1x8x16xf32> to vector<1x8xf32>
    %17 = vector.shape_cast %16 : vector<1x8xf32> to vector<1x8x1xf32>
    %18 = tpu.reciprocal %17 : vector<1x8x1xf32> -> vector<1x8x1xf32>
    %19 = vector.broadcast %18 : vector<1x8x1xf32> to vector<1x8x16xf32>
    %20 = arith.mulf %15, %19 : vector<1x8x16xf32>
    %21 = vector.extract_strided_slice %1 {offsets = [0, 0, 64], sizes = [1, 16, 8], strides = [1, 1, 1]} : vector<1x16x96xf32> to vector<1x16x8xf32>
    "tpu.trace_start"() <{level = 10 : i32, message = "bqk,bkd->bqd"}> : () -> ()
    %cst_9 = arith.constant dense<0.000000e+00> : vector<1x8x8xf32>
    %22 = tpu.matmul %20, %21, %cst_9 {dimension_numbers = #tpu.dot_dimension_numbers<[2], [1], [1], [2], [0, 0, 0, 1, 1, 2], [0], [0]>} : vector<1x8x16xf32>, vector<1x16x8xf32>, vector<1x8x8xf32> -> vector<1x8x8xf32>
    "tpu.trace_stop"() : () -> ()
    %23 = vector.extract_strided_slice %0 {offsets = [0, 0, 8], sizes = [1, 8, 8], strides = [1, 1, 1]} : vector<1x8x64xf32> to vector<1x8x8xf32>
    %24 = vector.extract_strided_slice %1 {offsets = [0, 0, 8], sizes = [1, 16, 8], strides = [1, 1, 1]} : vector<1x16x96xf32> to vector<1x16x8xf32>
    "tpu.trace_start"() <{level = 10 : i32, message = "bqd,bkd->bqk"}> : () -> ()
    %cst_10 = arith.constant dense<0.000000e+00> : vector<1x8x16xf32>
    %25 = tpu.matmul %23, %24, %cst_10 {dimension_numbers = #tpu.dot_dimension_numbers<[2], [2], [1], [1], [0, 0, 0, 1, 1, 1], [0], [0]>} : vector<1x8x8xf32>, vector<1x16x8xf32>, vector<1x8x16xf32> -> vector<1x8x16xf32>
    "tpu.trace_stop"() : () -> ()
    %26 = vector.extract_strided_slice %0 {offsets = [0, 0, 40], sizes = [1, 8, 8], strides = [1, 1, 1]} : vector<1x8x64xf32> to vector<1x8x8xf32>
    %27 = vector.extract_strided_slice %1 {offsets = [0, 0, 40], sizes = [1, 16, 8], strides = [1, 1, 1]} : vector<1x16x96xf32> to vector<1x16x8xf32>
    "tpu.trace_start"() <{level = 10 : i32, message = "bqd,bkd->bqk"}> : () -> ()
    %cst_11 = arith.constant dense<0.000000e+00> : vector<1x8x16xf32>
    %28 = tpu.matmul %26, %27, %cst_11 {dimension_numbers = #tpu.dot_dimension_numbers<[2], [2], [1], [1], [0, 0, 0, 1, 1, 1], [0], [0]>} : vector<1x8x8xf32>, vector<1x16x8xf32>, vector<1x8x16xf32> -> vector<1x8x16xf32>
    "tpu.trace_stop"() : () -> ()
    %29 = arith.addf %25, %28 : vector<1x8x16xf32>
    %cst_12 = arith.constant 2.500000e-01 : f32
    %30 = vector.broadcast %cst_12 : f32 to vector<1x8x16xf32>
    %31 = arith.mulf %29, %30 : vector<1x8x16xf32>
    %cst_13 = arith.constant dense<0xFF800000> : vector<1x8xf32>
    %32 = vector.multi_reduction <maximumf>, %31, %cst_13 [2] : vector<1x8x16xf32> to vector<1x8xf32>
    %33 = vector.shape_cast %32 : vector<1x8xf32> to vector<1x8x1xf32>
    %34 = vector.broadcast %33 : vector<1x8x1xf32> to vector<1x8x16xf32>
    %35 = arith.subf %31, %34 : vector<1x8x16xf32>
    %36 = math.exp %35 : vector<1x8x16xf32>
    %cst_14 = arith.constant dense<0.000000e+00> : vector<1x8xf32>
    %37 = vector.multi_reduction <add>, %36, %cst_14 [2] : vector<1x8x16xf32> to vector<1x8xf32>
    %38 = vector.shape_cast %37 : vector<1x8xf32> to vector<1x8x1xf32>
    %39 = tpu.reciprocal %38 : vector<1x8x1xf32> -> vector<1x8x1xf32>
    %40 = vector.broadcast %39 : vector<1x8x1xf32> to vector<1x8x16xf32>
    %41 = arith.mulf %36, %40 : vector<1x8x16xf32>
    %42 = vector.extract_strided_slice %1 {offsets = [0, 0, 72], sizes = [1, 16, 8], strides = [1, 1, 1]} : vector<1x16x96xf32> to vector<1x16x8xf32>
    "tpu.trace_start"() <{level = 10 : i32, message = "bqk,bkd->bqd"}> : () -> ()
    %cst_15 = arith.constant dense<0.000000e+00> : vector<1x8x8xf32>
    %43 = tpu.matmul %41, %42, %cst_15 {dimension_numbers = #tpu.dot_dimension_numbers<[2], [1], [1], [2], [0, 0, 0, 1, 1, 2], [0], [0]>} : vector<1x8x16xf32>, vector<1x16x8xf32>, vector<1x8x8xf32> -> vector<1x8x8xf32>
    "tpu.trace_stop"() : () -> ()
    %44 = vector.extract_strided_slice %0 {offsets = [0, 0, 16], sizes = [1, 8, 8], strides = [1, 1, 1]} : vector<1x8x64xf32> to vector<1x8x8xf32>
    %45 = vector.extract_strided_slice %1 {offsets = [0, 0, 16], sizes = [1, 16, 8], strides = [1, 1, 1]} : vector<1x16x96xf32> to vector<1x16x8xf32>
    "tpu.trace_start"() <{level = 10 : i32, message = "bqd,bkd->bqk"}> : () -> ()
    %cst_16 = arith.constant dense<0.000000e+00> : vector<1x8x16xf32>
    %46 = tpu.matmul %44, %45, %cst_16 {dimension_numbers = #tpu.dot_dimension_numbers<[2], [2], [1], [1], [0, 0, 0, 1, 1, 1], [0], [0]>} : vector<1x8x8xf32>, vector<1x16x8xf32>, vector<1x8x16xf32> -> vector<1x8x16xf32>
    "tpu.trace_stop"() : () -> ()
    %47 = vector.extract_strided_slice %0 {offsets = [0, 0, 48], sizes = [1, 8, 8], strides = [1, 1, 1]} : vector<1x8x64xf32> to vector<1x8x8xf32>
    %48 = vector.extract_strided_slice %1 {offsets = [0, 0, 48], sizes = [1, 16, 8], strides = [1, 1, 1]} : vector<1x16x96xf32> to vector<1x16x8xf32>
    "tpu.trace_start"() <{level = 10 : i32, message = "bqd,bkd->bqk"}> : () -> ()
    %cst_17 = arith.constant dense<0.000000e+00> : vector<1x8x16xf32>
    %49 = tpu.matmul %47, %48, %cst_17 {dimension_numbers = #tpu.dot_dimension_numbers<[2], [2], [1], [1], [0, 0, 0, 1, 1, 1], [0], [0]>} : vector<1x8x8xf32>, vector<1x16x8xf32>, vector<1x8x16xf32> -> vector<1x8x16xf32>
    "tpu.trace_stop"() : () -> ()
    %50 = arith.addf %46, %49 : vector<1x8x16xf32>
    %cst_18 = arith.constant 2.500000e-01 : f32
    %51 = vector.broadcast %cst_18 : f32 to vector<1x8x16xf32>
    %52 = arith.mulf %50, %51 : vector<1x8x16xf32>
    %cst_19 = arith.constant dense<0xFF800000> : vector<1x8xf32>
    %53 = vector.multi_reduction <maximumf>, %52, %cst_19 [2] : vector<1x8x16xf32> to vector<1x8xf32>
    %54 = vector.shape_cast %53 : vector<1x8xf32> to vector<1x8x1xf32>
    %55 = vector.broadcast %54 : vector<1x8x1xf32> to vector<1x8x16xf32>
    %56 = arith.subf %52, %55 : vector<1x8x16xf32>
    %57 = math.exp %56 : vector<1x8x16xf32>
    %cst_20 = arith.constant dense<0.000000e+00> : vector<1x8xf32>
    %58 = vector.multi_reduction <add>, %57, %cst_20 [2] : vector<1x8x16xf32> to vector<1x8xf32>
    %59 = vector.shape_cast %58 : vector<1x8xf32> to vector<1x8x1xf32>
    %60 = tpu.reciprocal %59 : vector<1x8x1xf32> -> vector<1x8x1xf32>
    %61 = vector.broadcast %60 : vector<1x8x1xf32> to vector<1x8x16xf32>
    %62 = arith.mulf %57, %61 : vector<1x8x16xf32>
    %63 = vector.extract_strided_slice %1 {offsets = [0, 0, 80], sizes = [1, 16, 8], strides = [1, 1, 1]} : vector<1x16x96xf32> to vector<1x16x8xf32>
    "tpu.trace_start"() <{level = 10 : i32, message = "bqk,bkd->bqd"}> : () -> ()
    %cst_21 = arith.constant dense<0.000000e+00> : vector<1x8x8xf32>
    %64 = tpu.matmul %62, %63, %cst_21 {dimension_numbers = #tpu.dot_dimension_numbers<[2], [1], [1], [2], [0, 0, 0, 1, 1, 2], [0], [0]>} : vector<1x8x16xf32>, vector<1x16x8xf32>, vector<1x8x8xf32> -> vector<1x8x8xf32>
    "tpu.trace_stop"() : () -> ()
    %65 = vector.extract_strided_slice %0 {offsets = [0, 0, 24], sizes = [1, 8, 8], strides = [1, 1, 1]} : vector<1x8x64xf32> to vector<1x8x8xf32>
    %66 = vector.extract_strided_slice %1 {offsets = [0, 0, 24], sizes = [1, 16, 8], strides = [1, 1, 1]} : vector<1x16x96xf32> to vector<1x16x8xf32>
    "tpu.trace_start"() <{level = 10 : i32, message = "bqd,bkd->bqk"}> : () -> ()
    %cst_22 = arith.constant dense<0.000000e+00> : vector<1x8x16xf32>
    %67 = tpu.matmul %65, %66, %cst_22 {dimension_numbers = #tpu.dot_dimension_numbers<[2], [2], [1], [1], [0, 0, 0, 1, 1, 1], [0], [0]>} : vector<1x8x8xf32>, vector<1x16x8xf32>, vector<1x8x16xf32> -> vector<1x8x16xf32>
    "tpu.trace_stop"() : () -> ()
    %68 = vector.extract_strided_slice %0 {offsets = [0, 0, 56], sizes = [1, 8, 8], strides = [1, 1, 1]} : vector<1x8x64xf32> to vector<1x8x8xf32>
    %69 = vector.extract_strided_slice %1 {offsets = [0, 0, 56], sizes = [1, 16, 8], strides = [1, 1, 1]} : vector<1x16x96xf32> to vector<1x16x8xf32>
    "tpu.trace_start"() <{level = 10 : i32, message = "bqd,bkd->bqk"}> : () -> ()
    %cst_23 = arith.constant dense<0.000000e+00> : vector<1x8x16xf32>
    %70 = tpu.matmul %68, %69, %cst_23 {dimension_numbers = #tpu.dot_dimension_numbers<[2], [2], [1], [1], [0, 0, 0, 1, 1, 1], [0], [0]>} : vector<1x8x8xf32>, vector<1x16x8xf32>, vector<1x8x16xf32> -> vector<1x8x16xf32>
    "tpu.trace_stop"() : () -> ()
    %71 = arith.addf %67, %70 : vector<1x8x16xf32>
    %cst_24 = arith.constant 2.500000e-01 : f32
    %72 = vector.broadcast %cst_24 : f32 to vector<1x8x16xf32>
    %73 = arith.mulf %71, %72 : vector<1x8x16xf32>
    %cst_25 = arith.constant dense<0xFF800000> : vector<1x8xf32>
    %74 = vector.multi_reduction <maximumf>, %73, %cst_25 [2] : vector<1x8x16xf32> to vector<1x8xf32>
    %75 = vector.shape_cast %74 : vector<1x8xf32> to vector<1x8x1xf32>
    %76 = vector.broadcast %75 : vector<1x8x1xf32> to vector<1x8x16xf32>
    %77 = arith.subf %73, %76 : vector<1x8x16xf32>
    %78 = math.exp %77 : vector<1x8x16xf32>
    %cst_26 = arith.constant dense<0.000000e+00> : vector<1x8xf32>
    %79 = vector.multi_reduction <add>, %78, %cst_26 [2] : vector<1x8x16xf32> to vector<1x8xf32>
    %80 = vector.shape_cast %79 : vector<1x8xf32> to vector<1x8x1xf32>
    %81 = tpu.reciprocal %80 : vector<1x8x1xf32> -> vector<1x8x1xf32>
    %82 = vector.broadcast %81 : vector<1x8x1xf32> to vector<1x8x16xf32>
    %83 = arith.mulf %78, %82 : vector<1x8x16xf32>
    %84 = vector.extract_strided_slice %1 {offsets = [0, 0, 88], sizes = [1, 16, 8], strides = [1, 1, 1]} : vector<1x16x96xf32> to vector<1x16x8xf32>
    "tpu.trace_start"() <{level = 10 : i32, message = "bqk,bkd->bqd"}> : () -> ()
    %cst_27 = arith.constant dense<0.000000e+00> : vector<1x8x8xf32>
    %85 = tpu.matmul %83, %84, %cst_27 {dimension_numbers = #tpu.dot_dimension_numbers<[2], [1], [1], [2], [0, 0, 0, 1, 1, 2], [0], [0]>} : vector<1x8x16xf32>, vector<1x16x8xf32>, vector<1x8x8xf32> -> vector<1x8x8xf32>
    "tpu.trace_stop"() : () -> ()
    %86 = tpu.concatenate %22, %43, %64, %85 in 2 : vector<1x8x8xf32>, vector<1x8x8xf32>, vector<1x8x8xf32>, vector<1x8x8xf32> -> vector<1x8x32xf32>
    %c0_28 = arith.constant 0 : index
    %c0_29 = arith.constant 0 : index
    %c0_30 = arith.constant 0 : index
    %87 = vector.load %arg3[%c0_28, %c0_29, %c0_30] : memref<1x8x32xf32, #tpu.memory_space<vmem>>, vector<1x8x32xf32>
    tpu.vector_store %arg3[%c0_28, %c0_29, %c0_30], %86 {strides = array<i32>} : memref<1x8x32xf32, #tpu.memory_space<vmem>>, vector<1x8x32xf32>,
    return
  }
  func.func @transform_0(%arg0: i32) -> (i32, i32, i32) {
    %c0_i32 = arith.constant 0 : i32
    %c0_i32_0 = arith.constant 0 : i32
    %c0_i32_1 = arith.constant 0 : i32
    return %arg0, %c0_i32, %c0_i32_0 : i32, i32, i32
  }
  func.func @transform_1(%arg0: i32) -> (i32, i32, i32) {
    %c0_i32 = arith.constant 0 : i32
    %c0_i32_0 = arith.constant 0 : i32
    %c0_i32_1 = arith.constant 0 : i32
    return %arg0, %c0_i32, %c0_i32_0 : i32, i32, i32
  }
  func.func @transform_2(%arg0: i32) -> (i32, i32, i32) {
    %c0_i32 = arith.constant 0 : i32
    %c0_i32_0 = arith.constant 0 : i32
    %c0_i32_1 = arith.constant 0 : i32
    return %arg0, %c0_i32, %c0_i32_0 : i32, i32, i32
  }
}

module attributes {stable_mosaic.version = 11 : i64} {
  func.func @_ffn_ln_kernel(%arg0: i32, %arg1: memref<8x32xf32, #tpu.memory_space<vmem>>, %arg2: memref<32x64xf32, #tpu.memory_space<vmem>>, %arg3: memref<1x64xf32, #tpu.memory_space<vmem>>, %arg4: memref<64x32xf32, #tpu.memory_space<vmem>>, %arg5: memref<1x32xf32, #tpu.memory_space<vmem>>, %arg6: memref<1x32xf32, #tpu.memory_space<vmem>>, %arg7: memref<1x32xf32, #tpu.memory_space<vmem>>, %arg8: memref<8x32xf32, #tpu.memory_space<vmem>>) attributes {dimension_semantics = [#tpu.dimension_semantics<parallel>], iteration_bounds = array<i64: 2>, scalar_prefetch = 0 : i64, scratch_operands = 0 : i64, tpu.core_type = #tpu.core_type<tc>, window_params = [{transform_indices = @transform_0, window_bounds = array<i64: 8, 32>}, {pipeline_mode = #tpu.pipeline_mode<synchronous>, transform_indices = @transform_1, window_bounds = array<i64: 32, 64>}, {pipeline_mode = #tpu.pipeline_mode<synchronous>, transform_indices = @transform_2, window_bounds = array<i64: 1, 64>}, {pipeline_mode = #tpu.pipeline_mode<synchronous>, transform_indices = @transform_3, window_bounds = array<i64: 64, 32>}, {pipeline_mode = #tpu.pipeline_mode<synchronous>, transform_indices = @transform_4, window_bounds = array<i64: 1, 32>}, {pipeline_mode = #tpu.pipeline_mode<synchronous>, transform_indices = @transform_5, window_bounds = array<i64: 1, 32>}, {pipeline_mode = #tpu.pipeline_mode<synchronous>, transform_indices = @transform_6, window_bounds = array<i64: 1, 32>}, {transform_indices = @transform_7, window_bounds = array<i64: 8, 32>}]} {
    %c0 = arith.constant 0 : index
    %c0_0 = arith.constant 0 : index
    %0 = vector.load %arg1[%c0, %c0_0] : memref<8x32xf32, #tpu.memory_space<vmem>>, vector<8x32xf32>
    %c0_1 = arith.constant 0 : index
    %c0_2 = arith.constant 0 : index
    %1 = vector.load %arg2[%c0_1, %c0_2] : memref<32x64xf32, #tpu.memory_space<vmem>>, vector<32x64xf32>
    %cst = arith.constant dense<0.000000e+00> : vector<8x64xf32>
    %2 = tpu.matmul %0, %1, %cst {dimension_numbers = #tpu.dot_dimension_numbers<[1], [0], [0], [1], [0, 0, 1, 1], [], []>} : vector<8x32xf32>, vector<32x64xf32>, vector<8x64xf32> -> vector<8x64xf32>
    %c0_3 = arith.constant 0 : index
    %c0_4 = arith.constant 0 : index
    %3 = vector.load %arg3[%c0_3, %c0_4] : memref<1x64xf32, #tpu.memory_space<vmem>>, vector<1x64xf32>
    %4 = vector.broadcast %3 : vector<1x64xf32> to vector<8x64xf32>
    %5 = arith.addf %2, %4 : vector<8x64xf32>
    %cst_5 = arith.constant 0.000000e+00 : f32
    %6 = vector.broadcast %cst_5 : f32 to vector<8x64xf32>
    %7 = arith.maximumf %5, %6 : vector<8x64xf32>
    %c0_6 = arith.constant 0 : index
    %c0_7 = arith.constant 0 : index
    %8 = vector.load %arg4[%c0_6, %c0_7] : memref<64x32xf32, #tpu.memory_space<vmem>>, vector<64x32xf32>
    %cst_8 = arith.constant dense<0.000000e+00> : vector<8x32xf32>
    %9 = tpu.matmul %7, %8, %cst_8 {dimension_numbers = #tpu.dot_dimension_numbers<[1], [0], [0], [1], [0, 0, 1, 1], [], []>} : vector<8x64xf32>, vector<64x32xf32>, vector<8x32xf32> -> vector<8x32xf32>
    %c0_9 = arith.constant 0 : index
    %c0_10 = arith.constant 0 : index
    %10 = vector.load %arg5[%c0_9, %c0_10] : memref<1x32xf32, #tpu.memory_space<vmem>>, vector<1x32xf32>
    %11 = vector.broadcast %10 : vector<1x32xf32> to vector<8x32xf32>
    %12 = arith.addf %9, %11 : vector<8x32xf32>
    %13 = arith.addf %0, %12 : vector<8x32xf32>
    %cst_11 = arith.constant dense<0.000000e+00> : vector<8xf32>
    %14 = vector.multi_reduction <add>, %13, %cst_11 [1] : vector<8x32xf32> to vector<8xf32>
    %15 = vector.shape_cast %14 : vector<8xf32> to vector<8x1xf32>
    %cst_12 = arith.constant 3.200000e+01 : f32
    %16 = vector.broadcast %cst_12 : f32 to vector<8x1xf32>
    %17 = arith.divf %15, %16 : vector<8x1xf32>
    %18 = vector.broadcast %17 : vector<8x1xf32> to vector<8x32xf32>
    %19 = arith.subf %13, %18 : vector<8x32xf32>
    %20 = arith.mulf %19, %19 : vector<8x32xf32>
    %cst_13 = arith.constant dense<0.000000e+00> : vector<8xf32>
    %21 = vector.multi_reduction <add>, %20, %cst_13 [1] : vector<8x32xf32> to vector<8xf32>
    %22 = vector.shape_cast %21 : vector<8xf32> to vector<8x1xf32>
    %cst_14 = arith.constant 3.200000e+01 : f32
    %23 = vector.broadcast %cst_14 : f32 to vector<8x1xf32>
    %24 = arith.divf %22, %23 : vector<8x1xf32>
    %25 = vector.broadcast %17 : vector<8x1xf32> to vector<8x32xf32>
    %26 = arith.subf %13, %25 : vector<8x32xf32>
    %cst_15 = arith.constant 9.99999974E-6 : f32
    %27 = vector.broadcast %cst_15 : f32 to vector<8x1xf32>
    %28 = arith.addf %24, %27 : vector<8x1xf32>
    %29 = math.rsqrt %28 : vector<8x1xf32>
    %30 = vector.broadcast %29 : vector<8x1xf32> to vector<8x32xf32>
    %31 = arith.mulf %26, %30 : vector<8x32xf32>
    %c0_16 = arith.constant 0 : index
    %c0_17 = arith.constant 0 : index
    %32 = vector.load %arg6[%c0_16, %c0_17] : memref<1x32xf32, #tpu.memory_space<vmem>>, vector<1x32xf32>
    %33 = vector.broadcast %32 : vector<1x32xf32> to vector<8x32xf32>
    %34 = arith.mulf %31, %33 : vector<8x32xf32>
    %c0_18 = arith.constant 0 : index
    %c0_19 = arith.constant 0 : index
    %35 = vector.load %arg7[%c0_18, %c0_19] : memref<1x32xf32, #tpu.memory_space<vmem>>, vector<1x32xf32>
    %36 = vector.broadcast %35 : vector<1x32xf32> to vector<8x32xf32>
    %37 = arith.addf %34, %36 : vector<8x32xf32>
    %c0_20 = arith.constant 0 : index
    %c0_21 = arith.constant 0 : index
    %38 = vector.load %arg8[%c0_20, %c0_21] : memref<8x32xf32, #tpu.memory_space<vmem>>, vector<8x32xf32>
    tpu.vector_store %arg8[%c0_20, %c0_21], %37 {strides = array<i32>} : memref<8x32xf32, #tpu.memory_space<vmem>>, vector<8x32xf32>,
    return
  }
  func.func @transform_0(%arg0: i32) -> (i32, i32) {
    %c0_i32 = arith.constant 0 : i32
    %c0_i32_0 = arith.constant 0 : i32
    return %arg0, %c0_i32 : i32, i32
  }
  func.func @transform_1(%arg0: i32) -> (i32, i32) {
    %c0_i32 = arith.constant 0 : i32
    %c0_i32_0 = arith.constant 0 : i32
    %c0_i32_1 = arith.constant 0 : i32
    return %c0_i32, %c0_i32_0 : i32, i32
  }
  func.func @transform_2(%arg0: i32) -> (i32, i32) {
    %c0_i32 = arith.constant 0 : i32
    %c0_i32_0 = arith.constant 0 : i32
    %c0_i32_1 = arith.constant 0 : i32
    return %c0_i32, %c0_i32_0 : i32, i32
  }
  func.func @transform_3(%arg0: i32) -> (i32, i32) {
    %c0_i32 = arith.constant 0 : i32
    %c0_i32_0 = arith.constant 0 : i32
    %c0_i32_1 = arith.constant 0 : i32
    return %c0_i32, %c0_i32_0 : i32, i32
  }
  func.func @transform_4(%arg0: i32) -> (i32, i32) {
    %c0_i32 = arith.constant 0 : i32
    %c0_i32_0 = arith.constant 0 : i32
    %c0_i32_1 = arith.constant 0 : i32
    return %c0_i32, %c0_i32_0 : i32, i32
  }
  func.func @transform_5(%arg0: i32) -> (i32, i32) {
    %c0_i32 = arith.constant 0 : i32
    %c0_i32_0 = arith.constant 0 : i32
    %c0_i32_1 = arith.constant 0 : i32
    return %c0_i32, %c0_i32_0 : i32, i32
  }
  func.func @transform_6(%arg0: i32) -> (i32, i32) {
    %c0_i32 = arith.constant 0 : i32
    %c0_i32_0 = arith.constant 0 : i32
    %c0_i32_1 = arith.constant 0 : i32
    return %c0_i32, %c0_i32_0 : i32, i32
  }
  func.func @transform_7(%arg0: i32) -> (i32, i32) {
    %c0_i32 = arith.constant 0 : i32
    %c0_i32_0 = arith.constant 0 : i32
    return %arg0, %c0_i32 : i32, i32
  }
}

</mosaic_0001>

<llo_original>
// kernel: vt_decoder_layer.9
$region0: #{vt_decoder_layer.9}
  #allocation0 [shape = 'u32[]', space=smem, size = 0x4, offset = 0x4, fixed_abs, tag = 'smem constant byte address 0x4 - core index']
  #allocation1 [shape = 'u32[144,128]{1,0:T(1,128)}', space=vmem, size = 0x12000, scoped, tag = 'internal scratch']
  %s0 = inlined_call_operand.vmem [shape: f32[2,8,96], index: 0, kind: input, shape index: {}]
  %s1 = inlined_call_operand.vmem [shape: f32[2,8,32], index: 1, kind: output, shape index: {}]
  %s2 = sld [smem:[#allocation0]]
  $region37: #{vt_decoder_layer.9} parent=0
    _
  %s4 = ssub.s32 1, %s2
  %s5 = scalar_select 0, %s4, %s2
  loop: start=0, step=1, limit=4
  $region2: #{vt_decoder_layer.9} parent=0 // loop_pre_header
    _
  $region3: #{vt_decoder_layer.9} parent=0 // loop_header
    %s7 = sphi 0, %s11
    %p8 = scmp.ge.s32.totalorder %s7, 4
    %s17 = sphi 0, %s19
    %s20 = sphi 0, %s17
    %s21 = sphi 0, %s20
    %s37 = sphi 0, %s21
    %s43 = sphi 0, %s45
    %s46 = sphi 0, %s43
    %s47 = sphi 0, %s46
    %s63 = sphi 0, %s47
  $region4: #{vt_decoder_layer.9} parent=0 // loop_header_branch
    %10 = sbr.rel (%p8) target = $region8
  $region5: #{vt_decoder_layer.9} parent=0 // loop_body
    %s12 = ssub.s32 %s7, 1
    %s13 = ssub.s32 %s7, 2
    %s14 = sadd.s32 %s7, 1
    %s15 = ssub.s32 %s7, %s14
    %p16 = scmp.eq.s32.totalorder %s15, 0
    %s18 = sadd.s32 %s17, 1
    %s19 = scalar_select %p16, %s17, %s18
    %p22 = pneg %p16
    %p23 = scmp.eq.s32.totalorder %s7, 1
    %p24 = por %p22, %p23
    %p25 = scmp.ne.s32.totalorder %s17, %s20
    %p26 = scmp.eq.s32.totalorder %s7, 0
    %p27 = por %p25, %p26
    %p28 = scmp.ne.s32.totalorder %s17, %s20
    %p29 = scmp.eq.s32.totalorder %s12, 1
    %p30 = por %p28, %p29
    %p31 = scmp.ne.s32.totalorder %s20, %s21
    %p32 = scmp.eq.s32.totalorder %s12, 0
    %p33 = por %p31, %p32
    %p34 = scmp.ne.s32.totalorder %s20, %s21
    %p35 = scmp.eq.s32.totalorder %s13, 1
    %p36 = por %p34, %p35
    %p38 = scmp.ne.s32.totalorder %s21, %s37
    %p39 = scmp.eq.s32.totalorder %s13, 0
    %p40 = por %p38, %p39
    %s41 = ssub.s32 %s7, %s14
    %p42 = scmp.eq.s32.totalorder %s41, 0
    %s44 = sadd.s32 %s43, 1
    %s45 = scalar_select %p42, %s43, %s44
    %p48 = pneg %p42
    %p49 = scmp.eq.s32.totalorder %s7, 1
    %p50 = por %p48, %p49
    %p51 = scmp.ne.s32.totalorder %s43, %s46
    %p52 = scmp.eq.s32.totalorder %s7, 0
    %p53 = por %p51, %p52
    %p54 = scmp.ne.s32.totalorder %s43, %s46
    %p55 = scmp.eq.s32.totalorder %s12, 1
    %p56 = por %p54, %p55
    %p57 = scmp.ne.s32.totalorder %s46, %s47
    %p58 = scmp.eq.s32.totalorder %s12, 0
    %p59 = por %p57, %p58
    %p60 = scmp.ne.s32.totalorder %s46, %s47
    %p61 = scmp.eq.s32.totalorder %s13, 1
    %p62 = por %p60, %p61
    %p64 = scmp.ne.s32.totalorder %s47, %s63
    %p65 = scmp.eq.s32.totalorder %s13, 0
    %p66 = por %p64, %p65
    %p67 = scmp.le.s32.totalorder 1, %s7
    %p68 = scmp.lt.s32.totalorder %s7, 3
    %p69 = pnand %p67, %p68
    %p70 = pneg %p69
    // Predicated region
    $region9: #{vt_decoder_layer.9} parent=5 // pred_check
      _
    $region10: #{vt_decoder_layer.9} parent=5 // pred_check_branch
      %72 = sbr.rel (%p69) target = $region12
    $region11: #{vt_decoder_layer.9} parent=5 // pred_region
      %s73 = ssub.s32 %s7, 1
    $region12: #{vt_decoder_layer.9} parent=5 // pred_fallthru
      _
    %p74 = scmp.lt.s32.totalorder %s7, 2
    // Predicated region
    $region13: #{vt_decoder_layer.9} parent=5 // pred_check
      %p75 = pneg %p74
    $region14: #{vt_decoder_layer.9} parent=5 // pred_check_branch
      %77 = sbr.rel (%p75) target = $region16
    $region15: #{vt_decoder_layer.9} parent=5 // pred_region
      // Predicated region
      $region17: #{vt_decoder_layer.9} parent=15 // pred_check
        %p78 = pneg %p27
      $region18: #{vt_decoder_layer.9} parent=15 // pred_check_branch
        %80 = sbr.rel (%p78) target = $region20
      $region19: #{vt_decoder_layer.9} parent=15 // pred_region
        %p81 = scmp.lt.s32.totalorder %s7, 1
        %s82 = scalar_select %p81, %s7, 1
        %s83 = smul.addr %s82, 8
        %s84 = scalar_lea.vmem %s0, %s83
      $region20: #{vt_decoder_layer.9} parent=15 // pred_fallthru
        _
    $region16: #{vt_decoder_layer.9} parent=5 // pred_fallthru
      _
    %p85 = scmp.le.s32.totalorder 1, %s7
    %p86 = scmp.lt.s32.totalorder %s7, 3
    %p87 = pnand %p85, %p86
    %p88 = pneg %p87
    // Predicated region
    $region21: #{vt_decoder_layer.9} parent=5 // pred_check
      _
    $region22: #{vt_decoder_layer.9} parent=5 // pred_check_branch
      %90 = sbr.rel (%p87) target = $region24
    $region23: #{vt_decoder_layer.9} parent=5 // pred_region
      %s91 = ssub.s32 %s7, 1
      %p92 = scmp.lt.s32.totalorder %s12, 1
      %s93 = scalar_select %p92, %s12, 1
      %s94 = smul.addr %s93, 8
      %s95 = scalar_lea.vmem %s0, %s94
      %p96 = pneg %p33
      %p97 = pneg %p30
      %p98 = pneg %p59
      %p99 = pneg %p56
      %p100 = scmp.lt.s32.totalorder %s12, 1
      %s101 = scalar_select %p100, %s12, 1
      %s102 = smul.addr %s101, 8
      %s103 = scalar_lea.vmem %s1, %s102
      %p104 = scmp.lt.s32.totalorder %s12, 1
      %s105 = scalar_select %p104, %s12, 1
      %s106 = smul.addr %s105, 8
      %s107 = scalar_lea.vmem %s0, %s106
      %p108 = scmp.lt.s32.totalorder %s12, 1
      %s109 = scalar_select %p108, %s12, 1
      %s110 = smul.addr %s109, 8
      %s111 = scalar_lea.vmem %s1, %s110
      %v112 = vld [vmem:[%s107] sm:$0xff]
      %114 = vrot.lane.b32.xlu0 %v112, 96
      %v115 = vpop.permute.xlu0 %114
      %vm116 = vcmask 64512
      %v117 = vsel %vm116, %v112, 0
      %v119 = vsel %vm116, %v115, 0
      %121 = vmatprep.subr.mxu0 0.0
      %122 = vmatpush1.xpose.msra.mxu0 0.0
      %123 = vmatprep.subr.mxu0 0.0
      %124 = vmatpush1.xpose.msra.mxu0 0.0
      %125 = vmatprep.subr.mxu0 0.0
      %126 = vmatpush1.xpose.msra.mxu0 0.0
      %127 = vmatprep.subr.mxu0 0.0
      %128 = vmatpush1.xpose.msra.mxu0 0.0
      %129 = vmatprep.subr.mxu0 0.0
      %130 = vmatpush1.xpose.msra.mxu0 0.0
      %131 = vmatprep.subr.mxu0 0.0
      %132 = vmatpush1.xpose.msra.mxu0 0.0
      %133 = vmatprep.subr.mxu0 0.0
      %134 = vmatpush1.xpose.msra.mxu0 0.0
      %135 = vmatprep.subr.mxu0 0.0
      %136 = vmatpush1.xpose.msra.mxu0 0.0
      %137 = vmatprep.subr.mxu0 0.0
      %138 = vmatpush1.xpose.msra.mxu0 0.0
      %139 = vmatprep.subr.mxu0 0.0
      %140 = vmatpush1.xpose.msra.mxu0 0.0
      %141 = vmatprep.subr.mxu0 0.0
      %142 = vmatpush1.xpose.msra.mxu0 0.0
      %143 = vmatprep.subr.mxu0 0.0
      %144 = vmatpush1.xpose.msra.mxu0 0.0
      %145 = vmatprep.subr.mxu0 0.0
      %146 = vmatpush1.xpose.msra.mxu0 0.0
      %147 = vmatprep.subr.mxu0 0.0
      %148 = vmatpush1.xpose.msra.mxu0 0.0
      %149 = vmatprep.subr.mxu0 0.0
      %150 = vmatpush1.xpose.msra.mxu0 0.0
      %151 = vmatprep.subr.mxu0 0.0
      %152 = vmatpush1.xpose.msra.mxu0 %v119
      %153 = vmatprep.subr.mxu0 0.0
      %154 = vmatpush2.xpose.msra.mxu0 0.0
      %155 = vmatprep.subr.mxu0 0.0
      %156 = vmatpush2.xpose.msra.mxu0 0.0
      %157 = vmatprep.subr.mxu0 0.0
      %158 = vmatpush2.xpose.msra.mxu0 0.0
      %159 = vmatprep.subr.mxu0 0.0
      %160 = vmatpush2.xpose.msra.mxu0 0.0
      %161 = vmatprep.subr.mxu0 0.0
      %162 = vmatpush2.xpose.msra.mxu0 0.0
      %163 = vmatprep.subr.mxu0 0.0
      %164 = vmatpush2.xpose.msra.mxu0 0.0
      %165 = vmatprep.subr.mxu0 0.0
      %166 = vmatpush2.xpose.msra.mxu0 0.0
      %167 = vmatprep.subr.mxu0 0.0
      %168 = vmatpush2.xpose.msra.mxu0 0.0
      %169 = vmatprep.subr.mxu0 0.0
      %170 = vmatpush2.xpose.msra.mxu0 0.0
      %171 = vmatprep.subr.mxu0 0.0
      %172 = vmatpush2.xpose.msra.mxu0 0.0
      %173 = vmatprep.subr.mxu0 0.0
      %174 = vmatpush2.xpose.msra.mxu0 0.0
      %175 = vmatprep.subr.mxu0 0.0
      %176 = vmatpush2.xpose.msra.mxu0 0.0
      %177 = vmatprep.subr.mxu0 0.0
      %178 = vmatpush2.xpose.msra.mxu0 0.0
      %179 = vmatprep.subr.mxu0 0.0
      %180 = vmatpush2.xpose.msra.mxu0 0.0
      %181 = vmatprep.subr.mxu0 0.0
      %182 = vmatpush2.xpose.msra.mxu0 0.0
      %183 = vmatprep.subr.mxu0 0.0
      %184 = vmatpush2.xpose.msra.mxu0 0.0
      %185 = vmatprep.mubr.f32.mxu0 0.0
      %186 = vmatmul.mubr.f32.gmra.mxu0 %v117
      %v187 = vpop.f32.mrf.mxu0
      %v188 = vadd.f32 0.0, %v187
      %v189 = vpop.f32.mrf.mxu0
      %190 = vdwg.mxu0
      %v191 = vmul.f32 %v188, 0.35355338
      %v192 = vsel %vm116, %v191, -inf
      %193 = vmax.xlane.f32.xlu0 %v192
      %v194 = vpop.xlane.xlu0 %193
      %v195 = vsub.f32 %v191, %v194
      %v196 = vmul.f32 %v195, 1.442695
      %v197 = vpow.pop %v196
      %v198 = vsel %vm116, %v197, 0.0
      %199 = vadd.xlane.f32.xlu0 %v198
      %v200 = vpop.xlane.xlu0 %199
      %v201 = vrcp.pop %v200
      %v202 = vmul.f32 %v197, %v201
      %203 = vrot.lane.b32.xlu0 %v112, 64
      %v204 = vpop.permute.xlu0 %203
      %v207 = vsel %vm116, %v202, 0
      %209 = vmatprep.subr.mxu0 0.0
      %210 = vmatpush1.msra.mxu0 0.0
      %211 = vmatprep.subr.mxu0 0.0
      %212 = vmatpush1.msra.mxu0 0.0
      %213 = vmatprep.subr.mxu0 0.0
      %214 = vmatpush1.msra.mxu0 0.0
      %215 = vmatprep.subr.mxu0 0.0
      %216 = vmatpush1.msra.mxu0 0.0
      %217 = vmatprep.subr.mxu0 0.0
      %218 = vmatpush1.msra.mxu0 0.0
      %219 = vmatprep.subr.mxu0 0.0
      %220 = vmatpush1.msra.mxu0 0.0
      %221 = vmatprep.subr.mxu0 0.0
      %222 = vmatpush1.msra.mxu0 0.0
      %223 = vmatprep.subr.mxu0 0.0
      %224 = vmatpush1.msra.mxu0 0.0
      %225 = vmatprep.subr.mxu0 0.0
      %226 = vmatpush1.msra.mxu0 0.0
      %227 = vmatprep.subr.mxu0 0.0
      %228 = vmatpush1.msra.mxu0 0.0
      %229 = vmatprep.subr.mxu0 0.0
      %230 = vmatpush1.msra.mxu0 0.0
      %231 = vmatprep.subr.mxu0 0.0
      %232 = vmatpush1.msra.mxu0 0.0
      %233 = vmatprep.subr.mxu0 0.0
      %234 = vmatpush1.msra.mxu0 0.0
      %235 = vmatprep.subr.mxu0 0.0
      %236 = vmatpush1.msra.mxu0 0.0
      %237 = vmatprep.subr.mxu0 0.0
      %238 = vmatpush1.msra.mxu0 0.0
      %239 = vmatprep.subr.mxu0 0.0
      %240 = vmatpush1.msra.mxu0 %v204
      %241 = vmatprep.subr.mxu0 0.0
      %242 = vmatpush2.msra.mxu0 0.0
      %243 = vmatprep.subr.mxu0 0.0
      %244 = vmatpush2.msra.mxu0 0.0
      %245 = vmatprep.subr.mxu0 0.0
      %246 = vmatpush2.msra.mxu0 0.0
      %247 = vmatprep.subr.mxu0 0.0
      %248 = vmatpush2.msra.mxu0 0.0
      %249 = vmatprep.subr.mxu0 0.0
      %250 = vmatpush2.msra.mxu0 0.0
      %251 = vmatprep.subr.mxu0 0.0
      %252 = vmatpush2.msra.mxu0 0.0
      %253 = vmatprep.subr.mxu0 0.0
      %254 = vmatpush2.msra.mxu0 0.0
      %255 = vmatprep.subr.mxu0 0.0
      %256 = vmatpush2.msra.mxu0 0.0
      %257 = vmatprep.subr.mxu0 0.0
      %258 = vmatpush2.msra.mxu0 0.0
      %259 = vmatprep.subr.mxu0 0.0
      %260 = vmatpush2.msra.mxu0 0.0
      %261 = vmatprep.subr.mxu0 0.0
      %262 = vmatpush2.msra.mxu0 0.0
      %263 = vmatprep.subr.mxu0 0.0
      %264 = vmatpush2.msra.mxu0 0.0
      %265 = vmatprep.subr.mxu0 0.0
      %266 = vmatpush2.msra.mxu0 0.0
      %267 = vmatprep.subr.mxu0 0.0
      %268 = vmatpush2.msra.mxu0 0.0
      %269 = vmatprep.subr.mxu0 0.0
      %270 = vmatpush2.msra.mxu0 0.0
      %271 = vmatprep.subr.mxu0 0.0
      %272 = vmatpush2.msra.mxu0 0.0
      %273 = vmatprep.mubr.f32.mxu0 0.0
      %274 = vmatmul.mubr.f32.gmra.mxu0 %v207
      %v275 = vpop.f32.mrf.mxu0
      %v276 = vadd.f32 0.0, %v275
      %v277 = vpop.f32.mrf.mxu0
      %278 = vdwg.mxu0
      %279 = vrot.lane.b32.xlu0 %v112, 120
      %v280 = vpop.permute.xlu0 %279
      %281 = vrot.lane.b32.xlu0 %v112, 88
      %v282 = vpop.permute.xlu0 %281
      %v283 = vsel %vm116, %v280, 0
      %v285 = vsel %vm116, %v282, 0
      %287 = vmatprep.subr.mxu0 0.0
      %288 = vmatpush1.xpose.msra.mxu0 0.0
      %289 = vmatprep.subr.mxu0 0.0
      %290 = vmatpush1.xpose.msra.mxu0 0.0
      %291 = vmatprep.subr.mxu0 0.0
      %292 = vmatpush1.xpose.msra.mxu0 0.0
      %293 = vmatprep.subr.mxu0 0.0
      %294 = vmatpush1.xpose.msra.mxu0 0.0
      %295 = vmatprep.subr.mxu0 0.0
      %296 = vmatpush1.xpose.msra.mxu0 0.0
      %297 = vmatprep.subr.mxu0 0.0
      %298 = vmatpush1.xpose.msra.mxu0 0.0
      %299 = vmatprep.subr.mxu0 0.0
      %300 = vmatpush1.xpose.msra.mxu0 0.0
      %301 = vmatprep.subr.mxu0 0.0
      %302 = vmatpush1.xpose.msra.mxu0 0.0
      %303 = vmatprep.subr.mxu0 0.0
      %304 = vmatpush1.xpose.msra.mxu0 0.0
      %305 = vmatprep.subr.mxu0 0.0
      %306 = vmatpush1.xpose.msra.mxu0 0.0
      %307 = vmatprep.subr.mxu0 0.0
      %308 = vmatpush1.xpose.msra.mxu0 0.0
      %309 = vmatprep.subr.mxu0 0.0
      %310 = vmatpush1.xpose.msra.mxu0 0.0
      %311 = vmatprep.subr.mxu0 0.0
      %312 = vmatpush1.xpose.msra.mxu0 0.0
      %313 = vmatprep.subr.mxu0 0.0
      %314 = vmatpush1.xpose.msra.mxu0 0.0
      %315 = vmatprep.subr.mxu0 0.0
      %316 = vmatpush1.xpose.msra.mxu0 0.0
      %317 = vmatprep.subr.mxu0 0.0
      %318 = vmatpush1.xpose.msra.mxu0 %v285
      %319 = vmatprep.subr.mxu0 0.0
      %320 = vmatpush2.xpose.msra.mxu0 0.0
      %321 = vmatprep.subr.mxu0 0.0
      %322 = vmatpush2.xpose.msra.mxu0 0.0
      %323 = vmatprep.subr.mxu0 0.0
      %324 = vmatpush2.xpose.msra.mxu0 0.0
      %325 = vmatprep.subr.mxu0 0.0
      %326 = vmatpush2.xpose.msra.mxu0 0.0
      %327 = vmatprep.subr.mxu0 0.0
      %328 = vmatpush2.xpose.msra.mxu0 0.0
      %329 = vmatprep.subr.mxu0 0.0
      %330 = vmatpush2.xpose.msra.mxu0 0.0
      %331 = vmatprep.subr.mxu0 0.0
      %332 = vmatpush2.xpose.msra.mxu0 0.0
      %333 = vmatprep.subr.mxu0 0.0
      %334 = vmatpush2.xpose.msra.mxu0 0.0
      %335 = vmatprep.subr.mxu0 0.0
      %336 = vmatpush2.xpose.msra.mxu0 0.0
      %337 = vmatprep.subr.mxu0 0.0
      %338 = vmatpush2.xpose.msra.mxu0 0.0
      %339 = vmatprep.subr.mxu0 0.0
      %340 = vmatpush2.xpose.msra.mxu0 0.0
      %341 = vmatprep.subr.mxu0 0.0
      %342 = vmatpush2.xpose.msra.mxu0 0.0
      %343 = vmatprep.subr.mxu0 0.0
      %344 = vmatpush2.xpose.msra.mxu0 0.0
      %345 = vmatprep.subr.mxu0 0.0
      %346 = vmatpush2.xpose.msra.mxu0 0.0
      %347 = vmatprep.subr.mxu0 0.0
      %348 = vmatpush2.xpose.msra.mxu0 0.0
      %349 = vmatprep.subr.mxu0 0.0
      %350 = vmatpush2.xpose.msra.mxu0 0.0
      %351 = vmatprep.mubr.f32.mxu0 0.0
      %352 = vmatmul.mubr.f32.gmra.mxu0 %v283
      %v353 = vpop.f32.mrf.mxu0
      %v354 = vadd.f32 0.0, %v353
      %v355 = vpop.f32.mrf.mxu0
      %356 = vdwg.mxu0
      %v357 = vmul.f32 %v354, 0.35355338
      %v358 = vsel %vm116, %v357, -inf
      %359 = vmax.xlane.f32.xlu0 %v358
      %v360 = vpop.xlane.xlu0 %359
      %v361 = vsub.f32 %v357, %v360
      %v362 = vmul.f32 %v361, 1.442695
      %v363 = vpow.pop %v362
      %v364 = vsel %vm116, %v363, 0.0
      %365 = vadd.xlane.f32.xlu0 %v364
      %v366 = vpop.xlane.xlu0 %365
      %v367 = vrcp.pop %v366
      %v368 = vmul.f32 %v363, %v367
      %369 = vrot.lane.b32.xlu0 %v112, 56
      %v370 = vpop.permute.xlu0 %369
      %v373 = vsel %vm116, %v368, 0
      %375 = vmatprep.subr.mxu0 0.0
      %376 = vmatpush1.msra.mxu0 0.0
      %377 = vmatprep.subr.mxu0 0.0
      %378 = vmatpush1.msra.mxu0 0.0
      %379 = vmatprep.subr.mxu0 0.0
      %380 = vmatpush1.msra.mxu0 0.0
      %381 = vmatprep.subr.mxu0 0.0
      %382 = vmatpush1.msra.mxu0 0.0
      %383 = vmatprep.subr.mxu0 0.0
      %384 = vmatpush1.msra.mxu0 0.0
      %385 = vmatprep.subr.mxu0 0.0
      %386 = vmatpush1.msra.mxu0 0.0
      %387 = vmatprep.subr.mxu0 0.0
      %388 = vmatpush1.msra.mxu0 0.0
      %389 = vmatprep.subr.mxu0 0.0
      %390 = vmatpush1.msra.mxu0 0.0
      %391 = vmatprep.subr.mxu0 0.0
      %392 = vmatpush1.msra.mxu0 0.0
      %393 = vmatprep.subr.mxu0 0.0
      %394 = vmatpush1.msra.mxu0 0.0
      %395 = vmatprep.subr.mxu0 0.0
      %396 = vmatpush1.msra.mxu0 0.0
      %397 = vmatprep.subr.mxu0 0.0
      %398 = vmatpush1.msra.mxu0 0.0
      %399 = vmatprep.subr.mxu0 0.0
      %400 = vmatpush1.msra.mxu0 0.0
      %401 = vmatprep.subr.mxu0 0.0
      %402 = vmatpush1.msra.mxu0 0.0
      %403 = vmatprep.subr.mxu0 0.0
      %404 = vmatpush1.msra.mxu0 0.0
      %405 = vmatprep.subr.mxu0 0.0
      %406 = vmatpush1.msra.mxu0 %v370
      %407 = vmatprep.subr.mxu0 0.0
      %408 = vmatpush2.msra.mxu0 0.0
      %409 = vmatprep.subr.mxu0 0.0
      %410 = vmatpush2.msra.mxu0 0.0
      %411 = vmatprep.subr.mxu0 0.0
      %412 = vmatpush2.msra.mxu0 0.0
      %413 = vmatprep.subr.mxu0 0.0
      %414 = vmatpush2.msra.mxu0 0.0
      %415 = vmatprep.subr.mxu0 0.0
      %416 = vmatpush2.msra.mxu0 0.0
      %417 = vmatprep.subr.mxu0 0.0
      %418 = vmatpush2.msra.mxu0 0.0
      %419 = vmatprep.subr.mxu0 0.0
      %420 = vmatpush2.msra.mxu0 0.0
      %421 = vmatprep.subr.mxu0 0.0
      %422 = vmatpush2.msra.mxu0 0.0
      %423 = vmatprep.subr.mxu0 0.0
      %424 = vmatpush2.msra.mxu0 0.0
      %425 = vmatprep.subr.mxu0 0.0
      %426 = vmatpush2.msra.mxu0 0.0
      %427 = vmatprep.subr.mxu0 0.0
      %428 = vmatpush2.msra.mxu0 0.0
      %429 = vmatprep.subr.mxu0 0.0
      %430 = vmatpush2.msra.mxu0 0.0
      %431 = vmatprep.subr.mxu0 0.0
      %432 = vmatpush2.msra.mxu0 0.0
      %433 = vmatprep.subr.mxu0 0.0
      %434 = vmatpush2.msra.mxu0 0.0
      %435 = vmatprep.subr.mxu0 0.0
      %436 = vmatpush2.msra.mxu0 0.0
      %437 = vmatprep.subr.mxu0 0.0
      %438 = vmatpush2.msra.mxu0 0.0
      %439 = vmatprep.mubr.f32.mxu0 0.0
      %440 = vmatmul.mubr.f32.gmra.mxu0 %v373
      %v441 = vpop.f32.mrf.mxu0
      %v442 = vadd.f32 0.0, %v441
      %v443 = vpop.f32.mrf.mxu0
      %444 = vdwg.mxu0
      %445 = vrot.lane.b32.xlu0 %v112, 112
      %v446 = vpop.permute.xlu0 %445
      %447 = vrot.lane.b32.xlu0 %v112, 80
      %v448 = vpop.permute.xlu0 %447
      %v449 = vsel %vm116, %v446, 0
      %v451 = vsel %vm116, %v448, 0
      %453 = vmatprep.subr.mxu0 0.0
      %454 = vmatpush1.xpose.msra.mxu0 0.0
      %455 = vmatprep.subr.mxu0 0.0
      %456 = vmatpush1.xpose.msra.mxu0 0.0
      %457 = vmatprep.subr.mxu0 0.0
      %458 = vmatpush1.xpose.msra.mxu0 0.0
      %459 = vmatprep.subr.mxu0 0.0
      %460 = vmatpush1.xpose.msra.mxu0 0.0
      %461 = vmatprep.subr.mxu0 0.0
      %462 = vmatpush1.xpose.msra.mxu0 0.0
      %463 = vmatprep.subr.mxu0 0.0
      %464 = vmatpush1.xpose.msra.mxu0 0.0
      %465 = vmatprep.subr.mxu0 0.0
      %466 = vmatpush1.xpose.msra.mxu0 0.0
      %467 = vmatprep.subr.mxu0 0.0
      %468 = vmatpush1.xpose.msra.mxu0 0.0
      %469 = vmatprep.subr.mxu0 0.0
      %470 = vmatpush1.xpose.msra.mxu0 0.0
      %471 = vmatprep.subr.mxu0 0.0
      %472 = vmatpush1.xpose.msra.mxu0 0.0
      %473 = vmatprep.subr.mxu0 0.0
      %474 = vmatpush1.xpose.msra.mxu0 0.0
      %475 = vmatprep.subr.mxu0 0.0
      %476 = vmatpush1.xpose.msra.mxu0 0.0
      %477 = vmatprep.subr.mxu0 0.0
      %478 = vmatpush1.xpose.msra.mxu0 0.0
      %479 = vmatprep.subr.mxu0 0.0
      %480 = vmatpush1.xpose.msra.mxu0 0.0
      %481 = vmatprep.subr.mxu0 0.0
      %482 = vmatpush1.xpose.msra.mxu0 0.0
      %483 = vmatprep.subr.mxu0 0.0
      %484 = vmatpush1.xpose.msra.mxu0 %v451
      %485 = vmatprep.subr.mxu0 0.0
      %486 = vmatpush2.xpose.msra.mxu0 0.0
      %487 = vmatprep.subr.mxu0 0.0
      %488 = vmatpush2.xpose.msra.mxu0 0.0
      %489 = vmatprep.subr.mxu0 0.0
      %490 = vmatpush2.xpose.msra.mxu0 0.0
      %491 = vmatprep.subr.mxu0 0.0
      %492 = vmatpush2.xpose.msra.mxu0 0.0
      %493 = vmatprep.subr.mxu0 0.0
      %494 = vmatpush2.xpose.msra.mxu0 0.0
      %495 = vmatprep.subr.mxu0 0.0
      %496 = vmatpush2.xpose.msra.mxu0 0.0
      %497 = vmatprep.subr.mxu0 0.0
      %498 = vmatpush2.xpose.msra.mxu0 0.0
      %499 = vmatprep.subr.mxu0 0.0
      %500 = vmatpush2.xpose.msra.mxu0 0.0
      %501 = vmatprep.subr.mxu0 0.0
      %502 = vmatpush2.xpose.msra.mxu0 0.0
      %503 = vmatprep.subr.mxu0 0.0
      %504 = vmatpush2.xpose.msra.mxu0 0.0
      %505 = vmatprep.subr.mxu0 0.0
      %506 = vmatpush2.xpose.msra.mxu0 0.0
      %507 = vmatprep.subr.mxu0 0.0
      %508 = vmatpush2.xpose.msra.mxu0 0.0
      %509 = vmatprep.subr.mxu0 0.0
      %510 = vmatpush2.xpose.msra.mxu0 0.0
      %511 = vmatprep.subr.mxu0 0.0
      %512 = vmatpush2.xpose.msra.mxu0 0.0
      %513 = vmatprep.subr.mxu0 0.0
      %514 = vmatpush2.xpose.msra.mxu0 0.0
      %515 = vmatprep.subr.mxu0 0.0
      %516 = vmatpush2.xpose.msra.mxu0 0.0
      %517 = vmatprep.mubr.f32.mxu0 0.0
      %518 = vmatmul.mubr.f32.gmra.mxu0 %v449
      %v519 = vpop.f32.mrf.mxu0
      %v520 = vadd.f32 0.0, %v519
      %v521 = vpop.f32.mrf.mxu0
      %522 = vdwg.mxu0
      %v523 = vmul.f32 %v520, 0.35355338
      %v524 = vsel %vm116, %v523, -inf
      %525 = vmax.xlane.f32.xlu0 %v524
      %v526 = vpop.xlane.xlu0 %525
      %v527 = vsub.f32 %v523, %v526
      %v528 = vmul.f32 %v527, 1.442695
      %v529 = vpow.pop %v528
      %v530 = vsel %vm116, %v529, 0.0
      %531 = vadd.xlane.f32.xlu0 %v530
      %v532 = vpop.xlane.xlu0 %531
      %v533 = vrcp.pop %v532
      %v534 = vmul.f32 %v529, %v533
      %535 = vrot.lane.b32.xlu0 %v112, 48
      %v536 = vpop.permute.xlu0 %535
      %v539 = vsel %vm116, %v534, 0
      %541 = vmatprep.subr.mxu0 0.0
      %542 = vmatpush1.msra.mxu0 0.0
      %543 = vmatprep.subr.mxu0 0.0
      %544 = vmatpush1.msra.mxu0 0.0
      %545 = vmatprep.subr.mxu0 0.0
      %546 = vmatpush1.msra.mxu0 0.0
      %547 = vmatprep.subr.mxu0 0.0
      %548 = vmatpush1.msra.mxu0 0.0
      %549 = vmatprep.subr.mxu0 0.0
      %550 = vmatpush1.msra.mxu0 0.0
      %551 = vmatprep.subr.mxu0 0.0
      %552 = vmatpush1.msra.mxu0 0.0
      %553 = vmatprep.subr.mxu0 0.0
      %554 = vmatpush1.msra.mxu0 0.0
      %555 = vmatprep.subr.mxu0 0.0
      %556 = vmatpush1.msra.mxu0 0.0
      %557 = vmatprep.subr.mxu0 0.0
      %558 = vmatpush1.msra.mxu0 0.0
      %559 = vmatprep.subr.mxu0 0.0
      %560 = vmatpush1.msra.mxu0 0.0
      %561 = vmatprep.subr.mxu0 0.0
      %562 = vmatpush1.msra.mxu0 0.0
      %563 = vmatprep.subr.mxu0 0.0
      %564 = vmatpush1.msra.mxu0 0.0
      %565 = vmatprep.subr.mxu0 0.0
      %566 = vmatpush1.msra.mxu0 0.0
      %567 = vmatprep.subr.mxu0 0.0
      %568 = vmatpush1.msra.mxu0 0.0
      %569 = vmatprep.subr.mxu0 0.0
      %570 = vmatpush1.msra.mxu0 0.0
      %571 = vmatprep.subr.mxu0 0.0
      %572 = vmatpush1.msra.mxu0 %v536
      %573 = vmatprep.subr.mxu0 0.0
      %574 = vmatpush2.msra.mxu0 0.0
      %575 = vmatprep.subr.mxu0 0.0
      %576 = vmatpush2.msra.mxu0 0.0
      %577 = vmatprep.subr.mxu0 0.0
      %578 = vmatpush2.msra.mxu0 0.0
      %579 = vmatprep.subr.mxu0 0.0
      %580 = vmatpush2.msra.mxu0 0.0
      %581 = vmatprep.subr.mxu0 0.0
      %582 = vmatpush2.msra.mxu0 0.0
      %583 = vmatprep.subr.mxu0 0.0
      %584 = vmatpush2.msra.mxu0 0.0
      %585 = vmatprep.subr.mxu0 0.0
      %586 = vmatpush2.msra.mxu0 0.0
      %587 = vmatprep.subr.mxu0 0.0
      %588 = vmatpush2.msra.mxu0 0.0
      %589 = vmatprep.subr.mxu0 0.0
      %590 = vmatpush2.msra.mxu0 0.0
      %591 = vmatprep.subr.mxu0 0.0
      %592 = vmatpush2.msra.mxu0 0.0
      %593 = vmatprep.subr.mxu0 0.0
      %594 = vmatpush2.msra.mxu0 0.0
      %595 = vmatprep.subr.mxu0 0.0
      %596 = vmatpush2.msra.mxu0 0.0
      %597 = vmatprep.subr.mxu0 0.0
      %598 = vmatpush2.msra.mxu0 0.0
      %599 = vmatprep.subr.mxu0 0.0
      %600 = vmatpush2.msra.mxu0 0.0
      %601 = vmatprep.subr.mxu0 0.0
      %602 = vmatpush2.msra.mxu0 0.0
      %603 = vmatprep.subr.mxu0 0.0
      %604 = vmatpush2.msra.mxu0 0.0
      %605 = vmatprep.mubr.f32.mxu0 0.0
      %606 = vmatmul.mubr.f32.gmra.mxu0 %v539
      %v607 = vpop.f32.mrf.mxu0
      %v608 = vadd.f32 0.0, %v607
      %v609 = vpop.f32.mrf.mxu0
      %610 = vdwg.mxu0
      %611 = vrot.lane.b32.xlu0 %v112, 104
      %v612 = vpop.permute.xlu0 %611
      %613 = vrot.lane.b32.xlu0 %v112, 72
      %v614 = vpop.permute.xlu0 %613
      %v615 = vsel %vm116, %v612, 0
      %v617 = vsel %vm116, %v614, 0
      %619 = vmatprep.subr.mxu0 0.0
      %620 = vmatpush1.xpose.msra.mxu0 0.0
      %621 = vmatprep.subr.mxu0 0.0
      %622 = vmatpush1.xpose.msra.mxu0 0.0
      %623 = vmatprep.subr.mxu0 0.0
      %624 = vmatpush1.xpose.msra.mxu0 0.0
      %625 = vmatprep.subr.mxu0 0.0
      %626 = vmatpush1.xpose.msra.mxu0 0.0
      %627 = vmatprep.subr.mxu0 0.0
      %628 = vmatpush1.xpose.msra.mxu0 0.0
      %629 = vmatprep.subr.mxu0 0.0
      %630 = vmatpush1.xpose.msra.mxu0 0.0
      %631 = vmatprep.subr.mxu0 0.0
      %632 = vmatpush1.xpose.msra.mxu0 0.0
      %633 = vmatprep.subr.mxu0 0.0
      %634 = vmatpush1.xpose.msra.mxu0 0.0
      %635 = vmatprep.subr.mxu0 0.0
      %636 = vmatpush1.xpose.msra.mxu0 0.0
      %637 = vmatprep.subr.mxu0 0.0
      %638 = vmatpush1.xpose.msra.mxu0 0.0
      %639 = vmatprep.subr.mxu0 0.0
      %640 = vmatpush1.xpose.msra.mxu0 0.0
      %641 = vmatprep.subr.mxu0 0.0
      %642 = vmatpush1.xpose.msra.mxu0 0.0
      %643 = vmatprep.subr.mxu0 0.0
      %644 = vmatpush1.xpose.msra.mxu0 0.0
      %645 = vmatprep.subr.mxu0 0.0
      %646 = vmatpush1.xpose.msra.mxu0 0.0
      %647 = vmatprep.subr.mxu0 0.0
      %648 = vmatpush1.xpose.msra.mxu0 0.0
      %649 = vmatprep.subr.mxu0 0.0
      %650 = vmatpush1.xpose.msra.mxu0 %v617
      %651 = vmatprep.subr.mxu0 0.0
      %652 = vmatpush2.xpose.msra.mxu0 0.0
      %653 = vmatprep.subr.mxu0 0.0
      %654 = vmatpush2.xpose.msra.mxu0 0.0
      %655 = vmatprep.subr.mxu0 0.0
      %656 = vmatpush2.xpose.msra.mxu0 0.0
      %657 = vmatprep.subr.mxu0 0.0
      %658 = vmatpush2.xpose.msra.mxu0 0.0
      %659 = vmatprep.subr.mxu0 0.0
      %660 = vmatpush2.xpose.msra.mxu0 0.0
      %661 = vmatprep.subr.mxu0 0.0
      %662 = vmatpush2.xpose.msra.mxu0 0.0
      %663 = vmatprep.subr.mxu0 0.0
      %664 = vmatpush2.xpose.msra.mxu0 0.0
      %665 = vmatprep.subr.mxu0 0.0
      %666 = vmatpush2.xpose.msra.mxu0 0.0
      %667 = vmatprep.subr.mxu0 0.0
      %668 = vmatpush2.xpose.msra.mxu0 0.0
      %669 = vmatprep.subr.mxu0 0.0
      %670 = vmatpush2.xpose.msra.mxu0 0.0
      %671 = vmatprep.subr.mxu0 0.0
      %672 = vmatpush2.xpose.msra.mxu0 0.0
      %673 = vmatprep.subr.mxu0 0.0
      %674 = vmatpush2.xpose.msra.mxu0 0.0
      %675 = vmatprep.subr.mxu0 0.0
      %676 = vmatpush2.xpose.msra.mxu0 0.0
      %677 = vmatprep.subr.mxu0 0.0
      %678 = vmatpush2.xpose.msra.mxu0 0.0
      %679 = vmatprep.subr.mxu0 0.0
      %680 = vmatpush2.xpose.msra.mxu0 0.0
      %681 = vmatprep.subr.mxu0 0.0
      %682 = vmatpush2.xpose.msra.mxu0 0.0
      %683 = vmatprep.mubr.f32.mxu0 0.0
      %684 = vmatmul.mubr.f32.gmra.mxu0 %v615
      %v685 = vpop.f32.mrf.mxu0
      %v686 = vadd.f32 0.0, %v685
      %v687 = vpop.f32.mrf.mxu0
      %688 = vdwg.mxu0
      %v689 = vmul.f32 %v686, 0.35355338
      %v690 = vsel %vm116, %v689, -inf
      %691 = vmax.xlane.f32.xlu0 %v690
      %v692 = vpop.xlane.xlu0 %691
      %v693 = vsub.f32 %v689, %v692
      %v694 = vmul.f32 %v693, 1.442695
      %v695 = vpow.pop %v694
      %v696 = vsel %vm116, %v695, 0.0
      %697 = vadd.xlane.f32.xlu0 %v696
      %v698 = vpop.xlane.xlu0 %697
      %v699 = vrcp.pop %v698
      %v700 = vmul.f32 %v695, %v699
      %701 = vrot.lane.b32.xlu0 %v112, 40
      %v702 = vpop.permute.xlu0 %701
      %v705 = vsel %vm116, %v700, 0
      %707 = vmatprep.subr.mxu0 0.0
      %708 = vmatpush1.msra.mxu0 0.0
      %709 = vmatprep.subr.mxu0 0.0
      %710 = vmatpush1.msra.mxu0 0.0
      %711 = vmatprep.subr.mxu0 0.0
      %712 = vmatpush1.msra.mxu0 0.0
      %713 = vmatprep.subr.mxu0 0.0
      %714 = vmatpush1.msra.mxu0 0.0
      %715 = vmatprep.subr.mxu0 0.0
      %716 = vmatpush1.msra.mxu0 0.0
      %717 = vmatprep.subr.mxu0 0.0
      %718 = vmatpush1.msra.mxu0 0.0
      %719 = vmatprep.subr.mxu0 0.0
      %720 = vmatpush1.msra.mxu0 0.0
      %721 = vmatprep.subr.mxu0 0.0
      %722 = vmatpush1.msra.mxu0 0.0
      %723 = vmatprep.subr.mxu0 0.0
      %724 = vmatpush1.msra.mxu0 0.0
      %725 = vmatprep.subr.mxu0 0.0
      %726 = vmatpush1.msra.mxu0 0.0
      %727 = vmatprep.subr.mxu0 0.0
      %728 = vmatpush1.msra.mxu0 0.0
      %729 = vmatprep.subr.mxu0 0.0
      %730 = vmatpush1.msra.mxu0 0.0
      %731 = vmatprep.subr.mxu0 0.0
      %732 = vmatpush1.msra.mxu0 0.0
      %733 = vmatprep.subr.mxu0 0.0
      %734 = vmatpush1.msra.mxu0 0.0
      %735 = vmatprep.subr.mxu0 0.0
      %736 = vmatpush1.msra.mxu0 0.0
      %737 = vmatprep.subr.mxu0 0.0
      %738 = vmatpush1.msra.mxu0 %v702
      %739 = vmatprep.subr.mxu0 0.0
      %740 = vmatpush2.msra.mxu0 0.0
      %741 = vmatprep.subr.mxu0 0.0
      %742 = vmatpush2.msra.mxu0 0.0
      %743 = vmatprep.subr.mxu0 0.0
      %744 = vmatpush2.msra.mxu0 0.0
      %745 = vmatprep.subr.mxu0 0.0
      %746 = vmatpush2.msra.mxu0 0.0
      %747 = vmatprep.subr.mxu0 0.0
      %748 = vmatpush2.msra.mxu0 0.0
      %749 = vmatprep.subr.mxu0 0.0
      %750 = vmatpush2.msra.mxu0 0.0
      %751 = vmatprep.subr.mxu0 0.0
      %752 = vmatpush2.msra.mxu0 0.0
      %753 = vmatprep.subr.mxu0 0.0
      %754 = vmatpush2.msra.mxu0 0.0
      %755 = vmatprep.subr.mxu0 0.0
      %756 = vmatpush2.msra.mxu0 0.0
      %757 = vmatprep.subr.mxu0 0.0
      %758 = vmatpush2.msra.mxu0 0.0
      %759 = vmatprep.subr.mxu0 0.0
      %760 = vmatpush2.msra.mxu0 0.0
      %761 = vmatprep.subr.mxu0 0.0
      %762 = vmatpush2.msra.mxu0 0.0
      %763 = vmatprep.subr.mxu0 0.0
      %764 = vmatpush2.msra.mxu0 0.0
      %765 = vmatprep.subr.mxu0 0.0
      %766 = vmatpush2.msra.mxu0 0.0
      %767 = vmatprep.subr.mxu0 0.0
      %768 = vmatpush2.msra.mxu0 0.0
      %769 = vmatprep.subr.mxu0 0.0
      %770 = vmatpush2.msra.mxu0 0.0
      %771 = vmatprep.mubr.f32.mxu0 0.0
      %772 = vmatmul.mubr.f32.gmra.mxu0 %v705
      %v773 = vpop.f32.mrf.mxu0
      %v774 = vadd.f32 0.0, %v773
      %v775 = vpop.f32.mrf.mxu0
      %776 = vdwg.mxu0
      %778 = vrot.lane.b32.xlu0 %v442, 8
      %v779 = vpop.permute.xlu0 %778
      %782 = vrot.lane.b32.xlu0 %v608, 16
      %v783 = vpop.permute.xlu0 %782
      %786 = vrot.lane.b32.xlu0 %v774, 24
      %v787 = vpop.permute.xlu0 %786
      %v789 = vsel %vm116, %v276, %v779
      %vm790 = vcmask 130048
      %v791 = vsel %vm790, %v789, %v783
      %vm792 = vcmask 195584
      %v793 = vsel %vm792, %v791, %v787
      %vm794 = vcmask 261120
      %795 = vst.msk [vmem:[%s111] sm:$0xff] %vm794, %v793
      %p796 = scmp.lt.s32.totalorder %s12, 1
      %s797 = scalar_select %p796, %s12, 1
      %s798 = smul.addr %s797, 8
      %s799 = scalar_lea.vmem %s1, %s798
      // Predicated region
      $region25: #{vt_decoder_layer.9} parent=23 // pred_check
        %p800 = pneg %p56
      $region26: #{vt_decoder_layer.9} parent=23 // pred_check_branch
        %802 = sbr.rel (%p800) target = $region28
      $region27: #{vt_decoder_layer.9} parent=23 // pred_region
        _
      $region28: #{vt_decoder_layer.9} parent=23 // pred_fallthru
        _
    $region24: #{vt_decoder_layer.9} parent=5 // pred_fallthru
      _
    %p803 = scmp.le.s32.totalorder 2, %s7
    // Predicated region
    $region29: #{vt_decoder_layer.9} parent=5 // pred_check
      %p804 = pneg %p803
    $region30: #{vt_decoder_layer.9} parent=5 // pred_check_branch
      %806 = sbr.rel (%p804) target = $region32
    $region31: #{vt_decoder_layer.9} parent=5 // pred_region
      %s807 = ssub.s32 %s7, 2
      // Predicated region
      $region33: #{vt_decoder_layer.9} parent=31 // pred_check
        %p808 = pneg %p62
      $region34: #{vt_decoder_layer.9} parent=31 // pred_check_branch
        %810 = sbr.rel (%p808) target = $region36
      $region35: #{vt_decoder_layer.9} parent=31 // pred_region
        %p811 = scmp.lt.s32.totalorder %s13, 1
        %s812 = scalar_select %p811, %s13, 1
        %s813 = smul.addr %s812, 8
        %s814 = scalar_lea.vmem %s1, %s813
      $region36: #{vt_decoder_layer.9} parent=31 // pred_fallthru
        _
    $region32: #{vt_decoder_layer.9} parent=5 // pred_fallthru
      _
  $region6: #{vt_decoder_layer.9} parent=0 // loop_footer
    %s11 = sadd.s32 1, %s7
  $region7: #{vt_decoder_layer.9} parent=0 // loop_footer_branch
    %6 = sbr.rel target = $region3
  $region8: #{vt_decoder_layer.9} parent=0 // loop_exit
    _

// kernel: vt_decoder_layer.8
$region0: #{vt_decoder_layer.8}
  #allocation0 [shape = 'u32[]', space=smem, size = 0x4, offset = 0x4, fixed_abs, tag = 'smem constant byte address 0x4 - core index']
  #allocation1 [shape = 'u32[144,128]{1,0:T(1,128)}', space=vmem, size = 0x12000, scoped, tag = 'internal scratch']
  %s0 = inlined_call_operand.vmem [shape: f32[16,32], index: 0, kind: input, shape index: {}]
  %s1 = inlined_call_operand.vmem [shape: f32[16,32], index: 1, kind: input, shape index: {}]
  %s2 = inlined_call_operand.vmem [shape: f32[64,96], index: 2, kind: input, shape index: {}]
  %s3 = inlined_call_operand.vmem [shape: f32[1,96], index: 3, kind: input, shape index: {}]
  %s4 = inlined_call_operand.vmem [shape: f32[16,96], index: 4, kind: output, shape index: {}]
  %s5 = sld [smem:[#allocation0]]
  $region49: #{vt_decoder_layer.8} parent=0
    _
  %s7 = ssub.s32 1, %s5
  %s8 = scalar_select 0, %s7, %s5
  loop: start=0, step=1, limit=4
  $region2: #{vt_decoder_layer.8} parent=0 // loop_pre_header
    _
  $region3: #{vt_decoder_layer.8} parent=0 // loop_header
    %s10 = sphi 0, %s14
    %p11 = scmp.ge.s32.totalorder %s10, 4
    %s20 = sphi 0, %s22
    %s23 = sphi 0, %s20
    %s24 = sphi 0, %s23
    %s40 = sphi 0, %s24
    %s46 = sphi 0, %s48
    %s49 = sphi 0, %s46
    %s50 = sphi 0, %s49
    %s66 = sphi 0, %s50
    %s70 = sphi 0, %s70
    %s72 = sphi 0, %s70
    %s73 = sphi 0, %s72
    %s87 = sphi 0, %s73
    %s91 = sphi 0, %s91
    %s93 = sphi 0, %s91
    %s94 = sphi 0, %s93
    %s108 = sphi 0, %s94
    %s114 = sphi 0, %s116
    %s117 = sphi 0, %s114
    %s118 = sphi 0, %s117
    %s134 = sphi 0, %s118
  $region4: #{vt_decoder_layer.8} parent=0 // loop_header_branch
    %13 = sbr.rel (%p11) target = $region8
  $region5: #{vt_decoder_layer.8} parent=0 // loop_body
    %s15 = ssub.s32 %s10, 1
    %s16 = ssub.s32 %s10, 2
    %s17 = sadd.s32 %s10, 1
    %s18 = ssub.s32 %s10, %s17
    %p19 = scmp.eq.s32.totalorder %s18, 0
    %s21 = sadd.s32 %s20, 1
    %s22 = scalar_select %p19, %s20, %s21
    %p25 = pneg %p19
    %p26 = scmp.eq.s32.totalorder %s10, 1
    %p27 = por %p25, %p26
    %p28 = scmp.ne.s32.totalorder %s20, %s23
    %p29 = scmp.eq.s32.totalorder %s10, 0
    %p30 = por %p28, %p29
    %p31 = scmp.ne.s32.totalorder %s20, %s23
    %p32 = scmp.eq.s32.totalorder %s15, 1
    %p33 = por %p31, %p32
    %p34 = scmp.ne.s32.totalorder %s23, %s24
    %p35 = scmp.eq.s32.totalorder %s15, 0
    %p36 = por %p34, %p35
    %p37 = scmp.ne.s32.totalorder %s23, %s24
    %p38 = scmp.eq.s32.totalorder %s16, 1
    %p39 = por %p37, %p38
    %p41 = scmp.ne.s32.totalorder %s24, %s40
    %p42 = scmp.eq.s32.totalorder %s16, 0
    %p43 = por %p41, %p42
    %s44 = ssub.s32 %s10, %s17
    %p45 = scmp.eq.s32.totalorder %s44, 0
    %s47 = sadd.s32 %s46, 1
    %s48 = scalar_select %p45, %s46, %s47
    %p51 = pneg %p45
    %p52 = scmp.eq.s32.totalorder %s10, 1
    %p53 = por %p51, %p52
    %p54 = scmp.ne.s32.totalorder %s46, %s49
    %p55 = scmp.eq.s32.totalorder %s10, 0
    %p56 = por %p54, %p55
    %p57 = scmp.ne.s32.totalorder %s46, %s49
    %p58 = scmp.eq.s32.totalorder %s15, 1
    %p59 = por %p57, %p58
    %p60 = scmp.ne.s32.totalorder %s49, %s50
    %p61 = scmp.eq.s32.totalorder %s15, 0
    %p62 = por %p60, %p61
    %p63 = scmp.ne.s32.totalorder %s49, %s50
    %p64 = scmp.eq.s32.totalorder %s16, 1
    %p65 = por %p63, %p64
    %p67 = scmp.ne.s32.totalorder %s50, %s66
    %p68 = scmp.eq.s32.totalorder %s16, 0
    %p69 = por %p67, %p68
    %s71 = sadd.s32 %s70, 1
    %p74 = scmp.eq.s32.totalorder %s10, 1
    %p75 = scmp.ne.s32.totalorder %s70, %s72
    %p76 = scmp.eq.s32.totalorder %s10, 0
    %p77 = por %p75, %p76
    %p78 = scmp.ne.s32.totalorder %s70, %s72
    %p79 = scmp.eq.s32.totalorder %s15, 1
    %p80 = por %p78, %p79
    %p81 = scmp.ne.s32.totalorder %s72, %s73
    %p82 = scmp.eq.s32.totalorder %s15, 0
    %p83 = por %p81, %p82
    %p84 = scmp.ne.s32.totalorder %s72, %s73
    %p85 = scmp.eq.s32.totalorder %s16, 1
    %p86 = por %p84, %p85
    %p88 = scmp.ne.s32.totalorder %s73, %s87
    %p89 = scmp.eq.s32.totalorder %s16, 0
    %p90 = por %p88, %p89
    %s92 = sadd.s32 %s91, 1
    %p95 = scmp.eq.s32.totalorder %s10, 1
    %p96 = scmp.ne.s32.totalorder %s91, %s93
    %p97 = scmp.eq.s32.totalorder %s10, 0
    %p98 = por %p96, %p97
    %p99 = scmp.ne.s32.totalorder %s91, %s93
    %p100 = scmp.eq.s32.totalorder %s15, 1
    %p101 = por %p99, %p100
    %p102 = scmp.ne.s32.totalorder %s93, %s94
    %p103 = scmp.eq.s32.totalorder %s15, 0
    %p104 = por %p102, %p103
    %p105 = scmp.ne.s32.totalorder %s93, %s94
    %p106 = scmp.eq.s32.totalorder %s16, 1
    %p107 = por %p105, %p106
    %p109 = scmp.ne.s32.totalorder %s94, %s108
    %p110 = scmp.eq.s32.totalorder %s16, 0
    %p111 = por %p109, %p110
    %s112 = ssub.s32 %s10, %s17
    %p113 = scmp.eq.s32.totalorder %s112, 0
    %s115 = sadd.s32 %s114, 1
    %s116 = scalar_select %p113, %s114, %s115
    %p119 = pneg %p113
    %p120 = scmp.eq.s32.totalorder %s10, 1
    %p121 = por %p119, %p120
    %p122 = scmp.ne.s32.totalorder %s114, %s117
    %p123 = scmp.eq.s32.totalorder %s10, 0
    %p124 = por %p122, %p123
    %p125 = scmp.ne.s32.totalorder %s114, %s117
    %p126 = scmp.eq.s32.totalorder %s15, 1
    %p127 = por %p125, %p126
    %p128 = scmp.ne.s32.totalorder %s117, %s118
    %p129 = scmp.eq.s32.totalorder %s15, 0
    %p130 = por %p128, %p129
    %p131 = scmp.ne.s32.totalorder %s117, %s118
    %p132 = scmp.eq.s32.totalorder %s16, 1
    %p133 = por %p131, %p132
    %p135 = scmp.ne.s32.totalorder %s118, %s134
    %p136 = scmp.eq.s32.totalorder %s16, 0
    %p137 = por %p135, %p136
    %p138 = scmp.le.s32.totalorder 1, %s10
    %p139 = scmp.lt.s32.totalorder %s10, 3
    %p140 = pnand %p138, %p139
    %p141 = pneg %p140
    // Predicated region
    $region9: #{vt_decoder_layer.8} parent=5 // pred_check
      _
    $region10: #{vt_decoder_layer.8} parent=5 // pred_check_branch
      %143 = sbr.rel (%p140) target = $region12
    $region11: #{vt_decoder_layer.8} parent=5 // pred_region
      %s144 = ssub.s32 %s10, 1
      // Predicated region
      $region13: #{vt_decoder_layer.8} parent=11 // pred_check
        %p145 = pneg %p83
      $region14: #{vt_decoder_layer.8} parent=11 // pred_check_branch
        %147 = sbr.rel (%p145) target = $region16
      $region15: #{vt_decoder_layer.8} parent=11 // pred_region
        _
      $region16: #{vt_decoder_layer.8} parent=11 // pred_fallthru
        _
      // Predicated region
      $region17: #{vt_decoder_layer.8} parent=11 // pred_check
        %p148 = pneg %p104
      $region18: #{vt_decoder_layer.8} parent=11 // pred_check_branch
        %150 = sbr.rel (%p148) target = $region20
      $region19: #{vt_decoder_layer.8} parent=11 // pred_region
        _
      $region20: #{vt_decoder_layer.8} parent=11 // pred_fallthru
        _
    $region12: #{vt_decoder_layer.8} parent=5 // pred_fallthru
      _
    %p151 = scmp.lt.s32.totalorder %s10, 2
    // Predicated region
    $region21: #{vt_decoder_layer.8} parent=5 // pred_check
      %p152 = pneg %p151
    $region22: #{vt_decoder_layer.8} parent=5 // pred_check_branch
      %154 = sbr.rel (%p152) target = $region24
    $region23: #{vt_decoder_layer.8} parent=5 // pred_region
      // Predicated region
      $region25: #{vt_decoder_layer.8} parent=23 // pred_check
        %p155 = pneg %p30
      $region26: #{vt_decoder_layer.8} parent=23 // pred_check_branch
        %157 = sbr.rel (%p155) target = $region28
      $region27: #{vt_decoder_layer.8} parent=23 // pred_region
        %p158 = scmp.lt.s32.totalorder %s10, 1
        %s159 = scalar_select %p158, %s10, 1
        %s160 = smul.addr %s159, 8
        %s161 = scalar_lea.vmem %s0, %s160
      $region28: #{vt_decoder_layer.8} parent=23 // pred_fallthru
        _
      // Predicated region
      $region29: #{vt_decoder_layer.8} parent=23 // pred_check
        %p162 = pneg %p56
      $region30: #{vt_decoder_layer.8} parent=23 // pred_check_branch
        %164 = sbr.rel (%p162) target = $region32
      $region31: #{vt_decoder_layer.8} parent=23 // pred_region
        %p165 = scmp.lt.s32.totalorder %s10, 1
        %s166 = scalar_select %p165, %s10, 1
        %s167 = smul.addr %s166, 8
        %s168 = scalar_lea.vmem %s1, %s167
      $region32: #{vt_decoder_layer.8} parent=23 // pred_fallthru
        _
    $region24: #{vt_decoder_layer.8} parent=5 // pred_fallthru
      _
    %p169 = scmp.le.s32.totalorder 1, %s10
    %p170 = scmp.lt.s32.totalorder %s10, 3
    %p171 = pnand %p169, %p170
    %p172 = pneg %p171
    // Predicated region
    $region33: #{vt_decoder_layer.8} parent=5 // pred_check
      _
    $region34: #{vt_decoder_layer.8} parent=5 // pred_check_branch
      %174 = sbr.rel (%p171) target = $region36
    $region35: #{vt_decoder_layer.8} parent=5 // pred_region
      %s175 = ssub.s32 %s10, 1
      %p176 = scmp.lt.s32.totalorder %s15, 1
      %s177 = scalar_select %p176, %s15, 1
      %s178 = smul.addr %s177, 8
      %s179 = scalar_lea.vmem %s0, %s178
      %p180 = pneg %p36
      %p181 = pneg %p33
      %p182 = scmp.lt.s32.totalorder %s15, 1
      %s183 = scalar_select %p182, %s15, 1
      %s184 = smul.addr %s183, 8
      %s185 = scalar_lea.vmem %s1, %s184
      %p186 = pneg %p62
      %p187 = pneg %p59
      %p188 = pneg %p83
      %p189 = pneg %p80
      %p190 = pneg %p104
      %p191 = pneg %p101
      %p192 = pneg %p130
      %p193 = pneg %p127
      %p194 = scmp.lt.s32.totalorder %s15, 1
      %s195 = scalar_select %p194, %s15, 1
      %s196 = smul.addr %s195, 8
      %s197 = scalar_lea.vmem %s4, %s196
      %p198 = scmp.lt.s32.totalorder %s15, 1
      %s199 = scalar_select %p198, %s15, 1
      %s200 = smul.addr %s199, 8
      %s201 = scalar_lea.vmem %s0, %s200
      %p202 = scmp.lt.s32.totalorder %s15, 1
      %s203 = scalar_select %p202, %s15, 1
      %s204 = smul.addr %s203, 8
      %s205 = scalar_lea.vmem %s1, %s204
      %p206 = scmp.lt.s32.totalorder %s15, 1
      %s207 = scalar_select %p206, %s15, 1
      %s208 = smul.addr %s207, 8
      %s209 = scalar_lea.vmem %s4, %s208
      %v210 = vld [vmem:[%s201] sm:$0xff]
      %v211 = vld [vmem:[%s205] sm:$0xff]
      %213 = vrot.lane.b32.xlu0 %v211, 32
      %v214 = vpop.permute.xlu0 %213
      %vm216 = vcmask 261120
      %v217 = vsel %vm216, %v210, %v214
      %v218 = vld [vmem:[%s2] sm:$0xff]
      %v219 = vld [vmem:[%s2 + $0x8] sm:$0xff]
      %v220 = vld [vmem:[%s2 + $0x10] sm:$0xff]
      %v221 = vld [vmem:[%s2 + $0x18] sm:$0xff]
      %v222 = vld [vmem:[%s2 + $0x20] sm:$0xff]
      %v223 = vld [vmem:[%s2 + $0x28] sm:$0xff]
      %v224 = vld [vmem:[%s2 + $0x30] sm:$0xff]
      %v225 = vld [vmem:[%s2 + $0x38] sm:$0xff]
      %v226 = vld [vmem:[%s3] sm:$0x1]
      %v228 = vlaneseq
      %v229 = vshrl.u32 %v228, 7
      %v230 = vsub.s32 0, %v229
      %v231 = vrot.slane %v226, %v230
      %vm233 = vcmask 523264
      %v235 = vsel %vm233, %v217, 0
      %237 = vmatprep.subr.mxu0 0.0
      %238 = vmatpush1.msra.mxu0 0.0
      %239 = vmatprep.subr.mxu0 0.0
      %240 = vmatpush1.msra.mxu0 0.0
      %241 = vmatprep.subr.mxu0 0.0
      %242 = vmatpush1.msra.mxu0 0.0
      %243 = vmatprep.subr.mxu0 0.0
      %244 = vmatpush1.msra.mxu0 0.0
      %245 = vmatprep.subr.mxu0 0.0
      %246 = vmatpush1.msra.mxu0 0.0
      %247 = vmatprep.subr.mxu0 0.0
      %248 = vmatpush1.msra.mxu0 0.0
      %249 = vmatprep.subr.mxu0 0.0
      %250 = vmatpush1.msra.mxu0 0.0
      %251 = vmatprep.subr.mxu0 0.0
      %252 = vmatpush1.msra.mxu0 0.0
      %253 = vmatprep.subr.mxu0 0.0
      %254 = vmatpush1.msra.mxu0 %v225
      %255 = vmatprep.subr.mxu0 0.0
      %256 = vmatpush1.msra.mxu0 %v224
      %257 = vmatprep.subr.mxu0 0.0
      %258 = vmatpush1.msra.mxu0 %v223
      %259 = vmatprep.subr.mxu0 0.0
      %260 = vmatpush1.msra.mxu0 %v222
      %261 = vmatprep.subr.mxu0 0.0
      %262 = vmatpush1.msra.mxu0 %v221
      %263 = vmatprep.subr.mxu0 0.0
      %264 = vmatpush1.msra.mxu0 %v220
      %265 = vmatprep.subr.mxu0 0.0
      %266 = vmatpush1.msra.mxu0 %v219
      %267 = vmatprep.subr.mxu0 0.0
      %268 = vmatpush1.msra.mxu0 %v218
      %269 = vmatprep.subr.mxu0 0.0
      %270 = vmatpush2.msra.mxu0 0.0
      %271 = vmatprep.subr.mxu0 0.0
      %272 = vmatpush2.msra.mxu0 0.0
      %273 = vmatprep.subr.mxu0 0.0
      %274 = vmatpush2.msra.mxu0 0.0
      %275 = vmatprep.subr.mxu0 0.0
      %276 = vmatpush2.msra.mxu0 0.0
      %277 = vmatprep.subr.mxu0 0.0
      %278 = vmatpush2.msra.mxu0 0.0
      %279 = vmatprep.subr.mxu0 0.0
      %280 = vmatpush2.msra.mxu0 0.0
      %281 = vmatprep.subr.mxu0 0.0
      %282 = vmatpush2.msra.mxu0 0.0
      %283 = vmatprep.subr.mxu0 0.0
      %284 = vmatpush2.msra.mxu0 0.0
      %285 = vmatprep.subr.mxu0 0.0
      %286 = vmatpush2.msra.mxu0 0.0
      %287 = vmatprep.subr.mxu0 0.0
      %288 = vmatpush2.msra.mxu0 0.0
      %289 = vmatprep.subr.mxu0 0.0
      %290 = vmatpush2.msra.mxu0 0.0
      %291 = vmatprep.subr.mxu0 0.0
      %292 = vmatpush2.msra.mxu0 0.0
      %293 = vmatprep.subr.mxu0 0.0
      %294 = vmatpush2.msra.mxu0 0.0
      %295 = vmatprep.subr.mxu0 0.0
      %296 = vmatpush2.msra.mxu0 0.0
      %297 = vmatprep.subr.mxu0 0.0
      %298 = vmatpush2.msra.mxu0 0.0
      %299 = vmatprep.subr.mxu0 0.0
      %300 = vmatpush2.msra.mxu0 0.0
      %301 = vmatprep.mubr.f32.mxu0 0.0
      %302 = vmatmul.mubr.f32.gmra.mxu0 %v235
      %v303 = vpop.f32.mrf.mxu0
      %v304 = vadd.f32 %v231, %v303
      %v305 = vpop.f32.mrf.mxu0
      %306 = vdwg.mxu0
      %vm307 = vcmask 785408
      %308 = vst.msk [vmem:[%s209] sm:$0xff] %vm307, %v304
      %p309 = scmp.lt.s32.totalorder %s15, 1
      %s310 = scalar_select %p309, %s15, 1
      %s311 = smul.addr %s310, 8
      %s312 = scalar_lea.vmem %s4, %s311
      // Predicated region
      $region37: #{vt_decoder_layer.8} parent=35 // pred_check
        %p313 = pneg %p127
      $region38: #{vt_decoder_layer.8} parent=35 // pred_check_branch
        %315 = sbr.rel (%p313) target = $region40
      $region39: #{vt_decoder_layer.8} parent=35 // pred_region
        _
      $region40: #{vt_decoder_layer.8} parent=35 // pred_fallthru
        _
    $region36: #{vt_decoder_layer.8} parent=5 // pred_fallthru
      _
    %p316 = scmp.le.s32.totalorder 2, %s10
    // Predicated region
    $region41: #{vt_decoder_layer.8} parent=5 // pred_check
      %p317 = pneg %p316
    $region42: #{vt_decoder_layer.8} parent=5 // pred_check_branch
      %319 = sbr.rel (%p317) target = $region44
    $region43: #{vt_decoder_layer.8} parent=5 // pred_region
      %s320 = ssub.s32 %s10, 2
      // Predicated region
      $region45: #{vt_decoder_layer.8} parent=43 // pred_check
        %p321 = pneg %p133
      $region46: #{vt_decoder_layer.8} parent=43 // pred_check_branch
        %323 = sbr.rel (%p321) target = $region48
      $region47: #{vt_decoder_layer.8} parent=43 // pred_region
        %p324 = scmp.lt.s32.totalorder %s16, 1
        %s325 = scalar_select %p324, %s16, 1
        %s326 = smul.addr %s325, 8
        %s327 = scalar_lea.vmem %s4, %s326
      $region48: #{vt_decoder_layer.8} parent=43 // pred_fallthru
        _
    $region44: #{vt_decoder_layer.8} parent=5 // pred_fallthru
      _
  $region6: #{vt_decoder_layer.8} parent=0 // loop_footer
    %s14 = sadd.s32 1, %s10
  $region7: #{vt_decoder_layer.8} parent=0 // loop_footer_branch
    %9 = sbr.rel target = $region3
  $region8: #{vt_decoder_layer.8} parent=0 // loop_exit
    _

// kernel: vt_decoder_layer.10
$region0: #{vt_decoder_layer.10}
  #allocation0 [shape = 'u32[]', space=smem, size = 0x4, offset = 0x4, fixed_abs, tag = 'smem constant byte address 0x4 - core index']
  #allocation1 [shape = 'u32[144,128]{1,0:T(1,128)}', space=vmem, size = 0x12000, scoped, tag = 'internal scratch']
  %s0 = inlined_call_operand.vmem [shape: f32[16,32], index: 0, kind: input, shape index: {}]
  %s1 = inlined_call_operand.vmem [shape: f32[16,32], index: 1, kind: input, shape index: {}]
  %s2 = inlined_call_operand.vmem [shape: f32[32,32], index: 2, kind: input, shape index: {}]
  %s3 = inlined_call_operand.vmem [shape: f32[1,32], index: 3, kind: input, shape index: {}]
  %s4 = inlined_call_operand.vmem [shape: f32[1,32], index: 4, kind: input, shape index: {}]
  %s5 = inlined_call_operand.vmem [shape: f32[1,32], index: 5, kind: input, shape index: {}]
  %s6 = inlined_call_operand.vmem [shape: f32[16,32], index: 6, kind: output, shape index: {}]
  %s7 = sld [smem:[#allocation0]]
  $region57: #{vt_decoder_layer.10} parent=0
    _
  %s9 = ssub.s32 1, %s7
  %s10 = scalar_select 0, %s9, %s7
  loop: start=0, step=1, limit=4
  $region2: #{vt_decoder_layer.10} parent=0 // loop_pre_header
    _
  $region3: #{vt_decoder_layer.10} parent=0 // loop_header
    %s12 = sphi 0, %s16
    %p13 = scmp.ge.s32.totalorder %s12, 4
    %s22 = sphi 0, %s24
    %s25 = sphi 0, %s22
    %s26 = sphi 0, %s25
    %s42 = sphi 0, %s26
    %s48 = sphi 0, %s50
    %s51 = sphi 0, %s48
    %s52 = sphi 0, %s51
    %s68 = sphi 0, %s52
    %s72 = sphi 0, %s72
    %s74 = sphi 0, %s72
    %s75 = sphi 0, %s74
    %s89 = sphi 0, %s75
    %s93 = sphi 0, %s93
    %s95 = sphi 0, %s93
    %s96 = sphi 0, %s95
    %s110 = sphi 0, %s96
    %s114 = sphi 0, %s114
    %s116 = sphi 0, %s114
    %s117 = sphi 0, %s116
    %s131 = sphi 0, %s117
    %s135 = sphi 0, %s135
    %s137 = sphi 0, %s135
    %s138 = sphi 0, %s137
    %s152 = sphi 0, %s138
    %s158 = sphi 0, %s160
    %s161 = sphi 0, %s158
    %s162 = sphi 0, %s161
    %s178 = sphi 0, %s162
  $region4: #{vt_decoder_layer.10} parent=0 // loop_header_branch
    %15 = sbr.rel (%p13) target = $region8
  $region5: #{vt_decoder_layer.10} parent=0 // loop_body
    %s17 = ssub.s32 %s12, 1
    %s18 = ssub.s32 %s12, 2
    %s19 = sadd.s32 %s12, 1
    %s20 = ssub.s32 %s12, %s19
    %p21 = scmp.eq.s32.totalorder %s20, 0
    %s23 = sadd.s32 %s22, 1
    %s24 = scalar_select %p21, %s22, %s23
    %p27 = pneg %p21
    %p28 = scmp.eq.s32.totalorder %s12, 1
    %p29 = por %p27, %p28
    %p30 = scmp.ne.s32.totalorder %s22, %s25
    %p31 = scmp.eq.s32.totalorder %s12, 0
    %p32 = por %p30, %p31
    %p33 = scmp.ne.s32.totalorder %s22, %s25
    %p34 = scmp.eq.s32.totalorder %s17, 1
    %p35 = por %p33, %p34
    %p36 = scmp.ne.s32.totalorder %s25, %s26
    %p37 = scmp.eq.s32.totalorder %s17, 0
    %p38 = por %p36, %p37
    %p39 = scmp.ne.s32.totalorder %s25, %s26
    %p40 = scmp.eq.s32.totalorder %s18, 1
    %p41 = por %p39, %p40
    %p43 = scmp.ne.s32.totalorder %s26, %s42
    %p44 = scmp.eq.s32.totalorder %s18, 0
    %p45 = por %p43, %p44
    %s46 = ssub.s32 %s12, %s19
    %p47 = scmp.eq.s32.totalorder %s46, 0
    %s49 = sadd.s32 %s48, 1
    %s50 = scalar_select %p47, %s48, %s49
    %p53 = pneg %p47
    %p54 = scmp.eq.s32.totalorder %s12, 1
    %p55 = por %p53, %p54
    %p56 = scmp.ne.s32.totalorder %s48, %s51
    %p57 = scmp.eq.s32.totalorder %s12, 0
    %p58 = por %p56, %p57
    %p59 = scmp.ne.s32.totalorder %s48, %s51
    %p60 = scmp.eq.s32.totalorder %s17, 1
    %p61 = por %p59, %p60
    %p62 = scmp.ne.s32.totalorder %s51, %s52
    %p63 = scmp.eq.s32.totalorder %s17, 0
    %p64 = por %p62, %p63
    %p65 = scmp.ne.s32.totalorder %s51, %s52
    %p66 = scmp.eq.s32.totalorder %s18, 1
    %p67 = por %p65, %p66
    %p69 = scmp.ne.s32.totalorder %s52, %s68
    %p70 = scmp.eq.s32.totalorder %s18, 0
    %p71 = por %p69, %p70
    %s73 = sadd.s32 %s72, 1
    %p76 = scmp.eq.s32.totalorder %s12, 1
    %p77 = scmp.ne.s32.totalorder %s72, %s74
    %p78 = scmp.eq.s32.totalorder %s12, 0
    %p79 = por %p77, %p78
    %p80 = scmp.ne.s32.totalorder %s72, %s74
    %p81 = scmp.eq.s32.totalorder %s17, 1
    %p82 = por %p80, %p81
    %p83 = scmp.ne.s32.totalorder %s74, %s75
    %p84 = scmp.eq.s32.totalorder %s17, 0
    %p85 = por %p83, %p84
    %p86 = scmp.ne.s32.totalorder %s74, %s75
    %p87 = scmp.eq.s32.totalorder %s18, 1
    %p88 = por %p86, %p87
    %p90 = scmp.ne.s32.totalorder %s75, %s89
    %p91 = scmp.eq.s32.totalorder %s18, 0
    %p92 = por %p90, %p91
    %s94 = sadd.s32 %s93, 1
    %p97 = scmp.eq.s32.totalorder %s12, 1
    %p98 = scmp.ne.s32.totalorder %s93, %s95
    %p99 = scmp.eq.s32.totalorder %s12, 0
    %p100 = por %p98, %p99
    %p101 = scmp.ne.s32.totalorder %s93, %s95
    %p102 = scmp.eq.s32.totalorder %s17, 1
    %p103 = por %p101, %p102
    %p104 = scmp.ne.s32.totalorder %s95, %s96
    %p105 = scmp.eq.s32.totalorder %s17, 0
    %p106 = por %p104, %p105
    %p107 = scmp.ne.s32.totalorder %s95, %s96
    %p108 = scmp.eq.s32.totalorder %s18, 1
    %p109 = por %p107, %p108
    %p111 = scmp.ne.s32.totalorder %s96, %s110
    %p112 = scmp.eq.s32.totalorder %s18, 0
    %p113 = por %p111, %p112
    %s115 = sadd.s32 %s114, 1
    %p118 = scmp.eq.s32.totalorder %s12, 1
    %p119 = scmp.ne.s32.totalorder %s114, %s116
    %p120 = scmp.eq.s32.totalorder %s12, 0
    %p121 = por %p119, %p120
    %p122 = scmp.ne.s32.totalorder %s114, %s116
    %p123 = scmp.eq.s32.totalorder %s17, 1
    %p124 = por %p122, %p123
    %p125 = scmp.ne.s32.totalorder %s116, %s117
    %p126 = scmp.eq.s32.totalorder %s17, 0
    %p127 = por %p125, %p126
    %p128 = scmp.ne.s32.totalorder %s116, %s117
    %p129 = scmp.eq.s32.totalorder %s18, 1
    %p130 = por %p128, %p129
    %p132 = scmp.ne.s32.totalorder %s117, %s131
    %p133 = scmp.eq.s32.totalorder %s18, 0
    %p134 = por %p132, %p133
    %s136 = sadd.s32 %s135, 1
    %p139 = scmp.eq.s32.totalorder %s12, 1
    %p140 = scmp.ne.s32.totalorder %s135, %s137
    %p141 = scmp.eq.s32.totalorder %s12, 0
    %p142 = por %p140, %p141
    %p143 = scmp.ne.s32.totalorder %s135, %s137
    %p144 = scmp.eq.s32.totalorder %s17, 1
    %p145 = por %p143, %p144
    %p146 = scmp.ne.s32.totalorder %s137, %s138
    %p147 = scmp.eq.s32.totalorder %s17, 0
    %p148 = por %p146, %p147
    %p149 = scmp.ne.s32.totalorder %s137, %s138
    %p150 = scmp.eq.s32.totalorder %s18, 1
    %p151 = por %p149, %p150
    %p153 = scmp.ne.s32.totalorder %s138, %s152
    %p154 = scmp.eq.s32.totalorder %s18, 0
    %p155 = por %p153, %p154
    %s156 = ssub.s32 %s12, %s19
    %p157 = scmp.eq.s32.totalorder %s156, 0
    %s159 = sadd.s32 %s158, 1
    %s160 = scalar_select %p157, %s158, %s159
    %p163 = pneg %p157
    %p164 = scmp.eq.s32.totalorder %s12, 1
    %p165 = por %p163, %p164
    %p166 = scmp.ne.s32.totalorder %s158, %s161
    %p167 = scmp.eq.s32.totalorder %s12, 0
    %p168 = por %p166, %p167
    %p169 = scmp.ne.s32.totalorder %s158, %s161
    %p170 = scmp.eq.s32.totalorder %s17, 1
    %p171 = por %p169, %p170
    %p172 = scmp.ne.s32.totalorder %s161, %s162
    %p173 = scmp.eq.s32.totalorder %s17, 0
    %p174 = por %p172, %p173
    %p175 = scmp.ne.s32.totalorder %s161, %s162
    %p176 = scmp.eq.s32.totalorder %s18, 1
    %p177 = por %p175, %p176
    %p179 = scmp.ne.s32.totalorder %s162, %s178
    %p180 = scmp.eq.s32.totalorder %s18, 0
    %p181 = por %p179, %p180
    %p182 = scmp.le.s32.totalorder 1, %s12
    %p183 = scmp.lt.s32.totalorder %s12, 3
    %p184 = pnand %p182, %p183
    %p185 = pneg %p184
    // Predicated region
    $region9: #{vt_decoder_layer.10} parent=5 // pred_check
      _
    $region10: #{vt_decoder_layer.10} parent=5 // pred_check_branch
      %187 = sbr.rel (%p184) target = $region12
    $region11: #{vt_decoder_layer.10} parent=5 // pred_region
      %s188 = ssub.s32 %s12, 1
      // Predicated region
      $region13: #{vt_decoder_layer.10} parent=11 // pred_check
        %p189 = pneg %p85
      $region14: #{vt_decoder_layer.10} parent=11 // pred_check_branch
        %191 = sbr.rel (%p189) target = $region16
      $region15: #{vt_decoder_layer.10} parent=11 // pred_region
        _
      $region16: #{vt_decoder_layer.10} parent=11 // pred_fallthru
        _
      // Predicated region
      $region17: #{vt_decoder_layer.10} parent=11 // pred_check
        %p192 = pneg %p106
      $region18: #{vt_decoder_layer.10} parent=11 // pred_check_branch
        %194 = sbr.rel (%p192) target = $region20
      $region19: #{vt_decoder_layer.10} parent=11 // pred_region
        _
      $region20: #{vt_decoder_layer.10} parent=11 // pred_fallthru
        _
      // Predicated region
      $region21: #{vt_decoder_layer.10} parent=11 // pred_check
        %p195 = pneg %p127
      $region22: #{vt_decoder_layer.10} parent=11 // pred_check_branch
        %197 = sbr.rel (%p195) target = $region24
      $region23: #{vt_decoder_layer.10} parent=11 // pred_region
        _
      $region24: #{vt_decoder_layer.10} parent=11 // pred_fallthru
        _
      // Predicated region
      $region25: #{vt_decoder_layer.10} parent=11 // pred_check
        %p198 = pneg %p148
      $region26: #{vt_decoder_layer.10} parent=11 // pred_check_branch
        %200 = sbr.rel (%p198) target = $region28
      $region27: #{vt_decoder_layer.10} parent=11 // pred_region
        _
      $region28: #{vt_decoder_layer.10} parent=11 // pred_fallthru
        _
    $region12: #{vt_decoder_layer.10} parent=5 // pred_fallthru
      _
    %p201 = scmp.lt.s32.totalorder %s12, 2
    // Predicated region
    $region29: #{vt_decoder_layer.10} parent=5 // pred_check
      %p202 = pneg %p201
    $region30: #{vt_decoder_layer.10} parent=5 // pred_check_branch
      %204 = sbr.rel (%p202) target = $region32
    $region31: #{vt_decoder_layer.10} parent=5 // pred_region
      // Predicated region
      $region33: #{vt_decoder_layer.10} parent=31 // pred_check
        %p205 = pneg %p32
      $region34: #{vt_decoder_layer.10} parent=31 // pred_check_branch
        %207 = sbr.rel (%p205) target = $region36
      $region35: #{vt_decoder_layer.10} parent=31 // pred_region
        %p208 = scmp.lt.s32.totalorder %s12, 1
        %s209 = scalar_select %p208, %s12, 1
        %s210 = smul.addr %s209, 8
        %s211 = scalar_lea.vmem %s0, %s210
      $region36: #{vt_decoder_layer.10} parent=31 // pred_fallthru
        _
      // Predicated region
      $region37: #{vt_decoder_layer.10} parent=31 // pred_check
        %p212 = pneg %p58
      $region38: #{vt_decoder_layer.10} parent=31 // pred_check_branch
        %214 = sbr.rel (%p212) target = $region40
      $region39: #{vt_decoder_layer.10} parent=31 // pred_region
        %p215 = scmp.lt.s32.totalorder %s12, 1
        %s216 = scalar_select %p215, %s12, 1
        %s217 = smul.addr %s216, 8
        %s218 = scalar_lea.vmem %s1, %s217
      $region40: #{vt_decoder_layer.10} parent=31 // pred_fallthru
        _
    $region32: #{vt_decoder_layer.10} parent=5 // pred_fallthru
      _
    %p219 = scmp.le.s32.totalorder 1, %s12
    %p220 = scmp.lt.s32.totalorder %s12, 3
    %p221 = pnand %p219, %p220
    %p222 = pneg %p221
    // Predicated region
    $region41: #{vt_decoder_layer.10} parent=5 // pred_check
      _
    $region42: #{vt_decoder_layer.10} parent=5 // pred_check_branch
      %224 = sbr.rel (%p221) target = $region44
    $region43: #{vt_decoder_layer.10} parent=5 // pred_region
      %s225 = ssub.s32 %s12, 1
      %p226 = scmp.lt.s32.totalorder %s17, 1
      %s227 = scalar_select %p226, %s17, 1
      %s228 = smul.addr %s227, 8
      %s229 = scalar_lea.vmem %s0, %s228
      %p230 = pneg %p38
      %p231 = pneg %p35
      %p232 = scmp.lt.s32.totalorder %s17, 1
      %s233 = scalar_select %p232, %s17, 1
      %s234 = smul.addr %s233, 8
      %s235 = scalar_lea.vmem %s1, %s234
      %p236 = pneg %p64
      %p237 = pneg %p61
      %p238 = pneg %p85
      %p239 = pneg %p82
      %p240 = pneg %p106
      %p241 = pneg %p103
      %p242 = pneg %p127
      %p243 = pneg %p124
      %p244 = pneg %p148
      %p245 = pneg %p145
      %p246 = pneg %p174
      %p247 = pneg %p171
      %p248 = scmp.lt.s32.totalorder %s17, 1
      %s249 = scalar_select %p248, %s17, 1
      %s250 = smul.addr %s249, 8
      %s251 = scalar_lea.vmem %s6, %s250
      %p252 = scmp.lt.s32.totalorder %s17, 1
      %s253 = scalar_select %p252, %s17, 1
      %s254 = smul.addr %s253, 8
      %s255 = scalar_lea.vmem %s0, %s254
      %p256 = scmp.lt.s32.totalorder %s17, 1
      %s257 = scalar_select %p256, %s17, 1
      %s258 = smul.addr %s257, 8
      %s259 = scalar_lea.vmem %s1, %s258
      %p260 = scmp.lt.s32.totalorder %s17, 1
      %s261 = scalar_select %p260, %s17, 1
      %s262 = smul.addr %s261, 8
      %s263 = scalar_lea.vmem %s6, %s262
      %v264 = vld [vmem:[%s259] sm:$0xff]
      %v265 = vld [vmem:[%s255] sm:$0xff]
      %v266 = vld [vmem:[%s2] sm:$0xff]
      %v267 = vld [vmem:[%s2 + $0x8] sm:$0xff]
      %v268 = vld [vmem:[%s2 + $0x10] sm:$0xff]
      %v269 = vld [vmem:[%s2 + $0x18] sm:$0xff]
      %vm270 = vcmask 261120
      %v272 = vsel %vm270, %v265, 0
      %274 = vmatprep.subr.mxu0 0.0
      %275 = vmatpush1.msra.mxu0 0.0
      %276 = vmatprep.subr.mxu0 0.0
      %277 = vmatpush1.msra.mxu0 0.0
      %278 = vmatprep.subr.mxu0 0.0
      %279 = vmatpush1.msra.mxu0 0.0
      %280 = vmatprep.subr.mxu0 0.0
      %281 = vmatpush1.msra.mxu0 0.0
      %282 = vmatprep.subr.mxu0 0.0
      %283 = vmatpush1.msra.mxu0 0.0
      %284 = vmatprep.subr.mxu0 0.0
      %285 = vmatpush1.msra.mxu0 0.0
      %286 = vmatprep.subr.mxu0 0.0
      %287 = vmatpush1.msra.mxu0 0.0
      %288 = vmatprep.subr.mxu0 0.0
      %289 = vmatpush1.msra.mxu0 0.0
      %290 = vmatprep.subr.mxu0 0.0
      %291 = vmatpush1.msra.mxu0 0.0
      %292 = vmatprep.subr.mxu0 0.0
      %293 = vmatpush1.msra.mxu0 0.0
      %294 = vmatprep.subr.mxu0 0.0
      %295 = vmatpush1.msra.mxu0 0.0
      %296 = vmatprep.subr.mxu0 0.0
      %297 = vmatpush1.msra.mxu0 0.0
      %298 = vmatprep.subr.mxu0 0.0
      %299 = vmatpush1.msra.mxu0 %v269
      %300 = vmatprep.subr.mxu0 0.0
      %301 = vmatpush1.msra.mxu0 %v268
      %302 = vmatprep.subr.mxu0 0.0
      %303 = vmatpush1.msra.mxu0 %v267
      %304 = vmatprep.subr.mxu0 0.0
      %305 = vmatpush1.msra.mxu0 %v266
      %306 = vmatprep.subr.mxu0 0.0
      %307 = vmatpush2.msra.mxu0 0.0
      %308 = vmatprep.subr.mxu0 0.0
      %309 = vmatpush2.msra.mxu0 0.0
      %310 = vmatprep.subr.mxu0 0.0
      %311 = vmatpush2.msra.mxu0 0.0
      %312 = vmatprep.subr.mxu0 0.0
      %313 = vmatpush2.msra.mxu0 0.0
      %314 = vmatprep.subr.mxu0 0.0
      %315 = vmatpush2.msra.mxu0 0.0
      %316 = vmatprep.subr.mxu0 0.0
      %317 = vmatpush2.msra.mxu0 0.0
      %318 = vmatprep.subr.mxu0 0.0
      %319 = vmatpush2.msra.mxu0 0.0
      %320 = vmatprep.subr.mxu0 0.0
      %321 = vmatpush2.msra.mxu0 0.0
      %322 = vmatprep.subr.mxu0 0.0
      %323 = vmatpush2.msra.mxu0 0.0
      %324 = vmatprep.subr.mxu0 0.0
      %325 = vmatpush2.msra.mxu0 0.0
      %326 = vmatprep.subr.mxu0 0.0
      %327 = vmatpush2.msra.mxu0 0.0
      %328 = vmatprep.subr.mxu0 0.0
      %329 = vmatpush2.msra.mxu0 0.0
      %330 = vmatprep.subr.mxu0 0.0
      %331 = vmatpush2.msra.mxu0 0.0
      %332 = vmatprep.subr.mxu0 0.0
      %333 = vmatpush2.msra.mxu0 0.0
      %334 = vmatprep.subr.mxu0 0.0
      %335 = vmatpush2.msra.mxu0 0.0
      %336 = vmatprep.subr.mxu0 0.0
      %337 = vmatpush2.msra.mxu0 0.0
      %338 = vmatprep.mubr.f32.mxu0 0.0
      %339 = vmatmul.mubr.f32.gmra.mxu0 %v272
      %v340 = vpop.f32.mrf.mxu0
      %v341 = vadd.f32 0.0, %v340
      %v342 = vpop.f32.mrf.mxu0
      %343 = vdwg.mxu0
      %v344 = vadd.f32 %v264, %v341
      %v345 = vld [vmem:[%s3] sm:$0x1]
      %v347 = vlaneseq
      %v348 = vshrl.u32 %v347, 7
      %v349 = vsub.s32 0, %v348
      %v350 = vrot.slane %v345, %v349
      %v352 = vadd.f32 %v344, %v350
      %v353 = vsel %vm270, %v352, 0.0
      %354 = vadd.xlane.f32.xlu0 %v353
      %v355 = vpop.xlane.xlu0 %354
      %v356 = vrcp.pop 32.0
      %v357 = vmul.f32 %v355, %v356
      %v358 = vsub.f32 %v352, %v357
      %v359 = vmul.f32 %v358, %v358
      %v360 = vsel %vm270, %v359, 0.0
      %361 = vadd.xlane.f32.xlu0 %v360
      %v362 = vpop.xlane.xlu0 %361
      %v363 = vmul.f32 %v362, %v356
      %v364 = vadd.f32 %v363, 1e-05
      %v365 = vrsqrt.pop %v364
      %v366 = vmul.f32 %v358, %v365
      %v367 = vld [vmem:[%s4] sm:$0x1]
      %v369 = vlaneseq
      %v370 = vshrl.u32 %v369, 7
      %v371 = vsub.s32 0, %v370
      %v372 = vrot.slane %v367, %v371
      %v374 = vmul.f32 %v366, %v372
      %v375 = vld [vmem:[%s5] sm:$0x1]
      %v377 = vlaneseq
      %v378 = vshrl.u32 %v377, 7
      %v379 = vsub.s32 0, %v378
      %v380 = vrot.slane %v375, %v379
      %v382 = vadd.f32 %v374, %v380
      %383 = vst.msk [vmem:[%s263] sm:$0xff] %vm270, %v382
      %p384 = scmp.lt.s32.totalorder %s17, 1
      %s385 = scalar_select %p384, %s17, 1
      %s386 = smul.addr %s385, 8
      %s387 = scalar_lea.vmem %s6, %s386
      // Predicated region
      $region45: #{vt_decoder_layer.10} parent=43 // pred_check
        %p388 = pneg %p171
      $region46: #{vt_decoder_layer.10} parent=43 // pred_check_branch
        %390 = sbr.rel (%p388) target = $region48
      $region47: #{vt_decoder_layer.10} parent=43 // pred_region
        _
      $region48: #{vt_decoder_layer.10} parent=43 // pred_fallthru
        _
    $region44: #{vt_decoder_layer.10} parent=5 // pred_fallthru
      _
    %p391 = scmp.le.s32.totalorder 2, %s12
    // Predicated region
    $region49: #{vt_decoder_layer.10} parent=5 // pred_check
      %p392 = pneg %p391
    $region50: #{vt_decoder_layer.10} parent=5 // pred_check_branch
      %394 = sbr.rel (%p392) target = $region52
    $region51: #{vt_decoder_layer.10} parent=5 // pred_region
      %s395 = ssub.s32 %s12, 2
      // Predicated region
      $region53: #{vt_decoder_layer.10} parent=51 // pred_check
        %p396 = pneg %p177
      $region54: #{vt_decoder_layer.10} parent=51 // pred_check_branch
        %398 = sbr.rel (%p396) target = $region56
      $region55: #{vt_decoder_layer.10} parent=51 // pred_region
        %p399 = scmp.lt.s32.totalorder %s18, 1
        %s400 = scalar_select %p399, %s18, 1
        %s401 = smul.addr %s400, 8
        %s402 = scalar_lea.vmem %s6, %s401
      $region56: #{vt_decoder_layer.10} parent=51 // pred_fallthru
        _
    $region52: #{vt_decoder_layer.10} parent=5 // pred_fallthru
      _
  $region6: #{vt_decoder_layer.10} parent=0 // loop_footer
    %s16 = sadd.s32 1, %s12
  $region7: #{vt_decoder_layer.10} parent=0 // loop_footer_branch
    %11 = sbr.rel target = $region3
  $region8: #{vt_decoder_layer.10} parent=0 // loop_exit
    _

// kernel: vt_decoder_layer.11
$region0: #{vt_decoder_layer.11}
  #allocation0 [shape = 'u32[]', space=smem, size = 0x4, offset = 0x4, fixed_abs, tag = 'smem constant byte address 0x4 - core index']
  #allocation1 [shape = 'u32[144,128]{1,0:T(1,128)}', space=vmem, size = 0x12000, scoped, tag = 'internal scratch']
  %s0 = inlined_call_operand.vmem [shape: f32[16,32], index: 0, kind: input, shape index: {}]
  %s1 = inlined_call_operand.vmem [shape: f32[16,32], index: 1, kind: input, shape index: {}]
  %s2 = inlined_call_operand.vmem [shape: f32[16,32], index: 2, kind: input, shape index: {}]
  %s3 = inlined_call_operand.vmem [shape: f32[96,64], index: 3, kind: input, shape index: {}]
  %s4 = inlined_call_operand.vmem [shape: f32[1,64], index: 4, kind: input, shape index: {}]
  %s5 = inlined_call_operand.vmem [shape: f32[16,64], index: 5, kind: output, shape index: {}]
  %s6 = sld [smem:[#allocation0]]
  $region53: #{vt_decoder_layer.11} parent=0
    _
  %s8 = ssub.s32 1, %s6
  %s9 = scalar_select 0, %s8, %s6
  loop: start=0, step=1, limit=4
  $region2: #{vt_decoder_layer.11} parent=0 // loop_pre_header
    _
  $region3: #{vt_decoder_layer.11} parent=0 // loop_header
    %s11 = sphi 0, %s15
    %p12 = scmp.ge.s32.totalorder %s11, 4
    %s21 = sphi 0, %s23
    %s24 = sphi 0, %s21
    %s25 = sphi 0, %s24
    %s41 = sphi 0, %s25
    %s47 = sphi 0, %s49
    %s50 = sphi 0, %s47
    %s51 = sphi 0, %s50
    %s67 = sphi 0, %s51
    %s73 = sphi 0, %s75
    %s76 = sphi 0, %s73
    %s77 = sphi 0, %s76
    %s93 = sphi 0, %s77
    %s97 = sphi 0, %s97
    %s99 = sphi 0, %s97
    %s100 = sphi 0, %s99
    %s114 = sphi 0, %s100
    %s118 = sphi 0, %s118
    %s120 = sphi 0, %s118
    %s121 = sphi 0, %s120
    %s135 = sphi 0, %s121
    %s141 = sphi 0, %s143
    %s144 = sphi 0, %s141
    %s145 = sphi 0, %s144
    %s161 = sphi 0, %s145
  $region4: #{vt_decoder_layer.11} parent=0 // loop_header_branch
    %14 = sbr.rel (%p12) target = $region8
  $region5: #{vt_decoder_layer.11} parent=0 // loop_body
    %s16 = ssub.s32 %s11, 1
    %s17 = ssub.s32 %s11, 2
    %s18 = sadd.s32 %s11, 1
    %s19 = ssub.s32 %s11, %s18
    %p20 = scmp.eq.s32.totalorder %s19, 0
    %s22 = sadd.s32 %s21, 1
    %s23 = scalar_select %p20, %s21, %s22
    %p26 = pneg %p20
    %p27 = scmp.eq.s32.totalorder %s11, 1
    %p28 = por %p26, %p27
    %p29 = scmp.ne.s32.totalorder %s21, %s24
    %p30 = scmp.eq.s32.totalorder %s11, 0
    %p31 = por %p29, %p30
    %p32 = scmp.ne.s32.totalorder %s21, %s24
    %p33 = scmp.eq.s32.totalorder %s16, 1
    %p34 = por %p32, %p33
    %p35 = scmp.ne.s32.totalorder %s24, %s25
    %p36 = scmp.eq.s32.totalorder %s16, 0
    %p37 = por %p35, %p36
    %p38 = scmp.ne.s32.totalorder %s24, %s25
    %p39 = scmp.eq.s32.totalorder %s17, 1
    %p40 = por %p38, %p39
    %p42 = scmp.ne.s32.totalorder %s25, %s41
    %p43 = scmp.eq.s32.totalorder %s17, 0
    %p44 = por %p42, %p43
    %s45 = ssub.s32 %s11, %s18
    %p46 = scmp.eq.s32.totalorder %s45, 0
    %s48 = sadd.s32 %s47, 1
    %s49 = scalar_select %p46, %s47, %s48
    %p52 = pneg %p46
    %p53 = scmp.eq.s32.totalorder %s11, 1
    %p54 = por %p52, %p53
    %p55 = scmp.ne.s32.totalorder %s47, %s50
    %p56 = scmp.eq.s32.totalorder %s11, 0
    %p57 = por %p55, %p56
    %p58 = scmp.ne.s32.totalorder %s47, %s50
    %p59 = scmp.eq.s32.totalorder %s16, 1
    %p60 = por %p58, %p59
    %p61 = scmp.ne.s32.totalorder %s50, %s51
    %p62 = scmp.eq.s32.totalorder %s16, 0
    %p63 = por %p61, %p62
    %p64 = scmp.ne.s32.totalorder %s50, %s51
    %p65 = scmp.eq.s32.totalorder %s17, 1
    %p66 = por %p64, %p65
    %p68 = scmp.ne.s32.totalorder %s51, %s67
    %p69 = scmp.eq.s32.totalorder %s17, 0
    %p70 = por %p68, %p69
    %s71 = ssub.s32 %s11, %s18
    %p72 = scmp.eq.s32.totalorder %s71, 0
    %s74 = sadd.s32 %s73, 1
    %s75 = scalar_select %p72, %s73, %s74
    %p78 = pneg %p72
    %p79 = scmp.eq.s32.totalorder %s11, 1
    %p80 = por %p78, %p79
    %p81 = scmp.ne.s32.totalorder %s73, %s76
    %p82 = scmp.eq.s32.totalorder %s11, 0
    %p83 = por %p81, %p82
    %p84 = scmp.ne.s32.totalorder %s73, %s76
    %p85 = scmp.eq.s32.totalorder %s16, 1
    %p86 = por %p84, %p85
    %p87 = scmp.ne.s32.totalorder %s76, %s77
    %p88 = scmp.eq.s32.totalorder %s16, 0
    %p89 = por %p87, %p88
    %p90 = scmp.ne.s32.totalorder %s76, %s77
    %p91 = scmp.eq.s32.totalorder %s17, 1
    %p92 = por %p90, %p91
    %p94 = scmp.ne.s32.totalorder %s77, %s93
    %p95 = scmp.eq.s32.totalorder %s17, 0
    %p96 = por %p94, %p95
    %s98 = sadd.s32 %s97, 1
    %p101 = scmp.eq.s32.totalorder %s11, 1
    %p102 = scmp.ne.s32.totalorder %s97, %s99
    %p103 = scmp.eq.s32.totalorder %s11, 0
    %p104 = por %p102, %p103
    %p105 = scmp.ne.s32.totalorder %s97, %s99
    %p106 = scmp.eq.s32.totalorder %s16, 1
    %p107 = por %p105, %p106
    %p108 = scmp.ne.s32.totalorder %s99, %s100
    %p109 = scmp.eq.s32.totalorder %s16, 0
    %p110 = por %p108, %p109
    %p111 = scmp.ne.s32.totalorder %s99, %s100
    %p112 = scmp.eq.s32.totalorder %s17, 1
    %p113 = por %p111, %p112
    %p115 = scmp.ne.s32.totalorder %s100, %s114
    %p116 = scmp.eq.s32.totalorder %s17, 0
    %p117 = por %p115, %p116
    %s119 = sadd.s32 %s118, 1
    %p122 = scmp.eq.s32.totalorder %s11, 1
    %p123 = scmp.ne.s32.totalorder %s118, %s120
    %p124 = scmp.eq.s32.totalorder %s11, 0
    %p125 = por %p123, %p124
    %p126 = scmp.ne.s32.totalorder %s118, %s120
    %p127 = scmp.eq.s32.totalorder %s16, 1
    %p128 = por %p126, %p127
    %p129 = scmp.ne.s32.totalorder %s120, %s121
    %p130 = scmp.eq.s32.totalorder %s16, 0
    %p131 = por %p129, %p130
    %p132 = scmp.ne.s32.totalorder %s120, %s121
    %p133 = scmp.eq.s32.totalorder %s17, 1
    %p134 = por %p132, %p133
    %p136 = scmp.ne.s32.totalorder %s121, %s135
    %p137 = scmp.eq.s32.totalorder %s17, 0
    %p138 = por %p136, %p137
    %s139 = ssub.s32 %s11, %s18
    %p140 = scmp.eq.s32.totalorder %s139, 0
    %s142 = sadd.s32 %s141, 1
    %s143 = scalar_select %p140, %s141, %s142
    %p146 = pneg %p140
    %p147 = scmp.eq.s32.totalorder %s11, 1
    %p148 = por %p146, %p147
    %p149 = scmp.ne.s32.totalorder %s141, %s144
    %p150 = scmp.eq.s32.totalorder %s11, 0
    %p151 = por %p149, %p150
    %p152 = scmp.ne.s32.totalorder %s141, %s144
    %p153 = scmp.eq.s32.totalorder %s16, 1
    %p154 = por %p152, %p153
    %p155 = scmp.ne.s32.totalorder %s144, %s145
    %p156 = scmp.eq.s32.totalorder %s16, 0
    %p157 = por %p155, %p156
    %p158 = scmp.ne.s32.totalorder %s144, %s145
    %p159 = scmp.eq.s32.totalorder %s17, 1
    %p160 = por %p158, %p159
    %p162 = scmp.ne.s32.totalorder %s145, %s161
    %p163 = scmp.eq.s32.totalorder %s17, 0
    %p164 = por %p162, %p163
    %p165 = scmp.le.s32.totalorder 1, %s11
    %p166 = scmp.lt.s32.totalorder %s11, 3
    %p167 = pnand %p165, %p166
    %p168 = pneg %p167
    // Predicated region
    $region9: #{vt_decoder_layer.11} parent=5 // pred_check
      _
    $region10: #{vt_decoder_layer.11} parent=5 // pred_check_branch
      %170 = sbr.rel (%p167) target = $region12
    $region11: #{vt_decoder_layer.11} parent=5 // pred_region
      %s171 = ssub.s32 %s11, 1
      // Predicated region
      $region13: #{vt_decoder_layer.11} parent=11 // pred_check
        %p172 = pneg %p110
      $region14: #{vt_decoder_layer.11} parent=11 // pred_check_branch
        %174 = sbr.rel (%p172) target = $region16
      $region15: #{vt_decoder_layer.11} parent=11 // pred_region
        _
      $region16: #{vt_decoder_layer.11} parent=11 // pred_fallthru
        _
      // Predicated region
      $region17: #{vt_decoder_layer.11} parent=11 // pred_check
        %p175 = pneg %p131
      $region18: #{vt_decoder_layer.11} parent=11 // pred_check_branch
        %177 = sbr.rel (%p175) target = $region20
      $region19: #{vt_decoder_layer.11} parent=11 // pred_region
        _
      $region20: #{vt_decoder_layer.11} parent=11 // pred_fallthru
        _
    $region12: #{vt_decoder_layer.11} parent=5 // pred_fallthru
      _
    %p178 = scmp.lt.s32.totalorder %s11, 2
    // Predicated region
    $region21: #{vt_decoder_layer.11} parent=5 // pred_check
      %p179 = pneg %p178
    $region22: #{vt_decoder_layer.11} parent=5 // pred_check_branch
      %181 = sbr.rel (%p179) target = $region24
    $region23: #{vt_decoder_layer.11} parent=5 // pred_region
      // Predicated region
      $region25: #{vt_decoder_layer.11} parent=23 // pred_check
        %p182 = pneg %p31
      $region26: #{vt_decoder_layer.11} parent=23 // pred_check_branch
        %184 = sbr.rel (%p182) target = $region28
      $region27: #{vt_decoder_layer.11} parent=23 // pred_region
        %p185 = scmp.lt.s32.totalorder %s11, 1
        %s186 = scalar_select %p185, %s11, 1
        %s187 = smul.addr %s186, 8
        %s188 = scalar_lea.vmem %s0, %s187
      $region28: #{vt_decoder_layer.11} parent=23 // pred_fallthru
        _
      // Predicated region
      $region29: #{vt_decoder_layer.11} parent=23 // pred_check
        %p189 = pneg %p57
      $region30: #{vt_decoder_layer.11} parent=23 // pred_check_branch
        %191 = sbr.rel (%p189) target = $region32
      $region31: #{vt_decoder_layer.11} parent=23 // pred_region
        %p192 = scmp.lt.s32.totalorder %s11, 1
        %s193 = scalar_select %p192, %s11, 1
        %s194 = smul.addr %s193, 8
        %s195 = scalar_lea.vmem %s1, %s194
      $region32: #{vt_decoder_layer.11} parent=23 // pred_fallthru
        _
      // Predicated region
      $region33: #{vt_decoder_layer.11} parent=23 // pred_check
        %p196 = pneg %p83
      $region34: #{vt_decoder_layer.11} parent=23 // pred_check_branch
        %198 = sbr.rel (%p196) target = $region36
      $region35: #{vt_decoder_layer.11} parent=23 // pred_region
        %p199 = scmp.lt.s32.totalorder %s11, 1
        %s200 = scalar_select %p199, %s11, 1
        %s201 = smul.addr %s200, 8
        %s202 = scalar_lea.vmem %s2, %s201
      $region36: #{vt_decoder_layer.11} parent=23 // pred_fallthru
        _
    $region24: #{vt_decoder_layer.11} parent=5 // pred_fallthru
      _
    %p203 = scmp.le.s32.totalorder 1, %s11
    %p204 = scmp.lt.s32.totalorder %s11, 3
    %p205 = pnand %p203, %p204
    %p206 = pneg %p205
    // Predicated region
    $region37: #{vt_decoder_layer.11} parent=5 // pred_check
      _
    $region38: #{vt_decoder_layer.11} parent=5 // pred_check_branch
      %208 = sbr.rel (%p205) target = $region40
    $region39: #{vt_decoder_layer.11} parent=5 // pred_region
      %s209 = ssub.s32 %s11, 1
      %p210 = scmp.lt.s32.totalorder %s16, 1
      %s211 = scalar_select %p210, %s16, 1
      %s212 = smul.addr %s211, 8
      %s213 = scalar_lea.vmem %s0, %s212
      %p214 = pneg %p37
      %p215 = pneg %p34
      %p216 = scmp.lt.s32.totalorder %s16, 1
      %s217 = scalar_select %p216, %s16, 1
      %s218 = smul.addr %s217, 8
      %s219 = scalar_lea.vmem %s1, %s218
      %p220 = pneg %p63
      %p221 = pneg %p60
      %p222 = scmp.lt.s32.totalorder %s16, 1
      %s223 = scalar_select %p222, %s16, 1
      %s224 = smul.addr %s223, 8
      %s225 = scalar_lea.vmem %s2, %s224
      %p226 = pneg %p89
      %p227 = pneg %p86
      %p228 = pneg %p110
      %p229 = pneg %p107
      %p230 = pneg %p131
      %p231 = pneg %p128
      %p232 = pneg %p157
      %p233 = pneg %p154
      %p234 = scmp.lt.s32.totalorder %s16, 1
      %s235 = scalar_select %p234, %s16, 1
      %s236 = smul.addr %s235, 8
      %s237 = scalar_lea.vmem %s5, %s236
      %p238 = scmp.lt.s32.totalorder %s16, 1
      %s239 = scalar_select %p238, %s16, 1
      %s240 = smul.addr %s239, 8
      %s241 = scalar_lea.vmem %s0, %s240
      %p242 = scmp.lt.s32.totalorder %s16, 1
      %s243 = scalar_select %p242, %s16, 1
      %s244 = smul.addr %s243, 8
      %s245 = scalar_lea.vmem %s1, %s244
      %p246 = scmp.lt.s32.totalorder %s16, 1
      %s247 = scalar_select %p246, %s16, 1
      %s248 = smul.addr %s247, 8
      %s249 = scalar_lea.vmem %s2, %s248
      %p250 = scmp.lt.s32.totalorder %s16, 1
      %s251 = scalar_select %p250, %s16, 1
      %s252 = smul.addr %s251, 8
      %s253 = scalar_lea.vmem %s5, %s252
      %v254 = vld [vmem:[%s241] sm:$0xff]
      %v255 = vld [vmem:[%s245] sm:$0xff]
      %v256 = vld [vmem:[%s249] sm:$0xff]
      %258 = vrot.lane.b32.xlu0 %v255, 32
      %v259 = vpop.permute.xlu0 %258
      %262 = vrot.lane.b32.xlu0 %v256, 64
      %v263 = vpop.permute.xlu0 %262
      %vm265 = vcmask 261120
      %v266 = vsel %vm265, %v254, %v259
      %vm267 = vcmask 523264
      %v268 = vsel %vm267, %v266, %v263
      %v269 = vld [vmem:[%s3] sm:$0xff]
      %v270 = vld [vmem:[%s3 + $0x8] sm:$0xff]
      %v271 = vld [vmem:[%s3 + $0x10] sm:$0xff]
      %v272 = vld [vmem:[%s3 + $0x18] sm:$0xff]
      %v273 = vld [vmem:[%s3 + $0x20] sm:$0xff]
      %v274 = vld [vmem:[%s3 + $0x28] sm:$0xff]
      %v275 = vld [vmem:[%s3 + $0x30] sm:$0xff]
      %v276 = vld [vmem:[%s3 + $0x38] sm:$0xff]
      %v277 = vld [vmem:[%s3 + $0x40] sm:$0xff]
      %v278 = vld [vmem:[%s3 + $0x48] sm:$0xff]
      %v279 = vld [vmem:[%s3 + $0x50] sm:$0xff]
      %v280 = vld [vmem:[%s3 + $0x58] sm:$0xff]
      %v281 = vld [vmem:[%s4] sm:$0x1]
      %v283 = vlaneseq
      %v284 = vshrl.u32 %v283, 7
      %v285 = vsub.s32 0, %v284
      %v286 = vrot.slane %v281, %v285
      %vm288 = vcmask 785408
      %v290 = vsel %vm288, %v268, 0
      %292 = vmatprep.subr.mxu0 0.0
      %293 = vmatpush1.msra.mxu0 0.0
      %294 = vmatprep.subr.mxu0 0.0
      %295 = vmatpush1.msra.mxu0 0.0
      %296 = vmatprep.subr.mxu0 0.0
      %297 = vmatpush1.msra.mxu0 0.0
      %298 = vmatprep.subr.mxu0 0.0
      %299 = vmatpush1.msra.mxu0 0.0
      %300 = vmatprep.subr.mxu0 0.0
      %301 = vmatpush1.msra.mxu0 %v280
      %302 = vmatprep.subr.mxu0 0.0
      %303 = vmatpush1.msra.mxu0 %v279
      %304 = vmatprep.subr.mxu0 0.0
      %305 = vmatpush1.msra.mxu0 %v278
      %306 = vmatprep.subr.mxu0 0.0
      %307 = vmatpush1.msra.mxu0 %v277
      %308 = vmatprep.subr.mxu0 0.0
      %309 = vmatpush1.msra.mxu0 %v276
      %310 = vmatprep.subr.mxu0 0.0
      %311 = vmatpush1.msra.mxu0 %v275
      %312 = vmatprep.subr.mxu0 0.0
      %313 = vmatpush1.msra.mxu0 %v274
      %314 = vmatprep.subr.mxu0 0.0
      %315 = vmatpush1.msra.mxu0 %v273
      %316 = vmatprep.subr.mxu0 0.0
      %317 = vmatpush1.msra.mxu0 %v272
      %318 = vmatprep.subr.mxu0 0.0
      %319 = vmatpush1.msra.mxu0 %v271
      %320 = vmatprep.subr.mxu0 0.0
      %321 = vmatpush1.msra.mxu0 %v270
      %322 = vmatprep.subr.mxu0 0.0
      %323 = vmatpush1.msra.mxu0 %v269
      %324 = vmatprep.subr.mxu0 0.0
      %325 = vmatpush2.msra.mxu0 0.0
      %326 = vmatprep.subr.mxu0 0.0
      %327 = vmatpush2.msra.mxu0 0.0
      %328 = vmatprep.subr.mxu0 0.0
      %329 = vmatpush2.msra.mxu0 0.0
      %330 = vmatprep.subr.mxu0 0.0
      %331 = vmatpush2.msra.mxu0 0.0
      %332 = vmatprep.subr.mxu0 0.0
      %333 = vmatpush2.msra.mxu0 0.0
      %334 = vmatprep.subr.mxu0 0.0
      %335 = vmatpush2.msra.mxu0 0.0
      %336 = vmatprep.subr.mxu0 0.0
      %337 = vmatpush2.msra.mxu0 0.0
      %338 = vmatprep.subr.mxu0 0.0
      %339 = vmatpush2.msra.mxu0 0.0
      %340 = vmatprep.subr.mxu0 0.0
      %341 = vmatpush2.msra.mxu0 0.0
      %342 = vmatprep.subr.mxu0 0.0
      %343 = vmatpush2.msra.mxu0 0.0
      %344 = vmatprep.subr.mxu0 0.0
      %345 = vmatpush2.msra.mxu0 0.0
      %346 = vmatprep.subr.mxu0 0.0
      %347 = vmatpush2.msra.mxu0 0.0
      %348 = vmatprep.subr.mxu0 0.0
      %349 = vmatpush2.msra.mxu0 0.0
      %350 = vmatprep.subr.mxu0 0.0
      %351 = vmatpush2.msra.mxu0 0.0
      %352 = vmatprep.subr.mxu0 0.0
      %353 = vmatpush2.msra.mxu0 0.0
      %354 = vmatprep.subr.mxu0 0.0
      %355 = vmatpush2.msra.mxu0 0.0
      %356 = vmatprep.mubr.f32.mxu0 0.0
      %357 = vmatmul.mubr.f32.gmra.mxu0 %v290
      %v358 = vpop.f32.mrf.mxu0
      %v359 = vadd.f32 %v286, %v358
      %v360 = vpop.f32.mrf.mxu0
      %361 = vdwg.mxu0
      %362 = vst.msk [vmem:[%s253] sm:$0xff] %vm267, %v359
      %p363 = scmp.lt.s32.totalorder %s16, 1
      %s364 = scalar_select %p363, %s16, 1
      %s365 = smul.addr %s364, 8
      %s366 = scalar_lea.vmem %s5, %s365
      // Predicated region
      $region41: #{vt_decoder_layer.11} parent=39 // pred_check
        %p367 = pneg %p154
      $region42: #{vt_decoder_layer.11} parent=39 // pred_check_branch
        %369 = sbr.rel (%p367) target = $region44
      $region43: #{vt_decoder_layer.11} parent=39 // pred_region
        _
      $region44: #{vt_decoder_layer.11} parent=39 // pred_fallthru
        _
    $region40: #{vt_decoder_layer.11} parent=5 // pred_fallthru
      _
    %p370 = scmp.le.s32.totalorder 2, %s11
    // Predicated region
    $region45: #{vt_decoder_layer.11} parent=5 // pred_check
      %p371 = pneg %p370
    $region46: #{vt_decoder_layer.11} parent=5 // pred_check_branch
      %373 = sbr.rel (%p371) target = $region48
    $region47: #{vt_decoder_layer.11} parent=5 // pred_region
      %s374 = ssub.s32 %s11, 2
      // Predicated region
      $region49: #{vt_decoder_layer.11} parent=47 // pred_check
        %p375 = pneg %p160
      $region50: #{vt_decoder_layer.11} parent=47 // pred_check_branch
        %377 = sbr.rel (%p375) target = $region52
      $region51: #{vt_decoder_layer.11} parent=47 // pred_region
        %p378 = scmp.lt.s32.totalorder %s17, 1
        %s379 = scalar_select %p378, %s17, 1
        %s380 = smul.addr %s379, 8
        %s381 = scalar_lea.vmem %s5, %s380
      $region52: #{vt_decoder_layer.11} parent=47 // pred_fallthru
        _
    $region48: #{vt_decoder_layer.11} parent=5 // pred_fallthru
      _
  $region6: #{vt_decoder_layer.11} parent=0 // loop_footer
    %s15 = sadd.s32 1, %s11
  $region7: #{vt_decoder_layer.11} parent=0 // loop_footer_branch
    %10 = sbr.rel target = $region3
  $region8: #{vt_decoder_layer.11} parent=0 // loop_exit
    _

// kernel: vt_decoder_layer.12
$region0: #{vt_decoder_layer.12}
  #allocation0 [shape = 'u32[]', space=smem, size = 0x4, offset = 0x4, fixed_abs, tag = 'smem constant byte address 0x4 - core index']
  #allocation1 [shape = 'u32[144,128]{1,0:T(1,128)}', space=vmem, size = 0x12000, scoped, tag = 'internal scratch']
  %s0 = inlined_call_operand.vmem [shape: f32[32,32], index: 0, kind: input, shape index: {}]
  %s1 = inlined_call_operand.vmem [shape: f32[32,32], index: 1, kind: input, shape index: {}]
  %s2 = inlined_call_operand.vmem [shape: f32[64,96], index: 2, kind: input, shape index: {}]
  %s3 = inlined_call_operand.vmem [shape: f32[1,96], index: 3, kind: input, shape index: {}]
  %s4 = inlined_call_operand.vmem [shape: f32[32,96], index: 4, kind: output, shape index: {}]
  %s5 = sld [smem:[#allocation0]]
  $region49: #{vt_decoder_layer.12} parent=0
    _
  %s7 = ssub.s32 1, %s5
  %s8 = scalar_select 0, %s7, %s5
  loop: start=0, step=1, limit=6
  $region2: #{vt_decoder_layer.12} parent=0 // loop_pre_header
    _
  $region3: #{vt_decoder_layer.12} parent=0 // loop_header
    %s10 = sphi 0, %s14
    %p11 = scmp.ge.s32.totalorder %s10, 6
    %s20 = sphi 0, %s22
    %s23 = sphi 0, %s20
    %s24 = sphi 0, %s23
    %s40 = sphi 0, %s24
    %s46 = sphi 0, %s48
    %s49 = sphi 0, %s46
    %s50 = sphi 0, %s49
    %s66 = sphi 0, %s50
    %s70 = sphi 0, %s70
    %s72 = sphi 0, %s70
    %s73 = sphi 0, %s72
    %s87 = sphi 0, %s73
    %s91 = sphi 0, %s91
    %s93 = sphi 0, %s91
    %s94 = sphi 0, %s93
    %s108 = sphi 0, %s94
    %s114 = sphi 0, %s116
    %s117 = sphi 0, %s114
    %s118 = sphi 0, %s117
    %s134 = sphi 0, %s118
  $region4: #{vt_decoder_layer.12} parent=0 // loop_header_branch
    %13 = sbr.rel (%p11) target = $region8
  $region5: #{vt_decoder_layer.12} parent=0 // loop_body
    %s15 = ssub.s32 %s10, 1
    %s16 = ssub.s32 %s10, 2
    %s17 = sadd.s32 %s10, 1
    %s18 = ssub.s32 %s10, %s17
    %p19 = scmp.eq.s32.totalorder %s18, 0
    %s21 = sadd.s32 %s20, 1
    %s22 = scalar_select %p19, %s20, %s21
    %p25 = pneg %p19
    %p26 = scmp.eq.s32.totalorder %s10, 3
    %p27 = por %p25, %p26
    %p28 = scmp.ne.s32.totalorder %s20, %s23
    %p29 = scmp.eq.s32.totalorder %s10, 0
    %p30 = por %p28, %p29
    %p31 = scmp.ne.s32.totalorder %s20, %s23
    %p32 = scmp.eq.s32.totalorder %s15, 3
    %p33 = por %p31, %p32
    %p34 = scmp.ne.s32.totalorder %s23, %s24
    %p35 = scmp.eq.s32.totalorder %s15, 0
    %p36 = por %p34, %p35
    %p37 = scmp.ne.s32.totalorder %s23, %s24
    %p38 = scmp.eq.s32.totalorder %s16, 3
    %p39 = por %p37, %p38
    %p41 = scmp.ne.s32.totalorder %s24, %s40
    %p42 = scmp.eq.s32.totalorder %s16, 0
    %p43 = por %p41, %p42
    %s44 = ssub.s32 %s10, %s17
    %p45 = scmp.eq.s32.totalorder %s44, 0
    %s47 = sadd.s32 %s46, 1
    %s48 = scalar_select %p45, %s46, %s47
    %p51 = pneg %p45
    %p52 = scmp.eq.s32.totalorder %s10, 3
    %p53 = por %p51, %p52
    %p54 = scmp.ne.s32.totalorder %s46, %s49
    %p55 = scmp.eq.s32.totalorder %s10, 0
    %p56 = por %p54, %p55
    %p57 = scmp.ne.s32.totalorder %s46, %s49
    %p58 = scmp.eq.s32.totalorder %s15, 3
    %p59 = por %p57, %p58
    %p60 = scmp.ne.s32.totalorder %s49, %s50
    %p61 = scmp.eq.s32.totalorder %s15, 0
    %p62 = por %p60, %p61
    %p63 = scmp.ne.s32.totalorder %s49, %s50
    %p64 = scmp.eq.s32.totalorder %s16, 3
    %p65 = por %p63, %p64
    %p67 = scmp.ne.s32.totalorder %s50, %s66
    %p68 = scmp.eq.s32.totalorder %s16, 0
    %p69 = por %p67, %p68
    %s71 = sadd.s32 %s70, 1
    %p74 = scmp.eq.s32.totalorder %s10, 3
    %p75 = scmp.ne.s32.totalorder %s70, %s72
    %p76 = scmp.eq.s32.totalorder %s10, 0
    %p77 = por %p75, %p76
    %p78 = scmp.ne.s32.totalorder %s70, %s72
    %p79 = scmp.eq.s32.totalorder %s15, 3
    %p80 = por %p78, %p79
    %p81 = scmp.ne.s32.totalorder %s72, %s73
    %p82 = scmp.eq.s32.totalorder %s15, 0
    %p83 = por %p81, %p82
    %p84 = scmp.ne.s32.totalorder %s72, %s73
    %p85 = scmp.eq.s32.totalorder %s16, 3
    %p86 = por %p84, %p85
    %p88 = scmp.ne.s32.totalorder %s73, %s87
    %p89 = scmp.eq.s32.totalorder %s16, 0
    %p90 = por %p88, %p89
    %s92 = sadd.s32 %s91, 1
    %p95 = scmp.eq.s32.totalorder %s10, 3
    %p96 = scmp.ne.s32.totalorder %s91, %s93
    %p97 = scmp.eq.s32.totalorder %s10, 0
    %p98 = por %p96, %p97
    %p99 = scmp.ne.s32.totalorder %s91, %s93
    %p100 = scmp.eq.s32.totalorder %s15, 3
    %p101 = por %p99, %p100
    %p102 = scmp.ne.s32.totalorder %s93, %s94
    %p103 = scmp.eq.s32.totalorder %s15, 0
    %p104 = por %p102, %p103
    %p105 = scmp.ne.s32.totalorder %s93, %s94
    %p106 = scmp.eq.s32.totalorder %s16, 3
    %p107 = por %p105, %p106
    %p109 = scmp.ne.s32.totalorder %s94, %s108
    %p110 = scmp.eq.s32.totalorder %s16, 0
    %p111 = por %p109, %p110
    %s112 = ssub.s32 %s10, %s17
    %p113 = scmp.eq.s32.totalorder %s112, 0
    %s115 = sadd.s32 %s114, 1
    %s116 = scalar_select %p113, %s114, %s115
    %p119 = pneg %p113
    %p120 = scmp.eq.s32.totalorder %s10, 3
    %p121 = por %p119, %p120
    %p122 = scmp.ne.s32.totalorder %s114, %s117
    %p123 = scmp.eq.s32.totalorder %s10, 0
    %p124 = por %p122, %p123
    %p125 = scmp.ne.s32.totalorder %s114, %s117
    %p126 = scmp.eq.s32.totalorder %s15, 3
    %p127 = por %p125, %p126
    %p128 = scmp.ne.s32.totalorder %s117, %s118
    %p129 = scmp.eq.s32.totalorder %s15, 0
    %p130 = por %p128, %p129
    %p131 = scmp.ne.s32.totalorder %s117, %s118
    %p132 = scmp.eq.s32.totalorder %s16, 3
    %p133 = por %p131, %p132
    %p135 = scmp.ne.s32.totalorder %s118, %s134
    %p136 = scmp.eq.s32.totalorder %s16, 0
    %p137 = por %p135, %p136
    %p138 = scmp.le.s32.totalorder 1, %s10
    %p139 = scmp.lt.s32.totalorder %s10, 5
    %p140 = pnand %p138, %p139
    %p141 = pneg %p140
    // Predicated region
    $region9: #{vt_decoder_layer.12} parent=5 // pred_check
      _
    $region10: #{vt_decoder_layer.12} parent=5 // pred_check_branch
      %143 = sbr.rel (%p140) target = $region12
    $region11: #{vt_decoder_layer.12} parent=5 // pred_region
      %s144 = ssub.s32 %s10, 1
      // Predicated region
      $region13: #{vt_decoder_layer.12} parent=11 // pred_check
        %p145 = pneg %p83
      $region14: #{vt_decoder_layer.12} parent=11 // pred_check_branch
        %147 = sbr.rel (%p145) target = $region16
      $region15: #{vt_decoder_layer.12} parent=11 // pred_region
        _
      $region16: #{vt_decoder_layer.12} parent=11 // pred_fallthru
        _
      // Predicated region
      $region17: #{vt_decoder_layer.12} parent=11 // pred_check
        %p148 = pneg %p104
      $region18: #{vt_decoder_layer.12} parent=11 // pred_check_branch
        %150 = sbr.rel (%p148) target = $region20
      $region19: #{vt_decoder_layer.12} parent=11 // pred_region
        _
      $region20: #{vt_decoder_layer.12} parent=11 // pred_fallthru
        _
    $region12: #{vt_decoder_layer.12} parent=5 // pred_fallthru
      _
    %p151 = scmp.lt.s32.totalorder %s10, 4
    // Predicated region
    $region21: #{vt_decoder_layer.12} parent=5 // pred_check
      %p152 = pneg %p151
    $region22: #{vt_decoder_layer.12} parent=5 // pred_check_branch
      %154 = sbr.rel (%p152) target = $region24
    $region23: #{vt_decoder_layer.12} parent=5 // pred_region
      // Predicated region
      $region25: #{vt_decoder_layer.12} parent=23 // pred_check
        %p155 = pneg %p30
      $region26: #{vt_decoder_layer.12} parent=23 // pred_check_branch
        %157 = sbr.rel (%p155) target = $region28
      $region27: #{vt_decoder_layer.12} parent=23 // pred_region
        %p158 = scmp.lt.s32.totalorder %s10, 3
        %s159 = scalar_select %p158, %s10, 3
        %s160 = smul.addr %s159, 8
        %s161 = scalar_lea.vmem %s0, %s160
      $region28: #{vt_decoder_layer.12} parent=23 // pred_fallthru
        _
      // Predicated region
      $region29: #{vt_decoder_layer.12} parent=23 // pred_check
        %p162 = pneg %p56
      $region30: #{vt_decoder_layer.12} parent=23 // pred_check_branch
        %164 = sbr.rel (%p162) target = $region32
      $region31: #{vt_decoder_layer.12} parent=23 // pred_region
        %p165 = scmp.lt.s32.totalorder %s10, 3
        %s166 = scalar_select %p165, %s10, 3
        %s167 = smul.addr %s166, 8
        %s168 = scalar_lea.vmem %s1, %s167
      $region32: #{vt_decoder_layer.12} parent=23 // pred_fallthru
        _
    $region24: #{vt_decoder_layer.12} parent=5 // pred_fallthru
      _
    %p169 = scmp.le.s32.totalorder 1, %s10
    %p170 = scmp.lt.s32.totalorder %s10, 5
    %p171 = pnand %p169, %p170
    %p172 = pneg %p171
    // Predicated region
    $region33: #{vt_decoder_layer.12} parent=5 // pred_check
      _
    $region34: #{vt_decoder_layer.12} parent=5 // pred_check_branch
      %174 = sbr.rel (%p171) target = $region36
    $region35: #{vt_decoder_layer.12} parent=5 // pred_region
      %s175 = ssub.s32 %s10, 1
      %p176 = scmp.lt.s32.totalorder %s15, 3
      %s177 = scalar_select %p176, %s15, 3
      %s178 = smul.addr %s177, 8
      %s179 = scalar_lea.vmem %s0, %s178
      %p180 = pneg %p36
      %p181 = pneg %p33
      %p182 = scmp.lt.s32.totalorder %s15, 3
      %s183 = scalar_select %p182, %s15, 3
      %s184 = smul.addr %s183, 8
      %s185 = scalar_lea.vmem %s1, %s184
      %p186 = pneg %p62
      %p187 = pneg %p59
      %p188 = pneg %p83
      %p189 = pneg %p80
      %p190 = pneg %p104
      %p191 = pneg %p101
      %p192 = pneg %p130
      %p193 = pneg %p127
      %p194 = scmp.lt.s32.totalorder %s15, 3
      %s195 = scalar_select %p194, %s15, 3
      %s196 = smul.addr %s195, 8
      %s197 = scalar_lea.vmem %s4, %s196
      %p198 = scmp.lt.s32.totalorder %s15, 3
      %s199 = scalar_select %p198, %s15, 3
      %s200 = smul.addr %s199, 8
      %s201 = scalar_lea.vmem %s0, %s200
      %p202 = scmp.lt.s32.totalorder %s15, 3
      %s203 = scalar_select %p202, %s15, 3
      %s204 = smul.addr %s203, 8
      %s205 = scalar_lea.vmem %s1, %s204
      %p206 = scmp.lt.s32.totalorder %s15, 3
      %s207 = scalar_select %p206, %s15, 3
      %s208 = smul.addr %s207, 8
      %s209 = scalar_lea.vmem %s4, %s208
      %v210 = vld [vmem:[%s201] sm:$0xff]
      %v211 = vld [vmem:[%s205] sm:$0xff]
      %213 = vrot.lane.b32.xlu0 %v211, 32
      %v214 = vpop.permute.xlu0 %213
      %vm216 = vcmask 261120
      %v217 = vsel %vm216, %v210, %v214
      %v218 = vld [vmem:[%s2] sm:$0xff]
      %v219 = vld [vmem:[%s2 + $0x8] sm:$0xff]
      %v220 = vld [vmem:[%s2 + $0x10] sm:$0xff]
      %v221 = vld [vmem:[%s2 + $0x18] sm:$0xff]
      %v222 = vld [vmem:[%s2 + $0x20] sm:$0xff]
      %v223 = vld [vmem:[%s2 + $0x28] sm:$0xff]
      %v224 = vld [vmem:[%s2 + $0x30] sm:$0xff]
      %v225 = vld [vmem:[%s2 + $0x38] sm:$0xff]
      %v226 = vld [vmem:[%s3] sm:$0x1]
      %v228 = vlaneseq
      %v229 = vshrl.u32 %v228, 7
      %v230 = vsub.s32 0, %v229
      %v231 = vrot.slane %v226, %v230
      %vm233 = vcmask 523264
      %v235 = vsel %vm233, %v217, 0
      %237 = vmatprep.subr.mxu0 0.0
      %238 = vmatpush1.msra.mxu0 0.0
      %239 = vmatprep.subr.mxu0 0.0
      %240 = vmatpush1.msra.mxu0 0.0
      %241 = vmatprep.subr.mxu0 0.0
      %242 = vmatpush1.msra.mxu0 0.0
      %243 = vmatprep.subr.mxu0 0.0
      %244 = vmatpush1.msra.mxu0 0.0
      %245 = vmatprep.subr.mxu0 0.0
      %246 = vmatpush1.msra.mxu0 0.0
      %247 = vmatprep.subr.mxu0 0.0
      %248 = vmatpush1.msra.mxu0 0.0
      %249 = vmatprep.subr.mxu0 0.0
      %250 = vmatpush1.msra.mxu0 0.0
      %251 = vmatprep.subr.mxu0 0.0
      %252 = vmatpush1.msra.mxu0 0.0
      %253 = vmatprep.subr.mxu0 0.0
      %254 = vmatpush1.msra.mxu0 %v225
      %255 = vmatprep.subr.mxu0 0.0
      %256 = vmatpush1.msra.mxu0 %v224
      %257 = vmatprep.subr.mxu0 0.0
      %258 = vmatpush1.msra.mxu0 %v223
      %259 = vmatprep.subr.mxu0 0.0
      %260 = vmatpush1.msra.mxu0 %v222
      %261 = vmatprep.subr.mxu0 0.0
      %262 = vmatpush1.msra.mxu0 %v221
      %263 = vmatprep.subr.mxu0 0.0
      %264 = vmatpush1.msra.mxu0 %v220
      %265 = vmatprep.subr.mxu0 0.0
      %266 = vmatpush1.msra.mxu0 %v219
      %267 = vmatprep.subr.mxu0 0.0
      %268 = vmatpush1.msra.mxu0 %v218
      %269 = vmatprep.subr.mxu0 0.0
      %270 = vmatpush2.msra.mxu0 0.0
      %271 = vmatprep.subr.mxu0 0.0
      %272 = vmatpush2.msra.mxu0 0.0
      %273 = vmatprep.subr.mxu0 0.0
      %274 = vmatpush2.msra.mxu0 0.0
      %275 = vmatprep.subr.mxu0 0.0
      %276 = vmatpush2.msra.mxu0 0.0
      %277 = vmatprep.subr.mxu0 0.0
      %278 = vmatpush2.msra.mxu0 0.0
      %279 = vmatprep.subr.mxu0 0.0
      %280 = vmatpush2.msra.mxu0 0.0
      %281 = vmatprep.subr.mxu0 0.0
      %282 = vmatpush2.msra.mxu0 0.0
      %283 = vmatprep.subr.mxu0 0.0
      %284 = vmatpush2.msra.mxu0 0.0
      %285 = vmatprep.subr.mxu0 0.0
      %286 = vmatpush2.msra.mxu0 0.0
      %287 = vmatprep.subr.mxu0 0.0
      %288 = vmatpush2.msra.mxu0 0.0
      %289 = vmatprep.subr.mxu0 0.0
      %290 = vmatpush2.msra.mxu0 0.0
      %291 = vmatprep.subr.mxu0 0.0
      %292 = vmatpush2.msra.mxu0 0.0
      %293 = vmatprep.subr.mxu0 0.0
      %294 = vmatpush2.msra.mxu0 0.0
      %295 = vmatprep.subr.mxu0 0.0
      %296 = vmatpush2.msra.mxu0 0.0
      %297 = vmatprep.subr.mxu0 0.0
      %298 = vmatpush2.msra.mxu0 0.0
      %299 = vmatprep.subr.mxu0 0.0
      %300 = vmatpush2.msra.mxu0 0.0
      %301 = vmatprep.mubr.f32.mxu0 0.0
      %302 = vmatmul.mubr.f32.gmra.mxu0 %v235
      %v303 = vpop.f32.mrf.mxu0
      %v304 = vadd.f32 %v231, %v303
      %v305 = vpop.f32.mrf.mxu0
      %306 = vdwg.mxu0
      %vm307 = vcmask 785408
      %308 = vst.msk [vmem:[%s209] sm:$0xff] %vm307, %v304
      %p309 = scmp.lt.s32.totalorder %s15, 3
      %s310 = scalar_select %p309, %s15, 3
      %s311 = smul.addr %s310, 8
      %s312 = scalar_lea.vmem %s4, %s311
      // Predicated region
      $region37: #{vt_decoder_layer.12} parent=35 // pred_check
        %p313 = pneg %p127
      $region38: #{vt_decoder_layer.12} parent=35 // pred_check_branch
        %315 = sbr.rel (%p313) target = $region40
      $region39: #{vt_decoder_layer.12} parent=35 // pred_region
        _
      $region40: #{vt_decoder_layer.12} parent=35 // pred_fallthru
        _
    $region36: #{vt_decoder_layer.12} parent=5 // pred_fallthru
      _
    %p316 = scmp.le.s32.totalorder 2, %s10
    // Predicated region
    $region41: #{vt_decoder_layer.12} parent=5 // pred_check
      %p317 = pneg %p316
    $region42: #{vt_decoder_layer.12} parent=5 // pred_check_branch
      %319 = sbr.rel (%p317) target = $region44
    $region43: #{vt_decoder_layer.12} parent=5 // pred_region
      %s320 = ssub.s32 %s10, 2
      // Predicated region
      $region45: #{vt_decoder_layer.12} parent=43 // pred_check
        %p321 = pneg %p133
      $region46: #{vt_decoder_layer.12} parent=43 // pred_check_branch
        %323 = sbr.rel (%p321) target = $region48
      $region47: #{vt_decoder_layer.12} parent=43 // pred_region
        %p324 = scmp.lt.s32.totalorder %s16, 3
        %s325 = scalar_select %p324, %s16, 3
        %s326 = smul.addr %s325, 8
        %s327 = scalar_lea.vmem %s4, %s326
      $region48: #{vt_decoder_layer.12} parent=43 // pred_fallthru
        _
    $region44: #{vt_decoder_layer.12} parent=5 // pred_fallthru
      _
  $region6: #{vt_decoder_layer.12} parent=0 // loop_footer
    %s14 = sadd.s32 1, %s10
  $region7: #{vt_decoder_layer.12} parent=0 // loop_footer_branch
    %9 = sbr.rel target = $region3
  $region8: #{vt_decoder_layer.12} parent=0 // loop_exit
    _

// kernel: vt_decoder_layer.15
$region0: #{vt_decoder_layer.15}
  #allocation0 [shape = 'u32[]', space=smem, size = 0x4, offset = 0x4, fixed_abs, tag = 'smem constant byte address 0x4 - core index']
  #allocation1 [shape = 'u32[144,128]{1,0:T(1,128)}', space=vmem, size = 0x12000, scoped, tag = 'internal scratch']
  %s0 = inlined_call_operand.vmem [shape: f32[16,32], index: 0, kind: input, shape index: {}]
  %s1 = inlined_call_operand.vmem [shape: f32[32,64], index: 1, kind: input, shape index: {}]
  %s2 = inlined_call_operand.vmem [shape: f32[1,64], index: 2, kind: input, shape index: {}]
  %s3 = inlined_call_operand.vmem [shape: f32[64,32], index: 3, kind: input, shape index: {}]
  %s4 = inlined_call_operand.vmem [shape: f32[1,32], index: 4, kind: input, shape index: {}]
  %s5 = inlined_call_operand.vmem [shape: f32[1,32], index: 5, kind: input, shape index: {}]
  %s6 = inlined_call_operand.vmem [shape: f32[1,32], index: 6, kind: input, shape index: {}]
  %s7 = inlined_call_operand.vmem [shape: f32[16,32], index: 7, kind: output, shape index: {}]
  %s8 = sld [smem:[#allocation0]]
  $region61: #{vt_decoder_layer.15} parent=0
    _
  %s10 = ssub.s32 1, %s8
  %s11 = scalar_select 0, %s10, %s8
  loop: start=0, step=1, limit=4
  $region2: #{vt_decoder_layer.15} parent=0 // loop_pre_header
    _
  $region3: #{vt_decoder_layer.15} parent=0 // loop_header
    %s13 = sphi 0, %s17
    %p14 = scmp.ge.s32.totalorder %s13, 4
    %s23 = sphi 0, %s25
    %s26 = sphi 0, %s23
    %s27 = sphi 0, %s26
    %s43 = sphi 0, %s27
    %s47 = sphi 0, %s47
    %s49 = sphi 0, %s47
    %s50 = sphi 0, %s49
    %s64 = sphi 0, %s50
    %s68 = sphi 0, %s68
    %s70 = sphi 0, %s68
    %s71 = sphi 0, %s70
    %s85 = sphi 0, %s71
    %s89 = sphi 0, %s89
    %s91 = sphi 0, %s89
    %s92 = sphi 0, %s91
    %s106 = sphi 0, %s92
    %s110 = sphi 0, %s110
    %s112 = sphi 0, %s110
    %s113 = sphi 0, %s112
    %s127 = sphi 0, %s113
    %s131 = sphi 0, %s131
    %s133 = sphi 0, %s131
    %s134 = sphi 0, %s133
    %s148 = sphi 0, %s134
    %s152 = sphi 0, %s152
    %s154 = sphi 0, %s152
    %s155 = sphi 0, %s154
    %s169 = sphi 0, %s155
    %s175 = sphi 0, %s177
    %s178 = sphi 0, %s175
    %s179 = sphi 0, %s178
    %s195 = sphi 0, %s179
  $region4: #{vt_decoder_layer.15} parent=0 // loop_header_branch
    %16 = sbr.rel (%p14) target = $region8
  $region5: #{vt_decoder_layer.15} parent=0 // loop_body
    %s18 = ssub.s32 %s13, 1
    %s19 = ssub.s32 %s13, 2
    %s20 = sadd.s32 %s13, 1
    %s21 = ssub.s32 %s13, %s20
    %p22 = scmp.eq.s32.totalorder %s21, 0
    %s24 = sadd.s32 %s23, 1
    %s25 = scalar_select %p22, %s23, %s24
    %p28 = pneg %p22
    %p29 = scmp.eq.s32.totalorder %s13, 1
    %p30 = por %p28, %p29
    %p31 = scmp.ne.s32.totalorder %s23, %s26
    %p32 = scmp.eq.s32.totalorder %s13, 0
    %p33 = por %p31, %p32
    %p34 = scmp.ne.s32.totalorder %s23, %s26
    %p35 = scmp.eq.s32.totalorder %s18, 1
    %p36 = por %p34, %p35
    %p37 = scmp.ne.s32.totalorder %s26, %s27
    %p38 = scmp.eq.s32.totalorder %s18, 0
    %p39 = por %p37, %p38
    %p40 = scmp.ne.s32.totalorder %s26, %s27
    %p41 = scmp.eq.s32.totalorder %s19, 1
    %p42 = por %p40, %p41
    %p44 = scmp.ne.s32.totalorder %s27, %s43
    %p45 = scmp.eq.s32.totalorder %s19, 0
    %p46 = por %p44, %p45
    %s48 = sadd.s32 %s47, 1
    %p51 = scmp.eq.s32.totalorder %s13, 1
    %p52 = scmp.ne.s32.totalorder %s47, %s49
    %p53 = scmp.eq.s32.totalorder %s13, 0
    %p54 = por %p52, %p53
    %p55 = scmp.ne.s32.totalorder %s47, %s49
    %p56 = scmp.eq.s32.totalorder %s18, 1
    %p57 = por %p55, %p56
    %p58 = scmp.ne.s32.totalorder %s49, %s50
    %p59 = scmp.eq.s32.totalorder %s18, 0
    %p60 = por %p58, %p59
    %p61 = scmp.ne.s32.totalorder %s49, %s50
    %p62 = scmp.eq.s32.totalorder %s19, 1
    %p63 = por %p61, %p62
    %p65 = scmp.ne.s32.totalorder %s50, %s64
    %p66 = scmp.eq.s32.totalorder %s19, 0
    %p67 = por %p65, %p66
    %s69 = sadd.s32 %s68, 1
    %p72 = scmp.eq.s32.totalorder %s13, 1
    %p73 = scmp.ne.s32.totalorder %s68, %s70
    %p74 = scmp.eq.s32.totalorder %s13, 0
    %p75 = por %p73, %p74
    %p76 = scmp.ne.s32.totalorder %s68, %s70
    %p77 = scmp.eq.s32.totalorder %s18, 1
    %p78 = por %p76, %p77
    %p79 = scmp.ne.s32.totalorder %s70, %s71
    %p80 = scmp.eq.s32.totalorder %s18, 0
    %p81 = por %p79, %p80
    %p82 = scmp.ne.s32.totalorder %s70, %s71
    %p83 = scmp.eq.s32.totalorder %s19, 1
    %p84 = por %p82, %p83
    %p86 = scmp.ne.s32.totalorder %s71, %s85
    %p87 = scmp.eq.s32.totalorder %s19, 0
    %p88 = por %p86, %p87
    %s90 = sadd.s32 %s89, 1
    %p93 = scmp.eq.s32.totalorder %s13, 1
    %p94 = scmp.ne.s32.totalorder %s89, %s91
    %p95 = scmp.eq.s32.totalorder %s13, 0
    %p96 = por %p94, %p95
    %p97 = scmp.ne.s32.totalorder %s89, %s91
    %p98 = scmp.eq.s32.totalorder %s18, 1
    %p99 = por %p97, %p98
    %p100 = scmp.ne.s32.totalorder %s91, %s92
    %p101 = scmp.eq.s32.totalorder %s18, 0
    %p102 = por %p100, %p101
    %p103 = scmp.ne.s32.totalorder %s91, %s92
    %p104 = scmp.eq.s32.totalorder %s19, 1
    %p105 = por %p103, %p104
    %p107 = scmp.ne.s32.totalorder %s92, %s106
    %p108 = scmp.eq.s32.totalorder %s19, 0
    %p109 = por %p107, %p108
    %s111 = sadd.s32 %s110, 1
    %p114 = scmp.eq.s32.totalorder %s13, 1
    %p115 = scmp.ne.s32.totalorder %s110, %s112
    %p116 = scmp.eq.s32.totalorder %s13, 0
    %p117 = por %p115, %p116
    %p118 = scmp.ne.s32.totalorder %s110, %s112
    %p119 = scmp.eq.s32.totalorder %s18, 1
    %p120 = por %p118, %p119
    %p121 = scmp.ne.s32.totalorder %s112, %s113
    %p122 = scmp.eq.s32.totalorder %s18, 0
    %p123 = por %p121, %p122
    %p124 = scmp.ne.s32.totalorder %s112, %s113
    %p125 = scmp.eq.s32.totalorder %s19, 1
    %p126 = por %p124, %p125
    %p128 = scmp.ne.s32.totalorder %s113, %s127
    %p129 = scmp.eq.s32.totalorder %s19, 0
    %p130 = por %p128, %p129
    %s132 = sadd.s32 %s131, 1
    %p135 = scmp.eq.s32.totalorder %s13, 1
    %p136 = scmp.ne.s32.totalorder %s131, %s133
    %p137 = scmp.eq.s32.totalorder %s13, 0
    %p138 = por %p136, %p137
    %p139 = scmp.ne.s32.totalorder %s131, %s133
    %p140 = scmp.eq.s32.totalorder %s18, 1
    %p141 = por %p139, %p140
    %p142 = scmp.ne.s32.totalorder %s133, %s134
    %p143 = scmp.eq.s32.totalorder %s18, 0
    %p144 = por %p142, %p143
    %p145 = scmp.ne.s32.totalorder %s133, %s134
    %p146 = scmp.eq.s32.totalorder %s19, 1
    %p147 = por %p145, %p146
    %p149 = scmp.ne.s32.totalorder %s134, %s148
    %p150 = scmp.eq.s32.totalorder %s19, 0
    %p151 = por %p149, %p150
    %s153 = sadd.s32 %s152, 1
    %p156 = scmp.eq.s32.totalorder %s13, 1
    %p157 = scmp.ne.s32.totalorder %s152, %s154
    %p158 = scmp.eq.s32.totalorder %s13, 0
    %p159 = por %p157, %p158
    %p160 = scmp.ne.s32.totalorder %s152, %s154
    %p161 = scmp.eq.s32.totalorder %s18, 1
    %p162 = por %p160, %p161
    %p163 = scmp.ne.s32.totalorder %s154, %s155
    %p164 = scmp.eq.s32.totalorder %s18, 0
    %p165 = por %p163, %p164
    %p166 = scmp.ne.s32.totalorder %s154, %s155
    %p167 = scmp.eq.s32.totalorder %s19, 1
    %p168 = por %p166, %p167
    %p170 = scmp.ne.s32.totalorder %s155, %s169
    %p171 = scmp.eq.s32.totalorder %s19, 0
    %p172 = por %p170, %p171
    %s173 = ssub.s32 %s13, %s20
    %p174 = scmp.eq.s32.totalorder %s173, 0
    %s176 = sadd.s32 %s175, 1
    %s177 = scalar_select %p174, %s175, %s176
    %p180 = pneg %p174
    %p181 = scmp.eq.s32.totalorder %s13, 1
    %p182 = por %p180, %p181
    %p183 = scmp.ne.s32.totalorder %s175, %s178
    %p184 = scmp.eq.s32.totalorder %s13, 0
    %p185 = por %p183, %p184
    %p186 = scmp.ne.s32.totalorder %s175, %s178
    %p187 = scmp.eq.s32.totalorder %s18, 1
    %p188 = por %p186, %p187
    %p189 = scmp.ne.s32.totalorder %s178, %s179
    %p190 = scmp.eq.s32.totalorder %s18, 0
    %p191 = por %p189, %p190
    %p192 = scmp.ne.s32.totalorder %s178, %s179
    %p193 = scmp.eq.s32.totalorder %s19, 1
    %p194 = por %p192, %p193
    %p196 = scmp.ne.s32.totalorder %s179, %s195
    %p197 = scmp.eq.s32.totalorder %s19, 0
    %p198 = por %p196, %p197
    %p199 = scmp.le.s32.totalorder 1, %s13
    %p200 = scmp.lt.s32.totalorder %s13, 3
    %p201 = pnand %p199, %p200
    %p202 = pneg %p201
    // Predicated region
    $region9: #{vt_decoder_layer.15} parent=5 // pred_check
      _
    $region10: #{vt_decoder_layer.15} parent=5 // pred_check_branch
      %204 = sbr.rel (%p201) target = $region12
    $region11: #{vt_decoder_layer.15} parent=5 // pred_region
      %s205 = ssub.s32 %s13, 1
      // Predicated region
      $region13: #{vt_decoder_layer.15} parent=11 // pred_check
        %p206 = pneg %p60
      $region14: #{vt_decoder_layer.15} parent=11 // pred_check_branch
        %208 = sbr.rel (%p206) target = $region16
      $region15: #{vt_decoder_layer.15} parent=11 // pred_region
        _
      $region16: #{vt_decoder_layer.15} parent=11 // pred_fallthru
        _
      // Predicated region
      $region17: #{vt_decoder_layer.15} parent=11 // pred_check
        %p209 = pneg %p81
      $region18: #{vt_decoder_layer.15} parent=11 // pred_check_branch
        %211 = sbr.rel (%p209) target = $region20
      $region19: #{vt_decoder_layer.15} parent=11 // pred_region
        _
      $region20: #{vt_decoder_layer.15} parent=11 // pred_fallthru
        _
      // Predicated region
      $region21: #{vt_decoder_layer.15} parent=11 // pred_check
        %p212 = pneg %p102
      $region22: #{vt_decoder_layer.15} parent=11 // pred_check_branch
        %214 = sbr.rel (%p212) target = $region24
      $region23: #{vt_decoder_layer.15} parent=11 // pred_region
        _
      $region24: #{vt_decoder_layer.15} parent=11 // pred_fallthru
        _
      // Predicated region
      $region25: #{vt_decoder_layer.15} parent=11 // pred_check
        %p215 = pneg %p123
      $region26: #{vt_decoder_layer.15} parent=11 // pred_check_branch
        %217 = sbr.rel (%p215) target = $region28
      $region27: #{vt_decoder_layer.15} parent=11 // pred_region
        _
      $region28: #{vt_decoder_layer.15} parent=11 // pred_fallthru
        _
      // Predicated region
      $region29: #{vt_decoder_layer.15} parent=11 // pred_check
        %p218 = pneg %p144
      $region30: #{vt_decoder_layer.15} parent=11 // pred_check_branch
        %220 = sbr.rel (%p218) target = $region32
      $region31: #{vt_decoder_layer.15} parent=11 // pred_region
        _
      $region32: #{vt_decoder_layer.15} parent=11 // pred_fallthru
        _
      // Predicated region
      $region33: #{vt_decoder_layer.15} parent=11 // pred_check
        %p221 = pneg %p165
      $region34: #{vt_decoder_layer.15} parent=11 // pred_check_branch
        %223 = sbr.rel (%p221) target = $region36
      $region35: #{vt_decoder_layer.15} parent=11 // pred_region
        _
      $region36: #{vt_decoder_layer.15} parent=11 // pred_fallthru
        _
    $region12: #{vt_decoder_layer.15} parent=5 // pred_fallthru
      _
    %p224 = scmp.lt.s32.totalorder %s13, 2
    // Predicated region
    $region37: #{vt_decoder_layer.15} parent=5 // pred_check
      %p225 = pneg %p224
    $region38: #{vt_decoder_layer.15} parent=5 // pred_check_branch
      %227 = sbr.rel (%p225) target = $region40
    $region39: #{vt_decoder_layer.15} parent=5 // pred_region
      // Predicated region
      $region41: #{vt_decoder_layer.15} parent=39 // pred_check
        %p228 = pneg %p33
      $region42: #{vt_decoder_layer.15} parent=39 // pred_check_branch
        %230 = sbr.rel (%p228) target = $region44
      $region43: #{vt_decoder_layer.15} parent=39 // pred_region
        %p231 = scmp.lt.s32.totalorder %s13, 1
        %s232 = scalar_select %p231, %s13, 1
        %s233 = smul.addr %s232, 8
        %s234 = scalar_lea.vmem %s0, %s233
      $region44: #{vt_decoder_layer.15} parent=39 // pred_fallthru
        _
    $region40: #{vt_decoder_layer.15} parent=5 // pred_fallthru
      _
    %p235 = scmp.le.s32.totalorder 1, %s13
    %p236 = scmp.lt.s32.totalorder %s13, 3
    %p237 = pnand %p235, %p236
    %p238 = pneg %p237
    // Predicated region
    $region45: #{vt_decoder_layer.15} parent=5 // pred_check
      _
    $region46: #{vt_decoder_layer.15} parent=5 // pred_check_branch
      %240 = sbr.rel (%p237) target = $region48
    $region47: #{vt_decoder_layer.15} parent=5 // pred_region
      %s241 = ssub.s32 %s13, 1
      %p242 = scmp.lt.s32.totalorder %s18, 1
      %s243 = scalar_select %p242, %s18, 1
      %s244 = smul.addr %s243, 8
      %s245 = scalar_lea.vmem %s0, %s244
      %p246 = pneg %p39
      %p247 = pneg %p36
      %p248 = pneg %p60
      %p249 = pneg %p57
      %p250 = pneg %p81
      %p251 = pneg %p78
      %p252 = pneg %p102
      %p253 = pneg %p99
      %p254 = pneg %p123
      %p255 = pneg %p120
      %p256 = pneg %p144
      %p257 = pneg %p141
      %p258 = pneg %p165
      %p259 = pneg %p162
      %p260 = pneg %p191
      %p261 = pneg %p188
      %p262 = scmp.lt.s32.totalorder %s18, 1
      %s263 = scalar_select %p262, %s18, 1
      %s264 = smul.addr %s263, 8
      %s265 = scalar_lea.vmem %s7, %s264
      %p266 = scmp.lt.s32.totalorder %s18, 1
      %s267 = scalar_select %p266, %s18, 1
      %s268 = smul.addr %s267, 8
      %s269 = scalar_lea.vmem %s0, %s268
      %p270 = scmp.lt.s32.totalorder %s18, 1
      %s271 = scalar_select %p270, %s18, 1
      %s272 = smul.addr %s271, 8
      %s273 = scalar_lea.vmem %s7, %s272
      %v274 = vld [vmem:[%s269] sm:$0xff]
      %v275 = vld [vmem:[%s1] sm:$0xff]
      %v276 = vld [vmem:[%s1 + $0x8] sm:$0xff]
      %v277 = vld [vmem:[%s1 + $0x10] sm:$0xff]
      %v278 = vld [vmem:[%s1 + $0x18] sm:$0xff]
      %v279 = vld [vmem:[%s2] sm:$0x1]
      %v281 = vlaneseq
      %v282 = vshrl.u32 %v281, 7
      %v283 = vsub.s32 0, %v282
      %v284 = vrot.slane %v279, %v283
      %vm286 = vcmask 261120
      %v288 = vsel %vm286, %v274, 0
      %290 = vmatprep.subr.mxu0 0.0
      %291 = vmatpush1.msra.mxu0 0.0
      %292 = vmatprep.subr.mxu0 0.0
      %293 = vmatpush1.msra.mxu0 0.0
      %294 = vmatprep.subr.mxu0 0.0
      %295 = vmatpush1.msra.mxu0 0.0
      %296 = vmatprep.subr.mxu0 0.0
      %297 = vmatpush1.msra.mxu0 0.0
      %298 = vmatprep.subr.mxu0 0.0
      %299 = vmatpush1.msra.mxu0 0.0
      %300 = vmatprep.subr.mxu0 0.0
      %301 = vmatpush1.msra.mxu0 0.0
      %302 = vmatprep.subr.mxu0 0.0
      %303 = vmatpush1.msra.mxu0 0.0
      %304 = vmatprep.subr.mxu0 0.0
      %305 = vmatpush1.msra.mxu0 0.0
      %306 = vmatprep.subr.mxu0 0.0
      %307 = vmatpush1.msra.mxu0 0.0
      %308 = vmatprep.subr.mxu0 0.0
      %309 = vmatpush1.msra.mxu0 0.0
      %310 = vmatprep.subr.mxu0 0.0
      %311 = vmatpush1.msra.mxu0 0.0
      %312 = vmatprep.subr.mxu0 0.0
      %313 = vmatpush1.msra.mxu0 0.0
      %314 = vmatprep.subr.mxu0 0.0
      %315 = vmatpush1.msra.mxu0 %v278
      %316 = vmatprep.subr.mxu0 0.0
      %317 = vmatpush1.msra.mxu0 %v277
      %318 = vmatprep.subr.mxu0 0.0
      %319 = vmatpush1.msra.mxu0 %v276
      %320 = vmatprep.subr.mxu0 0.0
      %321 = vmatpush1.msra.mxu0 %v275
      %322 = vmatprep.subr.mxu0 0.0
      %323 = vmatpush2.msra.mxu0 0.0
      %324 = vmatprep.subr.mxu0 0.0
      %325 = vmatpush2.msra.mxu0 0.0
      %326 = vmatprep.subr.mxu0 0.0
      %327 = vmatpush2.msra.mxu0 0.0
      %328 = vmatprep.subr.mxu0 0.0
      %329 = vmatpush2.msra.mxu0 0.0
      %330 = vmatprep.subr.mxu0 0.0
      %331 = vmatpush2.msra.mxu0 0.0
      %332 = vmatprep.subr.mxu0 0.0
      %333 = vmatpush2.msra.mxu0 0.0
      %334 = vmatprep.subr.mxu0 0.0
      %335 = vmatpush2.msra.mxu0 0.0
      %336 = vmatprep.subr.mxu0 0.0
      %337 = vmatpush2.msra.mxu0 0.0
      %338 = vmatprep.subr.mxu0 0.0
      %339 = vmatpush2.msra.mxu0 0.0
      %340 = vmatprep.subr.mxu0 0.0
      %341 = vmatpush2.msra.mxu0 0.0
      %342 = vmatprep.subr.mxu0 0.0
      %343 = vmatpush2.msra.mxu0 0.0
      %344 = vmatprep.subr.mxu0 0.0
      %345 = vmatpush2.msra.mxu0 0.0
      %346 = vmatprep.subr.mxu0 0.0
      %347 = vmatpush2.msra.mxu0 0.0
      %348 = vmatprep.subr.mxu0 0.0
      %349 = vmatpush2.msra.mxu0 0.0
      %350 = vmatprep.subr.mxu0 0.0
      %351 = vmatpush2.msra.mxu0 0.0
      %352 = vmatprep.subr.mxu0 0.0
      %353 = vmatpush2.msra.mxu0 0.0
      %354 = vmatprep.mubr.f32.mxu0 0.0
      %355 = vmatmul.mubr.f32.gmra.mxu0 %v288
      %v356 = vpop.f32.mrf.mxu0
      %v357 = vadd.f32 %v284, %v356
      %v358 = vpop.f32.mrf.mxu0
      %359 = vdwg.mxu0
      %v360 = vmax.f32 %v357, 0.0
      %v361 = vld [vmem:[%s3] sm:$0xff]
      %v362 = vld [vmem:[%s3 + $0x8] sm:$0xff]
      %v363 = vld [vmem:[%s3 + $0x10] sm:$0xff]
      %v364 = vld [vmem:[%s3 + $0x18] sm:$0xff]
      %v365 = vld [vmem:[%s3 + $0x20] sm:$0xff]
      %v366 = vld [vmem:[%s3 + $0x28] sm:$0xff]
      %v367 = vld [vmem:[%s3 + $0x30] sm:$0xff]
      %v368 = vld [vmem:[%s3 + $0x38] sm:$0xff]
      %v369 = vld [vmem:[%s4] sm:$0x1]
      %v371 = vlaneseq
      %v372 = vshrl.u32 %v371, 7
      %v373 = vsub.s32 0, %v372
      %v374 = vrot.slane %v369, %v373
      %vm376 = vcmask 523264
      %v378 = vsel %vm376, %v360, 0
      %380 = vmatprep.subr.mxu0 0.0
      %381 = vmatpush1.msra.mxu0 0.0
      %382 = vmatprep.subr.mxu0 0.0
      %383 = vmatpush1.msra.mxu0 0.0
      %384 = vmatprep.subr.mxu0 0.0
      %385 = vmatpush1.msra.mxu0 0.0
      %386 = vmatprep.subr.mxu0 0.0
      %387 = vmatpush1.msra.mxu0 0.0
      %388 = vmatprep.subr.mxu0 0.0
      %389 = vmatpush1.msra.mxu0 0.0
      %390 = vmatprep.subr.mxu0 0.0
      %391 = vmatpush1.msra.mxu0 0.0
      %392 = vmatprep.subr.mxu0 0.0
      %393 = vmatpush1.msra.mxu0 0.0
      %394 = vmatprep.subr.mxu0 0.0
      %395 = vmatpush1.msra.mxu0 0.0
      %396 = vmatprep.subr.mxu0 0.0
      %397 = vmatpush1.msra.mxu0 %v368
      %398 = vmatprep.subr.mxu0 0.0
      %399 = vmatpush1.msra.mxu0 %v367
      %400 = vmatprep.subr.mxu0 0.0
      %401 = vmatpush1.msra.mxu0 %v366
      %402 = vmatprep.subr.mxu0 0.0
      %403 = vmatpush1.msra.mxu0 %v365
      %404 = vmatprep.subr.mxu0 0.0
      %405 = vmatpush1.msra.mxu0 %v364
      %406 = vmatprep.subr.mxu0 0.0
      %407 = vmatpush1.msra.mxu0 %v363
      %408 = vmatprep.subr.mxu0 0.0
      %409 = vmatpush1.msra.mxu0 %v362
      %410 = vmatprep.subr.mxu0 0.0
      %411 = vmatpush1.msra.mxu0 %v361
      %412 = vmatprep.subr.mxu0 0.0
      %413 = vmatpush2.msra.mxu0 0.0
      %414 = vmatprep.subr.mxu0 0.0
      %415 = vmatpush2.msra.mxu0 0.0
      %416 = vmatprep.subr.mxu0 0.0
      %417 = vmatpush2.msra.mxu0 0.0
      %418 = vmatprep.subr.mxu0 0.0
      %419 = vmatpush2.msra.mxu0 0.0
      %420 = vmatprep.subr.mxu0 0.0
      %421 = vmatpush2.msra.mxu0 0.0
      %422 = vmatprep.subr.mxu0 0.0
      %423 = vmatpush2.msra.mxu0 0.0
      %424 = vmatprep.subr.mxu0 0.0
      %425 = vmatpush2.msra.mxu0 0.0
      %426 = vmatprep.subr.mxu0 0.0
      %427 = vmatpush2.msra.mxu0 0.0
      %428 = vmatprep.subr.mxu0 0.0
      %429 = vmatpush2.msra.mxu0 0.0
      %430 = vmatprep.subr.mxu0 0.0
      %431 = vmatpush2.msra.mxu0 0.0
      %432 = vmatprep.subr.mxu0 0.0
      %433 = vmatpush2.msra.mxu0 0.0
      %434 = vmatprep.subr.mxu0 0.0
      %435 = vmatpush2.msra.mxu0 0.0
      %436 = vmatprep.subr.mxu0 0.0
      %437 = vmatpush2.msra.mxu0 0.0
      %438 = vmatprep.subr.mxu0 0.0
      %439 = vmatpush2.msra.mxu0 0.0
      %440 = vmatprep.subr.mxu0 0.0
      %441 = vmatpush2.msra.mxu0 0.0
      %442 = vmatprep.subr.mxu0 0.0
      %443 = vmatpush2.msra.mxu0 0.0
      %444 = vmatprep.mubr.f32.mxu0 0.0
      %445 = vmatmul.mubr.f32.gmra.mxu0 %v378
      %v446 = vpop.f32.mrf.mxu0
      %v447 = vadd.f32 %v374, %v446
      %v448 = vpop.f32.mrf.mxu0
      %449 = vdwg.mxu0
      %v450 = vadd.f32 %v274, %v447
      %v451 = vsel %vm286, %v450, 0.0
      %452 = vadd.xlane.f32.xlu0 %v451
      %v453 = vpop.xlane.xlu0 %452
      %v454 = vrcp.pop 32.0
      %v455 = vmul.f32 %v453, %v454
      %v456 = vsub.f32 %v450, %v455
      %v457 = vmul.f32 %v456, %v456
      %v458 = vsel %vm286, %v457, 0.0
      %459 = vadd.xlane.f32.xlu0 %v458
      %v460 = vpop.xlane.xlu0 %459
      %v461 = vmul.f32 %v460, %v454
      %v462 = vadd.f32 %v461, 1e-05
      %v463 = vrsqrt.pop %v462
      %v464 = vmul.f32 %v456, %v463
      %v465 = vld [vmem:[%s5] sm:$0x1]
      %v467 = vlaneseq
      %v468 = vshrl.u32 %v467, 7
      %v469 = vsub.s32 0, %v468
      %v470 = vrot.slane %v465, %v469
      %v472 = vmul.f32 %v464, %v470
      %v473 = vld [vmem:[%s6] sm:$0x1]
      %v475 = vlaneseq
      %v476 = vshrl.u32 %v475, 7
      %v477 = vsub.s32 0, %v476
      %v478 = vrot.slane %v473, %v477
      %v480 = vadd.f32 %v472, %v478
      %481 = vst.msk [vmem:[%s273] sm:$0xff] %vm286, %v480
      %p482 = scmp.lt.s32.totalorder %s18, 1
      %s483 = scalar_select %p482, %s18, 1
      %s484 = smul.addr %s483, 8
      %s485 = scalar_lea.vmem %s7, %s484
      // Predicated region
      $region49: #{vt_decoder_layer.15} parent=47 // pred_check
        %p486 = pneg %p188
      $region50: #{vt_decoder_layer.15} parent=47 // pred_check_branch
        %488 = sbr.rel (%p486) target = $region52
      $region51: #{vt_decoder_layer.15} parent=47 // pred_region
        _
      $region52: #{vt_decoder_layer.15} parent=47 // pred_fallthru
        _
    $region48: #{vt_decoder_layer.15} parent=5 // pred_fallthru
      _
    %p489 = scmp.le.s32.totalorder 2, %s13
    // Predicated region
    $region53: #{vt_decoder_layer.15} parent=5 // pred_check
      %p490 = pneg %p489
    $region54: #{vt_decoder_layer.15} parent=5 // pred_check_branch
      %492 = sbr.rel (%p490) target = $region56
    $region55: #{vt_decoder_layer.15} parent=5 // pred_region
      %s493 = ssub.s32 %s13, 2
      // Predicated region
      $region57: #{vt_decoder_layer.15} parent=55 // pred_check
        %p494 = pneg %p194
      $region58: #{vt_decoder_layer.15} parent=55 // pred_check_branch
        %496 = sbr.rel (%p494) target = $region60
      $region59: #{vt_decoder_layer.15} parent=55 // pred_region
        %p497 = scmp.lt.s32.totalorder %s19, 1
        %s498 = scalar_select %p497, %s19, 1
        %s499 = smul.addr %s498, 8
        %s500 = scalar_lea.vmem %s7, %s499
      $region60: #{vt_decoder_layer.15} parent=55 // pred_fallthru
        _
    $region56: #{vt_decoder_layer.15} parent=5 // pred_fallthru
      _
  $region6: #{vt_decoder_layer.15} parent=0 // loop_footer
    %s17 = sadd.s32 1, %s13
  $region7: #{vt_decoder_layer.15} parent=0 // loop_footer_branch
    %12 = sbr.rel target = $region3
  $region8: #{vt_decoder_layer.15} parent=0 // loop_exit
    _

// kernel: vt_decoder_layer.13
$region0: #{vt_decoder_layer.13}
  #allocation0 [shape = 'u32[]', space=smem, size = 0x4, offset = 0x4, fixed_abs, tag = 'smem constant byte address 0x4 - core index']
  #allocation1 [shape = 'u32[144,128]{1,0:T(1,128)}', space=vmem, size = 0x12000, scoped, tag = 'internal scratch']
  %s0 = inlined_call_operand.vmem [shape: f32[2,8,64], index: 0, kind: input, shape index: {}]
  %s1 = inlined_call_operand.vmem [shape: f32[2,16,96], index: 1, kind: input, shape index: {}]
  %s2 = inlined_call_operand.vmem [shape: f32[2,8,32], index: 2, kind: output, shape index: {}]
  %s3 = sld [smem:[#allocation0]]
  $region41: #{vt_decoder_layer.13} parent=0
    _
  %s5 = ssub.s32 1, %s3
  %s6 = scalar_select 0, %s5, %s3
  loop: start=0, step=1, limit=4
  $region2: #{vt_decoder_layer.13} parent=0 // loop_pre_header
    _
  $region3: #{vt_decoder_layer.13} parent=0 // loop_header
    %s8 = sphi 0, %s12
    %p9 = scmp.ge.s32.totalorder %s8, 4
    %s18 = sphi 0, %s20
    %s21 = sphi 0, %s18
    %s22 = sphi 0, %s21
    %s38 = sphi 0, %s22
    %s44 = sphi 0, %s46
    %s47 = sphi 0, %s44
    %s48 = sphi 0, %s47
    %s64 = sphi 0, %s48
    %s70 = sphi 0, %s72
    %s73 = sphi 0, %s70
    %s74 = sphi 0, %s73
    %s90 = sphi 0, %s74
  $region4: #{vt_decoder_layer.13} parent=0 // loop_header_branch
    %11 = sbr.rel (%p9) target = $region8
  $region5: #{vt_decoder_layer.13} parent=0 // loop_body
    %s13 = ssub.s32 %s8, 1
    %s14 = ssub.s32 %s8, 2
    %s15 = sadd.s32 %s8, 1
    %s16 = ssub.s32 %s8, %s15
    %p17 = scmp.eq.s32.totalorder %s16, 0
    %s19 = sadd.s32 %s18, 1
    %s20 = scalar_select %p17, %s18, %s19
    %p23 = pneg %p17
    %p24 = scmp.eq.s32.totalorder %s8, 1
    %p25 = por %p23, %p24
    %p26 = scmp.ne.s32.totalorder %s18, %s21
    %p27 = scmp.eq.s32.totalorder %s8, 0
    %p28 = por %p26, %p27
    %p29 = scmp.ne.s32.totalorder %s18, %s21
    %p30 = scmp.eq.s32.totalorder %s13, 1
    %p31 = por %p29, %p30
    %p32 = scmp.ne.s32.totalorder %s21, %s22
    %p33 = scmp.eq.s32.totalorder %s13, 0
    %p34 = por %p32, %p33
    %p35 = scmp.ne.s32.totalorder %s21, %s22
    %p36 = scmp.eq.s32.totalorder %s14, 1
    %p37 = por %p35, %p36
    %p39 = scmp.ne.s32.totalorder %s22, %s38
    %p40 = scmp.eq.s32.totalorder %s14, 0
    %p41 = por %p39, %p40
    %s42 = ssub.s32 %s8, %s15
    %p43 = scmp.eq.s32.totalorder %s42, 0
    %s45 = sadd.s32 %s44, 1
    %s46 = scalar_select %p43, %s44, %s45
    %p49 = pneg %p43
    %p50 = scmp.eq.s32.totalorder %s8, 1
    %p51 = por %p49, %p50
    %p52 = scmp.ne.s32.totalorder %s44, %s47
    %p53 = scmp.eq.s32.totalorder %s8, 0
    %p54 = por %p52, %p53
    %p55 = scmp.ne.s32.totalorder %s44, %s47
    %p56 = scmp.eq.s32.totalorder %s13, 1
    %p57 = por %p55, %p56
    %p58 = scmp.ne.s32.totalorder %s47, %s48
    %p59 = scmp.eq.s32.totalorder %s13, 0
    %p60 = por %p58, %p59
    %p61 = scmp.ne.s32.totalorder %s47, %s48
    %p62 = scmp.eq.s32.totalorder %s14, 1
    %p63 = por %p61, %p62
    %p65 = scmp.ne.s32.totalorder %s48, %s64
    %p66 = scmp.eq.s32.totalorder %s14, 0
    %p67 = por %p65, %p66
    %s68 = ssub.s32 %s8, %s15
    %p69 = scmp.eq.s32.totalorder %s68, 0
    %s71 = sadd.s32 %s70, 1
    %s72 = scalar_select %p69, %s70, %s71
    %p75 = pneg %p69
    %p76 = scmp.eq.s32.totalorder %s8, 1
    %p77 = por %p75, %p76
    %p78 = scmp.ne.s32.totalorder %s70, %s73
    %p79 = scmp.eq.s32.totalorder %s8, 0
    %p80 = por %p78, %p79
    %p81 = scmp.ne.s32.totalorder %s70, %s73
    %p82 = scmp.eq.s32.totalorder %s13, 1
    %p83 = por %p81, %p82
    %p84 = scmp.ne.s32.totalorder %s73, %s74
    %p85 = scmp.eq.s32.totalorder %s13, 0
    %p86 = por %p84, %p85
    %p87 = scmp.ne.s32.totalorder %s73, %s74
    %p88 = scmp.eq.s32.totalorder %s14, 1
    %p89 = por %p87, %p88
    %p91 = scmp.ne.s32.totalorder %s74, %s90
    %p92 = scmp.eq.s32.totalorder %s14, 0
    %p93 = por %p91, %p92
    %p94 = scmp.le.s32.totalorder 1, %s8
    %p95 = scmp.lt.s32.totalorder %s8, 3
    %p96 = pnand %p94, %p95
    %p97 = pneg %p96
    // Predicated region
    $region9: #{vt_decoder_layer.13} parent=5 // pred_check
      _
    $region10: #{vt_decoder_layer.13} parent=5 // pred_check_branch
      %99 = sbr.rel (%p96) target = $region12
    $region11: #{vt_decoder_layer.13} parent=5 // pred_region
      %s100 = ssub.s32 %s8, 1
    $region12: #{vt_decoder_layer.13} parent=5 // pred_fallthru
      _
    %p101 = scmp.lt.s32.totalorder %s8, 2
    // Predicated region
    $region13: #{vt_decoder_layer.13} parent=5 // pred_check
      %p102 = pneg %p101
    $region14: #{vt_decoder_layer.13} parent=5 // pred_check_branch
      %104 = sbr.rel (%p102) target = $region16
    $region15: #{vt_decoder_layer.13} parent=5 // pred_region
      // Predicated region
      $region17: #{vt_decoder_layer.13} parent=15 // pred_check
        %p105 = pneg %p28
      $region18: #{vt_decoder_layer.13} parent=15 // pred_check_branch
        %107 = sbr.rel (%p105) target = $region20
      $region19: #{vt_decoder_layer.13} parent=15 // pred_region
        %p108 = scmp.lt.s32.totalorder %s8, 1
        %s109 = scalar_select %p108, %s8, 1
        %s110 = smul.addr %s109, 8
        %s111 = scalar_lea.vmem %s0, %s110
      $region20: #{vt_decoder_layer.13} parent=15 // pred_fallthru
        _
      // Predicated region
      $region21: #{vt_decoder_layer.13} parent=15 // pred_check
        %p112 = pneg %p54
      $region22: #{vt_decoder_layer.13} parent=15 // pred_check_branch
        %114 = sbr.rel (%p112) target = $region24
      $region23: #{vt_decoder_layer.13} parent=15 // pred_region
        %p115 = scmp.lt.s32.totalorder %s8, 1
        %s116 = scalar_select %p115, %s8, 1
        %s117 = smul.addr %s116, 2
        %s118 = smul.addr %s117, 8
        %s119 = scalar_lea.vmem %s1, %s118
      $region24: #{vt_decoder_layer.13} parent=15 // pred_fallthru
        _
    $region16: #{vt_decoder_layer.13} parent=5 // pred_fallthru
      _
    %p120 = scmp.le.s32.totalorder 1, %s8
    %p121 = scmp.lt.s32.totalorder %s8, 3
    %p122 = pnand %p120, %p121
    %p123 = pneg %p122
    // Predicated region
    $region25: #{vt_decoder_layer.13} parent=5 // pred_check
      _
    $region26: #{vt_decoder_layer.13} parent=5 // pred_check_branch
      %125 = sbr.rel (%p122) target = $region28
    $region27: #{vt_decoder_layer.13} parent=5 // pred_region
      %s126 = ssub.s32 %s8, 1
      %p127 = scmp.lt.s32.totalorder %s13, 1
      %s128 = scalar_select %p127, %s13, 1
      %s129 = smul.addr %s128, 8
      %s130 = scalar_lea.vmem %s0, %s129
      %p131 = pneg %p34
      %p132 = pneg %p31
      %p133 = scmp.lt.s32.totalorder %s13, 1
      %s134 = scalar_select %p133, %s13, 1
      %s135 = smul.addr %s134, 2
      %s136 = smul.addr %s135, 8
      %s137 = scalar_lea.vmem %s1, %s136
      %p138 = pneg %p60
      %p139 = pneg %p57
      %p140 = pneg %p86
      %p141 = pneg %p83
      %p142 = scmp.lt.s32.totalorder %s13, 1
      %s143 = scalar_select %p142, %s13, 1
      %s144 = smul.addr %s143, 8
      %s145 = scalar_lea.vmem %s2, %s144
      %p146 = scmp.lt.s32.totalorder %s13, 1
      %s147 = scalar_select %p146, %s13, 1
      %s148 = smul.addr %s147, 8
      %s149 = scalar_lea.vmem %s0, %s148
      %p150 = scmp.lt.s32.totalorder %s13, 1
      %s151 = scalar_select %p150, %s13, 1
      %s152 = smul.addr %s151, 2
      %s153 = smul.addr %s152, 8
      %s154 = scalar_lea.vmem %s1, %s153
      %p155 = scmp.lt.s32.totalorder %s13, 1
      %s156 = scalar_select %p155, %s13, 1
      %s157 = smul.addr %s156, 8
      %s158 = scalar_lea.vmem %s2, %s157
      %v159 = vld [vmem:[%s149] sm:$0xff]
      %v160 = vld [vmem:[%s154] sm:$0xff]
      %v161 = vld [vmem:[%s154 + $0x8] sm:$0xff]
      %163 = vrot.lane.b32.xlu0 %v159, 96
      %v164 = vpop.permute.xlu0 %163
      %167 = vrot.lane.b32.xlu0 %v160, 96
      %v168 = vpop.permute.xlu0 %167
      %169 = vrot.lane.b32.xlu0 %v161, 96
      %v170 = vpop.permute.xlu0 %169
      %vm171 = vcmask 64512
      %v172 = vsel %vm171, %v164, 0
      %v174 = vsel %vm171, %v168, 0
      %v176 = vsel %vm171, %v170, 0
      %178 = vmatprep.subr.mxu0 0.0
      %179 = vmatpush1.xpose.msra.mxu0 0.0
      %180 = vmatprep.subr.mxu0 0.0
      %181 = vmatpush1.xpose.msra.mxu0 0.0
      %182 = vmatprep.subr.mxu0 0.0
      %183 = vmatpush1.xpose.msra.mxu0 0.0
      %184 = vmatprep.subr.mxu0 0.0
      %185 = vmatpush1.xpose.msra.mxu0 0.0
      %186 = vmatprep.subr.mxu0 0.0
      %187 = vmatpush1.xpose.msra.mxu0 0.0
      %188 = vmatprep.subr.mxu0 0.0
      %189 = vmatpush1.xpose.msra.mxu0 0.0
      %190 = vmatprep.subr.mxu0 0.0
      %191 = vmatpush1.xpose.msra.mxu0 0.0
      %192 = vmatprep.subr.mxu0 0.0
      %193 = vmatpush1.xpose.msra.mxu0 0.0
      %194 = vmatprep.subr.mxu0 0.0
      %195 = vmatpush1.xpose.msra.mxu0 0.0
      %196 = vmatprep.subr.mxu0 0.0
      %197 = vmatpush1.xpose.msra.mxu0 0.0
      %198 = vmatprep.subr.mxu0 0.0
      %199 = vmatpush1.xpose.msra.mxu0 0.0
      %200 = vmatprep.subr.mxu0 0.0
      %201 = vmatpush1.xpose.msra.mxu0 0.0
      %202 = vmatprep.subr.mxu0 0.0
      %203 = vmatpush1.xpose.msra.mxu0 0.0
      %204 = vmatprep.subr.mxu0 0.0
      %205 = vmatpush1.xpose.msra.mxu0 0.0
      %206 = vmatprep.subr.mxu0 0.0
      %207 = vmatpush1.xpose.msra.mxu0 %v176
      %208 = vmatprep.subr.mxu0 0.0
      %209 = vmatpush1.xpose.msra.mxu0 %v174
      %210 = vmatprep.subr.mxu0 0.0
      %211 = vmatpush2.xpose.msra.mxu0 0.0
      %212 = vmatprep.subr.mxu0 0.0
      %213 = vmatpush2.xpose.msra.mxu0 0.0
      %214 = vmatprep.subr.mxu0 0.0
      %215 = vmatpush2.xpose.msra.mxu0 0.0
      %216 = vmatprep.subr.mxu0 0.0
      %217 = vmatpush2.xpose.msra.mxu0 0.0
      %218 = vmatprep.subr.mxu0 0.0
      %219 = vmatpush2.xpose.msra.mxu0 0.0
      %220 = vmatprep.subr.mxu0 0.0
      %221 = vmatpush2.xpose.msra.mxu0 0.0
      %222 = vmatprep.subr.mxu0 0.0
      %223 = vmatpush2.xpose.msra.mxu0 0.0
      %224 = vmatprep.subr.mxu0 0.0
      %225 = vmatpush2.xpose.msra.mxu0 0.0
      %226 = vmatprep.subr.mxu0 0.0
      %227 = vmatpush2.xpose.msra.mxu0 0.0
      %228 = vmatprep.subr.mxu0 0.0
      %229 = vmatpush2.xpose.msra.mxu0 0.0
      %230 = vmatprep.subr.mxu0 0.0
      %231 = vmatpush2.xpose.msra.mxu0 0.0
      %232 = vmatprep.subr.mxu0 0.0
      %233 = vmatpush2.xpose.msra.mxu0 0.0
      %234 = vmatprep.subr.mxu0 0.0
      %235 = vmatpush2.xpose.msra.mxu0 0.0
      %236 = vmatprep.subr.mxu0 0.0
      %237 = vmatpush2.xpose.msra.mxu0 0.0
      %238 = vmatprep.subr.mxu0 0.0
      %239 = vmatpush2.xpose.msra.mxu0 0.0
      %240 = vmatprep.subr.mxu0 0.0
      %241 = vmatpush2.xpose.msra.mxu0 0.0
      %242 = vmatprep.mubr.f32.mxu0 0.0
      %243 = vmatmul.mubr.f32.gmra.mxu0 %v172
      %v244 = vpop.f32.mrf.mxu0
      %v245 = vadd.f32 0.0, %v244
      %v246 = vpop.f32.mrf.mxu0
      %247 = vdwg.mxu0
      %v248 = vsel %vm171, %v159, 0
      %v250 = vsel %vm171, %v160, 0
      %v252 = vsel %vm171, %v161, 0
      %254 = vmatprep.subr.mxu0 0.0
      %255 = vmatpush1.xpose.msra.mxu0 0.0
      %256 = vmatprep.subr.mxu0 0.0
      %257 = vmatpush1.xpose.msra.mxu0 0.0
      %258 = vmatprep.subr.mxu0 0.0
      %259 = vmatpush1.xpose.msra.mxu0 0.0
      %260 = vmatprep.subr.mxu0 0.0
      %261 = vmatpush1.xpose.msra.mxu0 0.0
      %262 = vmatprep.subr.mxu0 0.0
      %263 = vmatpush1.xpose.msra.mxu0 0.0
      %264 = vmatprep.subr.mxu0 0.0
      %265 = vmatpush1.xpose.msra.mxu0 0.0
      %266 = vmatprep.subr.mxu0 0.0
      %267 = vmatpush1.xpose.msra.mxu0 0.0
      %268 = vmatprep.subr.mxu0 0.0
      %269 = vmatpush1.xpose.msra.mxu0 0.0
      %270 = vmatprep.subr.mxu0 0.0
      %271 = vmatpush1.xpose.msra.mxu0 0.0
      %272 = vmatprep.subr.mxu0 0.0
      %273 = vmatpush1.xpose.msra.mxu0 0.0
      %274 = vmatprep.subr.mxu0 0.0
      %275 = vmatpush1.xpose.msra.mxu0 0.0
      %276 = vmatprep.subr.mxu0 0.0
      %277 = vmatpush1.xpose.msra.mxu0 0.0
      %278 = vmatprep.subr.mxu0 0.0
      %279 = vmatpush1.xpose.msra.mxu0 0.0
      %280 = vmatprep.subr.mxu0 0.0
      %281 = vmatpush1.xpose.msra.mxu0 0.0
      %282 = vmatprep.subr.mxu0 0.0
      %283 = vmatpush1.xpose.msra.mxu0 %v252
      %284 = vmatprep.subr.mxu0 0.0
      %285 = vmatpush1.xpose.msra.mxu0 %v250
      %286 = vmatprep.subr.mxu0 0.0
      %287 = vmatpush2.xpose.msra.mxu0 0.0
      %288 = vmatprep.subr.mxu0 0.0
      %289 = vmatpush2.xpose.msra.mxu0 0.0
      %290 = vmatprep.subr.mxu0 0.0
      %291 = vmatpush2.xpose.msra.mxu0 0.0
      %292 = vmatprep.subr.mxu0 0.0
      %293 = vmatpush2.xpose.msra.mxu0 0.0
      %294 = vmatprep.subr.mxu0 0.0
      %295 = vmatpush2.xpose.msra.mxu0 0.0
      %296 = vmatprep.subr.mxu0 0.0
      %297 = vmatpush2.xpose.msra.mxu0 0.0
      %298 = vmatprep.subr.mxu0 0.0
      %299 = vmatpush2.xpose.msra.mxu0 0.0
      %300 = vmatprep.subr.mxu0 0.0
      %301 = vmatpush2.xpose.msra.mxu0 0.0
      %302 = vmatprep.subr.mxu0 0.0
      %303 = vmatpush2.xpose.msra.mxu0 0.0
      %304 = vmatprep.subr.mxu0 0.0
      %305 = vmatpush2.xpose.msra.mxu0 0.0
      %306 = vmatprep.subr.mxu0 0.0
      %307 = vmatpush2.xpose.msra.mxu0 0.0
      %308 = vmatprep.subr.mxu0 0.0
      %309 = vmatpush2.xpose.msra.mxu0 0.0
      %310 = vmatprep.subr.mxu0 0.0
      %311 = vmatpush2.xpose.msra.mxu0 0.0
      %312 = vmatprep.subr.mxu0 0.0
      %313 = vmatpush2.xpose.msra.mxu0 0.0
      %314 = vmatprep.subr.mxu0 0.0
      %315 = vmatpush2.xpose.msra.mxu0 0.0
      %316 = vmatprep.subr.mxu0 0.0
      %317 = vmatpush2.xpose.msra.mxu0 0.0
      %318 = vmatprep.mubr.f32.mxu0 0.0
      %319 = vmatmul.mubr.f32.gmra.mxu0 %v248
      %v320 = vpop.f32.mrf.mxu0
      %v321 = vadd.f32 %v245, %v320
      %v322 = vpop.f32.mrf.mxu0
      %323 = vdwg.mxu0
      %v324 = vmul.f32 %v321, 0.25
      %vm325 = vcmask 130048
      %v326 = vsel %vm325, %v324, -inf
      %327 = vmax.xlane.f32.xlu0 %v326
      %v328 = vpop.xlane.xlu0 %327
      %v329 = vsub.f32 %v324, %v328
      %v330 = vmul.f32 %v329, 1.442695
      %v331 = vpow.pop %v330
      %v332 = vsel %vm325, %v331, 0.0
      %333 = vadd.xlane.f32.xlu0 %v332
      %v334 = vpop.xlane.xlu0 %333
      %v335 = vrcp.pop %v334
      %v336 = vmul.f32 %v331, %v335
      %337 = vrot.lane.b32.xlu0 %v160, 64
      %v338 = vpop.permute.xlu0 %337
      %339 = vrot.lane.b32.xlu0 %v161, 64
      %v340 = vpop.permute.xlu0 %339
      %v344 = vsel %vm325, %v336, 0
      %346 = vmatprep.subr.mxu0 0.0
      %347 = vmatpush1.msra.mxu0 0.0
      %348 = vmatprep.subr.mxu0 0.0
      %349 = vmatpush1.msra.mxu0 0.0
      %350 = vmatprep.subr.mxu0 0.0
      %351 = vmatpush1.msra.mxu0 0.0
      %352 = vmatprep.subr.mxu0 0.0
      %353 = vmatpush1.msra.mxu0 0.0
      %354 = vmatprep.subr.mxu0 0.0
      %355 = vmatpush1.msra.mxu0 0.0
      %356 = vmatprep.subr.mxu0 0.0
      %357 = vmatpush1.msra.mxu0 0.0
      %358 = vmatprep.subr.mxu0 0.0
      %359 = vmatpush1.msra.mxu0 0.0
      %360 = vmatprep.subr.mxu0 0.0
      %361 = vmatpush1.msra.mxu0 0.0
      %362 = vmatprep.subr.mxu0 0.0
      %363 = vmatpush1.msra.mxu0 0.0
      %364 = vmatprep.subr.mxu0 0.0
      %365 = vmatpush1.msra.mxu0 0.0
      %366 = vmatprep.subr.mxu0 0.0
      %367 = vmatpush1.msra.mxu0 0.0
      %368 = vmatprep.subr.mxu0 0.0
      %369 = vmatpush1.msra.mxu0 0.0
      %370 = vmatprep.subr.mxu0 0.0
      %371 = vmatpush1.msra.mxu0 0.0
      %372 = vmatprep.subr.mxu0 0.0
      %373 = vmatpush1.msra.mxu0 0.0
      %374 = vmatprep.subr.mxu0 0.0
      %375 = vmatpush1.msra.mxu0 %v340
      %376 = vmatprep.subr.mxu0 0.0
      %377 = vmatpush1.msra.mxu0 %v338
      %378 = vmatprep.subr.mxu0 0.0
      %379 = vmatpush2.msra.mxu0 0.0
      %380 = vmatprep.subr.mxu0 0.0
      %381 = vmatpush2.msra.mxu0 0.0
      %382 = vmatprep.subr.mxu0 0.0
      %383 = vmatpush2.msra.mxu0 0.0
      %384 = vmatprep.subr.mxu0 0.0
      %385 = vmatpush2.msra.mxu0 0.0
      %386 = vmatprep.subr.mxu0 0.0
      %387 = vmatpush2.msra.mxu0 0.0
      %388 = vmatprep.subr.mxu0 0.0
      %389 = vmatpush2.msra.mxu0 0.0
      %390 = vmatprep.subr.mxu0 0.0
      %391 = vmatpush2.msra.mxu0 0.0
      %392 = vmatprep.subr.mxu0 0.0
      %393 = vmatpush2.msra.mxu0 0.0
      %394 = vmatprep.subr.mxu0 0.0
      %395 = vmatpush2.msra.mxu0 0.0
      %396 = vmatprep.subr.mxu0 0.0
      %397 = vmatpush2.msra.mxu0 0.0
      %398 = vmatprep.subr.mxu0 0.0
      %399 = vmatpush2.msra.mxu0 0.0
      %400 = vmatprep.subr.mxu0 0.0
      %401 = vmatpush2.msra.mxu0 0.0
      %402 = vmatprep.subr.mxu0 0.0
      %403 = vmatpush2.msra.mxu0 0.0
      %404 = vmatprep.subr.mxu0 0.0
      %405 = vmatpush2.msra.mxu0 0.0
      %406 = vmatprep.subr.mxu0 0.0
      %407 = vmatpush2.msra.mxu0 0.0
      %408 = vmatprep.subr.mxu0 0.0
      %409 = vmatpush2.msra.mxu0 0.0
      %410 = vmatprep.mubr.f32.mxu0 0.0
      %411 = vmatmul.mubr.f32.gmra.mxu0 %v344
      %v412 = vpop.f32.mrf.mxu0
      %v413 = vadd.f32 0.0, %v412
      %v414 = vpop.f32.mrf.mxu0
      %415 = vdwg.mxu0
      %416 = vrot.lane.b32.xlu0 %v159, 88
      %v417 = vpop.permute.xlu0 %416
      %418 = vrot.lane.b32.xlu0 %v160, 88
      %v419 = vpop.permute.xlu0 %418
      %420 = vrot.lane.b32.xlu0 %v161, 88
      %v421 = vpop.permute.xlu0 %420
      %v422 = vsel %vm171, %v417, 0
      %v424 = vsel %vm171, %v419, 0
      %v426 = vsel %vm171, %v421, 0
      %428 = vmatprep.subr.mxu0 0.0
      %429 = vmatpush1.xpose.msra.mxu0 0.0
      %430 = vmatprep.subr.mxu0 0.0
      %431 = vmatpush1.xpose.msra.mxu0 0.0
      %432 = vmatprep.subr.mxu0 0.0
      %433 = vmatpush1.xpose.msra.mxu0 0.0
      %434 = vmatprep.subr.mxu0 0.0
      %435 = vmatpush1.xpose.msra.mxu0 0.0
      %436 = vmatprep.subr.mxu0 0.0
      %437 = vmatpush1.xpose.msra.mxu0 0.0
      %438 = vmatprep.subr.mxu0 0.0
      %439 = vmatpush1.xpose.msra.mxu0 0.0
      %440 = vmatprep.subr.mxu0 0.0
      %441 = vmatpush1.xpose.msra.mxu0 0.0
      %442 = vmatprep.subr.mxu0 0.0
      %443 = vmatpush1.xpose.msra.mxu0 0.0
      %444 = vmatprep.subr.mxu0 0.0
      %445 = vmatpush1.xpose.msra.mxu0 0.0
      %446 = vmatprep.subr.mxu0 0.0
      %447 = vmatpush1.xpose.msra.mxu0 0.0
      %448 = vmatprep.subr.mxu0 0.0
      %449 = vmatpush1.xpose.msra.mxu0 0.0
      %450 = vmatprep.subr.mxu0 0.0
      %451 = vmatpush1.xpose.msra.mxu0 0.0
      %452 = vmatprep.subr.mxu0 0.0
      %453 = vmatpush1.xpose.msra.mxu0 0.0
      %454 = vmatprep.subr.mxu0 0.0
      %455 = vmatpush1.xpose.msra.mxu0 0.0
      %456 = vmatprep.subr.mxu0 0.0
      %457 = vmatpush1.xpose.msra.mxu0 %v426
      %458 = vmatprep.subr.mxu0 0.0
      %459 = vmatpush1.xpose.msra.mxu0 %v424
      %460 = vmatprep.subr.mxu0 0.0
      %461 = vmatpush2.xpose.msra.mxu0 0.0
      %462 = vmatprep.subr.mxu0 0.0
      %463 = vmatpush2.xpose.msra.mxu0 0.0
      %464 = vmatprep.subr.mxu0 0.0
      %465 = vmatpush2.xpose.msra.mxu0 0.0
      %466 = vmatprep.subr.mxu0 0.0
      %467 = vmatpush2.xpose.msra.mxu0 0.0
      %468 = vmatprep.subr.mxu0 0.0
      %469 = vmatpush2.xpose.msra.mxu0 0.0
      %470 = vmatprep.subr.mxu0 0.0
      %471 = vmatpush2.xpose.msra.mxu0 0.0
      %472 = vmatprep.subr.mxu0 0.0
      %473 = vmatpush2.xpose.msra.mxu0 0.0
      %474 = vmatprep.subr.mxu0 0.0
      %475 = vmatpush2.xpose.msra.mxu0 0.0
      %476 = vmatprep.subr.mxu0 0.0
      %477 = vmatpush2.xpose.msra.mxu0 0.0
      %478 = vmatprep.subr.mxu0 0.0
      %479 = vmatpush2.xpose.msra.mxu0 0.0
      %480 = vmatprep.subr.mxu0 0.0
      %481 = vmatpush2.xpose.msra.mxu0 0.0
      %482 = vmatprep.subr.mxu0 0.0
      %483 = vmatpush2.xpose.msra.mxu0 0.0
      %484 = vmatprep.subr.mxu0 0.0
      %485 = vmatpush2.xpose.msra.mxu0 0.0
      %486 = vmatprep.subr.mxu0 0.0
      %487 = vmatpush2.xpose.msra.mxu0 0.0
      %488 = vmatprep.subr.mxu0 0.0
      %489 = vmatpush2.xpose.msra.mxu0 0.0
      %490 = vmatprep.subr.mxu0 0.0
      %491 = vmatpush2.xpose.msra.mxu0 0.0
      %492 = vmatprep.mubr.f32.mxu0 0.0
      %493 = vmatmul.mubr.f32.gmra.mxu0 %v422
      %v494 = vpop.f32.mrf.mxu0
      %v495 = vadd.f32 0.0, %v494
      %v496 = vpop.f32.mrf.mxu0
      %497 = vdwg.mxu0
      %498 = vrot.lane.b32.xlu0 %v159, 120
      %v499 = vpop.permute.xlu0 %498
      %500 = vrot.lane.b32.xlu0 %v160, 120
      %v501 = vpop.permute.xlu0 %500
      %502 = vrot.lane.b32.xlu0 %v161, 120
      %v503 = vpop.permute.xlu0 %502
      %v504 = vsel %vm171, %v499, 0
      %v506 = vsel %vm171, %v501, 0
      %v508 = vsel %vm171, %v503, 0
      %510 = vmatprep.subr.mxu0 0.0
      %511 = vmatpush1.xpose.msra.mxu0 0.0
      %512 = vmatprep.subr.mxu0 0.0
      %513 = vmatpush1.xpose.msra.mxu0 0.0
      %514 = vmatprep.subr.mxu0 0.0
      %515 = vmatpush1.xpose.msra.mxu0 0.0
      %516 = vmatprep.subr.mxu0 0.0
      %517 = vmatpush1.xpose.msra.mxu0 0.0
      %518 = vmatprep.subr.mxu0 0.0
      %519 = vmatpush1.xpose.msra.mxu0 0.0
      %520 = vmatprep.subr.mxu0 0.0
      %521 = vmatpush1.xpose.msra.mxu0 0.0
      %522 = vmatprep.subr.mxu0 0.0
      %523 = vmatpush1.xpose.msra.mxu0 0.0
      %524 = vmatprep.subr.mxu0 0.0
      %525 = vmatpush1.xpose.msra.mxu0 0.0
      %526 = vmatprep.subr.mxu0 0.0
      %527 = vmatpush1.xpose.msra.mxu0 0.0
      %528 = vmatprep.subr.mxu0 0.0
      %529 = vmatpush1.xpose.msra.mxu0 0.0
      %530 = vmatprep.subr.mxu0 0.0
      %531 = vmatpush1.xpose.msra.mxu0 0.0
      %532 = vmatprep.subr.mxu0 0.0
      %533 = vmatpush1.xpose.msra.mxu0 0.0
      %534 = vmatprep.subr.mxu0 0.0
      %535 = vmatpush1.xpose.msra.mxu0 0.0
      %536 = vmatprep.subr.mxu0 0.0
      %537 = vmatpush1.xpose.msra.mxu0 0.0
      %538 = vmatprep.subr.mxu0 0.0
      %539 = vmatpush1.xpose.msra.mxu0 %v508
      %540 = vmatprep.subr.mxu0 0.0
      %541 = vmatpush1.xpose.msra.mxu0 %v506
      %542 = vmatprep.subr.mxu0 0.0
      %543 = vmatpush2.xpose.msra.mxu0 0.0
      %544 = vmatprep.subr.mxu0 0.0
      %545 = vmatpush2.xpose.msra.mxu0 0.0
      %546 = vmatprep.subr.mxu0 0.0
      %547 = vmatpush2.xpose.msra.mxu0 0.0
      %548 = vmatprep.subr.mxu0 0.0
      %549 = vmatpush2.xpose.msra.mxu0 0.0
      %550 = vmatprep.subr.mxu0 0.0
      %551 = vmatpush2.xpose.msra.mxu0 0.0
      %552 = vmatprep.subr.mxu0 0.0
      %553 = vmatpush2.xpose.msra.mxu0 0.0
      %554 = vmatprep.subr.mxu0 0.0
      %555 = vmatpush2.xpose.msra.mxu0 0.0
      %556 = vmatprep.subr.mxu0 0.0
      %557 = vmatpush2.xpose.msra.mxu0 0.0
      %558 = vmatprep.subr.mxu0 0.0
      %559 = vmatpush2.xpose.msra.mxu0 0.0
      %560 = vmatprep.subr.mxu0 0.0
      %561 = vmatpush2.xpose.msra.mxu0 0.0
      %562 = vmatprep.subr.mxu0 0.0
      %563 = vmatpush2.xpose.msra.mxu0 0.0
      %564 = vmatprep.subr.mxu0 0.0
      %565 = vmatpush2.xpose.msra.mxu0 0.0
      %566 = vmatprep.subr.mxu0 0.0
      %567 = vmatpush2.xpose.msra.mxu0 0.0
      %568 = vmatprep.subr.mxu0 0.0
      %569 = vmatpush2.xpose.msra.mxu0 0.0
      %570 = vmatprep.subr.mxu0 0.0
      %571 = vmatpush2.xpose.msra.mxu0 0.0
      %572 = vmatprep.subr.mxu0 0.0
      %573 = vmatpush2.xpose.msra.mxu0 0.0
      %574 = vmatprep.mubr.f32.mxu0 0.0
      %575 = vmatmul.mubr.f32.gmra.mxu0 %v504
      %v576 = vpop.f32.mrf.mxu0
      %v577 = vadd.f32 %v495, %v576
      %v578 = vpop.f32.mrf.mxu0
      %579 = vdwg.mxu0
      %v580 = vmul.f32 %v577, 0.25
      %v581 = vsel %vm325, %v580, -inf
      %582 = vmax.xlane.f32.xlu0 %v581
      %v583 = vpop.xlane.xlu0 %582
      %v584 = vsub.f32 %v580, %v583
      %v585 = vmul.f32 %v584, 1.442695
      %v586 = vpow.pop %v585
      %v587 = vsel %vm325, %v586, 0.0
      %588 = vadd.xlane.f32.xlu0 %v587
      %v589 = vpop.xlane.xlu0 %588
      %v590 = vrcp.pop %v589
      %v591 = vmul.f32 %v586, %v590
      %592 = vrot.lane.b32.xlu0 %v160, 56
      %v593 = vpop.permute.xlu0 %592
      %594 = vrot.lane.b32.xlu0 %v161, 56
      %v595 = vpop.permute.xlu0 %594
      %v599 = vsel %vm325, %v591, 0
      %601 = vmatprep.subr.mxu0 0.0
      %602 = vmatpush1.msra.mxu0 0.0
      %603 = vmatprep.subr.mxu0 0.0
      %604 = vmatpush1.msra.mxu0 0.0
      %605 = vmatprep.subr.mxu0 0.0
      %606 = vmatpush1.msra.mxu0 0.0
      %607 = vmatprep.subr.mxu0 0.0
      %608 = vmatpush1.msra.mxu0 0.0
      %609 = vmatprep.subr.mxu0 0.0
      %610 = vmatpush1.msra.mxu0 0.0
      %611 = vmatprep.subr.mxu0 0.0
      %612 = vmatpush1.msra.mxu0 0.0
      %613 = vmatprep.subr.mxu0 0.0
      %614 = vmatpush1.msra.mxu0 0.0
      %615 = vmatprep.subr.mxu0 0.0
      %616 = vmatpush1.msra.mxu0 0.0
      %617 = vmatprep.subr.mxu0 0.0
      %618 = vmatpush1.msra.mxu0 0.0
      %619 = vmatprep.subr.mxu0 0.0
      %620 = vmatpush1.msra.mxu0 0.0
      %621 = vmatprep.subr.mxu0 0.0
      %622 = vmatpush1.msra.mxu0 0.0
      %623 = vmatprep.subr.mxu0 0.0
      %624 = vmatpush1.msra.mxu0 0.0
      %625 = vmatprep.subr.mxu0 0.0
      %626 = vmatpush1.msra.mxu0 0.0
      %627 = vmatprep.subr.mxu0 0.0
      %628 = vmatpush1.msra.mxu0 0.0
      %629 = vmatprep.subr.mxu0 0.0
      %630 = vmatpush1.msra.mxu0 %v595
      %631 = vmatprep.subr.mxu0 0.0
      %632 = vmatpush1.msra.mxu0 %v593
      %633 = vmatprep.subr.mxu0 0.0
      %634 = vmatpush2.msra.mxu0 0.0
      %635 = vmatprep.subr.mxu0 0.0
      %636 = vmatpush2.msra.mxu0 0.0
      %637 = vmatprep.subr.mxu0 0.0
      %638 = vmatpush2.msra.mxu0 0.0
      %639 = vmatprep.subr.mxu0 0.0
      %640 = vmatpush2.msra.mxu0 0.0
      %641 = vmatprep.subr.mxu0 0.0
      %642 = vmatpush2.msra.mxu0 0.0
      %643 = vmatprep.subr.mxu0 0.0
      %644 = vmatpush2.msra.mxu0 0.0
      %645 = vmatprep.subr.mxu0 0.0
      %646 = vmatpush2.msra.mxu0 0.0
      %647 = vmatprep.subr.mxu0 0.0
      %648 = vmatpush2.msra.mxu0 0.0
      %649 = vmatprep.subr.mxu0 0.0
      %650 = vmatpush2.msra.mxu0 0.0
      %651 = vmatprep.subr.mxu0 0.0
      %652 = vmatpush2.msra.mxu0 0.0
      %653 = vmatprep.subr.mxu0 0.0
      %654 = vmatpush2.msra.mxu0 0.0
      %655 = vmatprep.subr.mxu0 0.0
      %656 = vmatpush2.msra.mxu0 0.0
      %657 = vmatprep.subr.mxu0 0.0
      %658 = vmatpush2.msra.mxu0 0.0
      %659 = vmatprep.subr.mxu0 0.0
      %660 = vmatpush2.msra.mxu0 0.0
      %661 = vmatprep.subr.mxu0 0.0
      %662 = vmatpush2.msra.mxu0 0.0
      %663 = vmatprep.subr.mxu0 0.0
      %664 = vmatpush2.msra.mxu0 0.0
      %665 = vmatprep.mubr.f32.mxu0 0.0
      %666 = vmatmul.mubr.f32.gmra.mxu0 %v599
      %v667 = vpop.f32.mrf.mxu0
      %v668 = vadd.f32 0.0, %v667
      %v669 = vpop.f32.mrf.mxu0
      %670 = vdwg.mxu0
      %671 = vrot.lane.b32.xlu0 %v159, 80
      %v672 = vpop.permute.xlu0 %671
      %673 = vrot.lane.b32.xlu0 %v160, 80
      %v674 = vpop.permute.xlu0 %673
      %675 = vrot.lane.b32.xlu0 %v161, 80
      %v676 = vpop.permute.xlu0 %675
      %v677 = vsel %vm171, %v672, 0
      %v679 = vsel %vm171, %v674, 0
      %v681 = vsel %vm171, %v676, 0
      %683 = vmatprep.subr.mxu0 0.0
      %684 = vmatpush1.xpose.msra.mxu0 0.0
      %685 = vmatprep.subr.mxu0 0.0
      %686 = vmatpush1.xpose.msra.mxu0 0.0
      %687 = vmatprep.subr.mxu0 0.0
      %688 = vmatpush1.xpose.msra.mxu0 0.0
      %689 = vmatprep.subr.mxu0 0.0
      %690 = vmatpush1.xpose.msra.mxu0 0.0
      %691 = vmatprep.subr.mxu0 0.0
      %692 = vmatpush1.xpose.msra.mxu0 0.0
      %693 = vmatprep.subr.mxu0 0.0
      %694 = vmatpush1.xpose.msra.mxu0 0.0
      %695 = vmatprep.subr.mxu0 0.0
      %696 = vmatpush1.xpose.msra.mxu0 0.0
      %697 = vmatprep.subr.mxu0 0.0
      %698 = vmatpush1.xpose.msra.mxu0 0.0
      %699 = vmatprep.subr.mxu0 0.0
      %700 = vmatpush1.xpose.msra.mxu0 0.0
      %701 = vmatprep.subr.mxu0 0.0
      %702 = vmatpush1.xpose.msra.mxu0 0.0
      %703 = vmatprep.subr.mxu0 0.0
      %704 = vmatpush1.xpose.msra.mxu0 0.0
      %705 = vmatprep.subr.mxu0 0.0
      %706 = vmatpush1.xpose.msra.mxu0 0.0
      %707 = vmatprep.subr.mxu0 0.0
      %708 = vmatpush1.xpose.msra.mxu0 0.0
      %709 = vmatprep.subr.mxu0 0.0
      %710 = vmatpush1.xpose.msra.mxu0 0.0
      %711 = vmatprep.subr.mxu0 0.0
      %712 = vmatpush1.xpose.msra.mxu0 %v681
      %713 = vmatprep.subr.mxu0 0.0
      %714 = vmatpush1.xpose.msra.mxu0 %v679
      %715 = vmatprep.subr.mxu0 0.0
      %716 = vmatpush2.xpose.msra.mxu0 0.0
      %717 = vmatprep.subr.mxu0 0.0
      %718 = vmatpush2.xpose.msra.mxu0 0.0
      %719 = vmatprep.subr.mxu0 0.0
      %720 = vmatpush2.xpose.msra.mxu0 0.0
      %721 = vmatprep.subr.mxu0 0.0
      %722 = vmatpush2.xpose.msra.mxu0 0.0
      %723 = vmatprep.subr.mxu0 0.0
      %724 = vmatpush2.xpose.msra.mxu0 0.0
      %725 = vmatprep.subr.mxu0 0.0
      %726 = vmatpush2.xpose.msra.mxu0 0.0
      %727 = vmatprep.subr.mxu0 0.0
      %728 = vmatpush2.xpose.msra.mxu0 0.0
      %729 = vmatprep.subr.mxu0 0.0
      %730 = vmatpush2.xpose.msra.mxu0 0.0
      %731 = vmatprep.subr.mxu0 0.0
      %732 = vmatpush2.xpose.msra.mxu0 0.0
      %733 = vmatprep.subr.mxu0 0.0
      %734 = vmatpush2.xpose.msra.mxu0 0.0
      %735 = vmatprep.subr.mxu0 0.0
      %736 = vmatpush2.xpose.msra.mxu0 0.0
      %737 = vmatprep.subr.mxu0 0.0
      %738 = vmatpush2.xpose.msra.mxu0 0.0
      %739 = vmatprep.subr.mxu0 0.0
      %740 = vmatpush2.xpose.msra.mxu0 0.0
      %741 = vmatprep.subr.mxu0 0.0
      %742 = vmatpush2.xpose.msra.mxu0 0.0
      %743 = vmatprep.subr.mxu0 0.0
      %744 = vmatpush2.xpose.msra.mxu0 0.0
      %745 = vmatprep.subr.mxu0 0.0
      %746 = vmatpush2.xpose.msra.mxu0 0.0
      %747 = vmatprep.mubr.f32.mxu0 0.0
      %748 = vmatmul.mubr.f32.gmra.mxu0 %v677
      %v749 = vpop.f32.mrf.mxu0
      %v750 = vadd.f32 0.0, %v749
      %v751 = vpop.f32.mrf.mxu0
      %752 = vdwg.mxu0
      %753 = vrot.lane.b32.xlu0 %v159, 112
      %v754 = vpop.permute.xlu0 %753
      %755 = vrot.lane.b32.xlu0 %v160, 112
      %v756 = vpop.permute.xlu0 %755
      %757 = vrot.lane.b32.xlu0 %v161, 112
      %v758 = vpop.permute.xlu0 %757
      %v759 = vsel %vm171, %v754, 0
      %v761 = vsel %vm171, %v756, 0
      %v763 = vsel %vm171, %v758, 0
      %765 = vmatprep.subr.mxu0 0.0
      %766 = vmatpush1.xpose.msra.mxu0 0.0
      %767 = vmatprep.subr.mxu0 0.0
      %768 = vmatpush1.xpose.msra.mxu0 0.0
      %769 = vmatprep.subr.mxu0 0.0
      %770 = vmatpush1.xpose.msra.mxu0 0.0
      %771 = vmatprep.subr.mxu0 0.0
      %772 = vmatpush1.xpose.msra.mxu0 0.0
      %773 = vmatprep.subr.mxu0 0.0
      %774 = vmatpush1.xpose.msra.mxu0 0.0
      %775 = vmatprep.subr.mxu0 0.0
      %776 = vmatpush1.xpose.msra.mxu0 0.0
      %777 = vmatprep.subr.mxu0 0.0
      %778 = vmatpush1.xpose.msra.mxu0 0.0
      %779 = vmatprep.subr.mxu0 0.0
      %780 = vmatpush1.xpose.msra.mxu0 0.0
      %781 = vmatprep.subr.mxu0 0.0
      %782 = vmatpush1.xpose.msra.mxu0 0.0
      %783 = vmatprep.subr.mxu0 0.0
      %784 = vmatpush1.xpose.msra.mxu0 0.0
      %785 = vmatprep.subr.mxu0 0.0
      %786 = vmatpush1.xpose.msra.mxu0 0.0
      %787 = vmatprep.subr.mxu0 0.0
      %788 = vmatpush1.xpose.msra.mxu0 0.0
      %789 = vmatprep.subr.mxu0 0.0
      %790 = vmatpush1.xpose.msra.mxu0 0.0
      %791 = vmatprep.subr.mxu0 0.0
      %792 = vmatpush1.xpose.msra.mxu0 0.0
      %793 = vmatprep.subr.mxu0 0.0
      %794 = vmatpush1.xpose.msra.mxu0 %v763
      %795 = vmatprep.subr.mxu0 0.0
      %796 = vmatpush1.xpose.msra.mxu0 %v761
      %797 = vmatprep.subr.mxu0 0.0
      %798 = vmatpush2.xpose.msra.mxu0 0.0
      %799 = vmatprep.subr.mxu0 0.0
      %800 = vmatpush2.xpose.msra.mxu0 0.0
      %801 = vmatprep.subr.mxu0 0.0
      %802 = vmatpush2.xpose.msra.mxu0 0.0
      %803 = vmatprep.subr.mxu0 0.0
      %804 = vmatpush2.xpose.msra.mxu0 0.0
      %805 = vmatprep.subr.mxu0 0.0
      %806 = vmatpush2.xpose.msra.mxu0 0.0
      %807 = vmatprep.subr.mxu0 0.0
      %808 = vmatpush2.xpose.msra.mxu0 0.0
      %809 = vmatprep.subr.mxu0 0.0
      %810 = vmatpush2.xpose.msra.mxu0 0.0
      %811 = vmatprep.subr.mxu0 0.0
      %812 = vmatpush2.xpose.msra.mxu0 0.0
      %813 = vmatprep.subr.mxu0 0.0
      %814 = vmatpush2.xpose.msra.mxu0 0.0
      %815 = vmatprep.subr.mxu0 0.0
      %816 = vmatpush2.xpose.msra.mxu0 0.0
      %817 = vmatprep.subr.mxu0 0.0
      %818 = vmatpush2.xpose.msra.mxu0 0.0
      %819 = vmatprep.subr.mxu0 0.0
      %820 = vmatpush2.xpose.msra.mxu0 0.0
      %821 = vmatprep.subr.mxu0 0.0
      %822 = vmatpush2.xpose.msra.mxu0 0.0
      %823 = vmatprep.subr.mxu0 0.0
      %824 = vmatpush2.xpose.msra.mxu0 0.0
      %825 = vmatprep.subr.mxu0 0.0
      %826 = vmatpush2.xpose.msra.mxu0 0.0
      %827 = vmatprep.subr.mxu0 0.0
      %828 = vmatpush2.xpose.msra.mxu0 0.0
      %829 = vmatprep.mubr.f32.mxu0 0.0
      %830 = vmatmul.mubr.f32.gmra.mxu0 %v759
      %v831 = vpop.f32.mrf.mxu0
      %v832 = vadd.f32 %v750, %v831
      %v833 = vpop.f32.mrf.mxu0
      %834 = vdwg.mxu0
      %v835 = vmul.f32 %v832, 0.25
      %v836 = vsel %vm325, %v835, -inf
      %837 = vmax.xlane.f32.xlu0 %v836
      %v838 = vpop.xlane.xlu0 %837
      %v839 = vsub.f32 %v835, %v838
      %v840 = vmul.f32 %v839, 1.442695
      %v841 = vpow.pop %v840
      %v842 = vsel %vm325, %v841, 0.0
      %843 = vadd.xlane.f32.xlu0 %v842
      %v844 = vpop.xlane.xlu0 %843
      %v845 = vrcp.pop %v844
      %v846 = vmul.f32 %v841, %v845
      %847 = vrot.lane.b32.xlu0 %v160, 48
      %v848 = vpop.permute.xlu0 %847
      %849 = vrot.lane.b32.xlu0 %v161, 48
      %v850 = vpop.permute.xlu0 %849
      %v854 = vsel %vm325, %v846, 0
      %856 = vmatprep.subr.mxu0 0.0
      %857 = vmatpush1.msra.mxu0 0.0
      %858 = vmatprep.subr.mxu0 0.0
      %859 = vmatpush1.msra.mxu0 0.0
      %860 = vmatprep.subr.mxu0 0.0
      %861 = vmatpush1.msra.mxu0 0.0
      %862 = vmatprep.subr.mxu0 0.0
      %863 = vmatpush1.msra.mxu0 0.0
      %864 = vmatprep.subr.mxu0 0.0
      %865 = vmatpush1.msra.mxu0 0.0
      %866 = vmatprep.subr.mxu0 0.0
      %867 = vmatpush1.msra.mxu0 0.0
      %868 = vmatprep.subr.mxu0 0.0
      %869 = vmatpush1.msra.mxu0 0.0
      %870 = vmatprep.subr.mxu0 0.0
      %871 = vmatpush1.msra.mxu0 0.0
      %872 = vmatprep.subr.mxu0 0.0
      %873 = vmatpush1.msra.mxu0 0.0
      %874 = vmatprep.subr.mxu0 0.0
      %875 = vmatpush1.msra.mxu0 0.0
      %876 = vmatprep.subr.mxu0 0.0
      %877 = vmatpush1.msra.mxu0 0.0
      %878 = vmatprep.subr.mxu0 0.0
      %879 = vmatpush1.msra.mxu0 0.0
      %880 = vmatprep.subr.mxu0 0.0
      %881 = vmatpush1.msra.mxu0 0.0
      %882 = vmatprep.subr.mxu0 0.0
      %883 = vmatpush1.msra.mxu0 0.0
      %884 = vmatprep.subr.mxu0 0.0
      %885 = vmatpush1.msra.mxu0 %v850
      %886 = vmatprep.subr.mxu0 0.0
      %887 = vmatpush1.msra.mxu0 %v848
      %888 = vmatprep.subr.mxu0 0.0
      %889 = vmatpush2.msra.mxu0 0.0
      %890 = vmatprep.subr.mxu0 0.0
      %891 = vmatpush2.msra.mxu0 0.0
      %892 = vmatprep.subr.mxu0 0.0
      %893 = vmatpush2.msra.mxu0 0.0
      %894 = vmatprep.subr.mxu0 0.0
      %895 = vmatpush2.msra.mxu0 0.0
      %896 = vmatprep.subr.mxu0 0.0
      %897 = vmatpush2.msra.mxu0 0.0
      %898 = vmatprep.subr.mxu0 0.0
      %899 = vmatpush2.msra.mxu0 0.0
      %900 = vmatprep.subr.mxu0 0.0
      %901 = vmatpush2.msra.mxu0 0.0
      %902 = vmatprep.subr.mxu0 0.0
      %903 = vmatpush2.msra.mxu0 0.0
      %904 = vmatprep.subr.mxu0 0.0
      %905 = vmatpush2.msra.mxu0 0.0
      %906 = vmatprep.subr.mxu0 0.0
      %907 = vmatpush2.msra.mxu0 0.0
      %908 = vmatprep.subr.mxu0 0.0
      %909 = vmatpush2.msra.mxu0 0.0
      %910 = vmatprep.subr.mxu0 0.0
      %911 = vmatpush2.msra.mxu0 0.0
      %912 = vmatprep.subr.mxu0 0.0
      %913 = vmatpush2.msra.mxu0 0.0
      %914 = vmatprep.subr.mxu0 0.0
      %915 = vmatpush2.msra.mxu0 0.0
      %916 = vmatprep.subr.mxu0 0.0
      %917 = vmatpush2.msra.mxu0 0.0
      %918 = vmatprep.subr.mxu0 0.0
      %919 = vmatpush2.msra.mxu0 0.0
      %920 = vmatprep.mubr.f32.mxu0 0.0
      %921 = vmatmul.mubr.f32.gmra.mxu0 %v854
      %v922 = vpop.f32.mrf.mxu0
      %v923 = vadd.f32 0.0, %v922
      %v924 = vpop.f32.mrf.mxu0
      %925 = vdwg.mxu0
      %926 = vrot.lane.b32.xlu0 %v159, 72
      %v927 = vpop.permute.xlu0 %926
      %928 = vrot.lane.b32.xlu0 %v160, 72
      %v929 = vpop.permute.xlu0 %928
      %930 = vrot.lane.b32.xlu0 %v161, 72
      %v931 = vpop.permute.xlu0 %930
      %v932 = vsel %vm171, %v927, 0
      %v934 = vsel %vm171, %v929, 0
      %v936 = vsel %vm171, %v931, 0
      %938 = vmatprep.subr.mxu0 0.0
      %939 = vmatpush1.xpose.msra.mxu0 0.0
      %940 = vmatprep.subr.mxu0 0.0
      %941 = vmatpush1.xpose.msra.mxu0 0.0
      %942 = vmatprep.subr.mxu0 0.0
      %943 = vmatpush1.xpose.msra.mxu0 0.0
      %944 = vmatprep.subr.mxu0 0.0
      %945 = vmatpush1.xpose.msra.mxu0 0.0
      %946 = vmatprep.subr.mxu0 0.0
      %947 = vmatpush1.xpose.msra.mxu0 0.0
      %948 = vmatprep.subr.mxu0 0.0
      %949 = vmatpush1.xpose.msra.mxu0 0.0
      %950 = vmatprep.subr.mxu0 0.0
      %951 = vmatpush1.xpose.msra.mxu0 0.0
      %952 = vmatprep.subr.mxu0 0.0
      %953 = vmatpush1.xpose.msra.mxu0 0.0
      %954 = vmatprep.subr.mxu0 0.0
      %955 = vmatpush1.xpose.msra.mxu0 0.0
      %956 = vmatprep.subr.mxu0 0.0
      %957 = vmatpush1.xpose.msra.mxu0 0.0
      %958 = vmatprep.subr.mxu0 0.0
      %959 = vmatpush1.xpose.msra.mxu0 0.0
      %960 = vmatprep.subr.mxu0 0.0
      %961 = vmatpush1.xpose.msra.mxu0 0.0
      %962 = vmatprep.subr.mxu0 0.0
      %963 = vmatpush1.xpose.msra.mxu0 0.0
      %964 = vmatprep.subr.mxu0 0.0
      %965 = vmatpush1.xpose.msra.mxu0 0.0
      %966 = vmatprep.subr.mxu0 0.0
      %967 = vmatpush1.xpose.msra.mxu0 %v936
      %968 = vmatprep.subr.mxu0 0.0
      %969 = vmatpush1.xpose.msra.mxu0 %v934
      %970 = vmatprep.subr.mxu0 0.0
      %971 = vmatpush2.xpose.msra.mxu0 0.0
      %972 = vmatprep.subr.mxu0 0.0
      %973 = vmatpush2.xpose.msra.mxu0 0.0
      %974 = vmatprep.subr.mxu0 0.0
      %975 = vmatpush2.xpose.msra.mxu0 0.0
      %976 = vmatprep.subr.mxu0 0.0
      %977 = vmatpush2.xpose.msra.mxu0 0.0
      %978 = vmatprep.subr.mxu0 0.0
      %979 = vmatpush2.xpose.msra.mxu0 0.0
      %980 = vmatprep.subr.mxu0 0.0
      %981 = vmatpush2.xpose.msra.mxu0 0.0
      %982 = vmatprep.subr.mxu0 0.0
      %983 = vmatpush2.xpose.msra.mxu0 0.0
      %984 = vmatprep.subr.mxu0 0.0
      %985 = vmatpush2.xpose.msra.mxu0 0.0
      %986 = vmatprep.subr.mxu0 0.0
      %987 = vmatpush2.xpose.msra.mxu0 0.0
      %988 = vmatprep.subr.mxu0 0.0
      %989 = vmatpush2.xpose.msra.mxu0 0.0
      %990 = vmatprep.subr.mxu0 0.0
      %991 = vmatpush2.xpose.msra.mxu0 0.0
      %992 = vmatprep.subr.mxu0 0.0
      %993 = vmatpush2.xpose.msra.mxu0 0.0
      %994 = vmatprep.subr.mxu0 0.0
      %995 = vmatpush2.xpose.msra.mxu0 0.0
      %996 = vmatprep.subr.mxu0 0.0
      %997 = vmatpush2.xpose.msra.mxu0 0.0
      %998 = vmatprep.subr.mxu0 0.0
      %999 = vmatpush2.xpose.msra.mxu0 0.0
      %1000 = vmatprep.subr.mxu0 0.0
      %1001 = vmatpush2.xpose.msra.mxu0 0.0
      %1002 = vmatprep.mubr.f32.mxu0 0.0
      %1003 = vmatmul.mubr.f32.gmra.mxu0 %v932
      %v1004 = vpop.f32.mrf.mxu0
      %v1005 = vadd.f32 0.0, %v1004
      %v1006 = vpop.f32.mrf.mxu0
      %1007 = vdwg.mxu0
      %1008 = vrot.lane.b32.xlu0 %v159, 104
      %v1009 = vpop.permute.xlu0 %1008
      %1010 = vrot.lane.b32.xlu0 %v160, 104
      %v1011 = vpop.permute.xlu0 %1010
      %1012 = vrot.lane.b32.xlu0 %v161, 104
      %v1013 = vpop.permute.xlu0 %1012
      %v1014 = vsel %vm171, %v1009, 0
      %v1016 = vsel %vm171, %v1011, 0
      %v1018 = vsel %vm171, %v1013, 0
      %1020 = vmatprep.subr.mxu0 0.0
      %1021 = vmatpush1.xpose.msra.mxu0 0.0
      %1022 = vmatprep.subr.mxu0 0.0
      %1023 = vmatpush1.xpose.msra.mxu0 0.0
      %1024 = vmatprep.subr.mxu0 0.0
      %1025 = vmatpush1.xpose.msra.mxu0 0.0
      %1026 = vmatprep.subr.mxu0 0.0
      %1027 = vmatpush1.xpose.msra.mxu0 0.0
      %1028 = vmatprep.subr.mxu0 0.0
      %1029 = vmatpush1.xpose.msra.mxu0 0.0
      %1030 = vmatprep.subr.mxu0 0.0
      %1031 = vmatpush1.xpose.msra.mxu0 0.0
      %1032 = vmatprep.subr.mxu0 0.0
      %1033 = vmatpush1.xpose.msra.mxu0 0.0
      %1034 = vmatprep.subr.mxu0 0.0
      %1035 = vmatpush1.xpose.msra.mxu0 0.0
      %1036 = vmatprep.subr.mxu0 0.0
      %1037 = vmatpush1.xpose.msra.mxu0 0.0
      %1038 = vmatprep.subr.mxu0 0.0
      %1039 = vmatpush1.xpose.msra.mxu0 0.0
      %1040 = vmatprep.subr.mxu0 0.0
      %1041 = vmatpush1.xpose.msra.mxu0 0.0
      %1042 = vmatprep.subr.mxu0 0.0
      %1043 = vmatpush1.xpose.msra.mxu0 0.0
      %1044 = vmatprep.subr.mxu0 0.0
      %1045 = vmatpush1.xpose.msra.mxu0 0.0
      %1046 = vmatprep.subr.mxu0 0.0
      %1047 = vmatpush1.xpose.msra.mxu0 0.0
      %1048 = vmatprep.subr.mxu0 0.0
      %1049 = vmatpush1.xpose.msra.mxu0 %v1018
      %1050 = vmatprep.subr.mxu0 0.0
      %1051 = vmatpush1.xpose.msra.mxu0 %v1016
      %1052 = vmatprep.subr.mxu0 0.0
      %1053 = vmatpush2.xpose.msra.mxu0 0.0
      %1054 = vmatprep.subr.mxu0 0.0
      %1055 = vmatpush2.xpose.msra.mxu0 0.0
      %1056 = vmatprep.subr.mxu0 0.0
      %1057 = vmatpush2.xpose.msra.mxu0 0.0
      %1058 = vmatprep.subr.mxu0 0.0
      %1059 = vmatpush2.xpose.msra.mxu0 0.0
      %1060 = vmatprep.subr.mxu0 0.0
      %1061 = vmatpush2.xpose.msra.mxu0 0.0
      %1062 = vmatprep.subr.mxu0 0.0
      %1063 = vmatpush2.xpose.msra.mxu0 0.0
      %1064 = vmatprep.subr.mxu0 0.0
      %1065 = vmatpush2.xpose.msra.mxu0 0.0
      %1066 = vmatprep.subr.mxu0 0.0
      %1067 = vmatpush2.xpose.msra.mxu0 0.0
      %1068 = vmatprep.subr.mxu0 0.0
      %1069 = vmatpush2.xpose.msra.mxu0 0.0
      %1070 = vmatprep.subr.mxu0 0.0
      %1071 = vmatpush2.xpose.msra.mxu0 0.0
      %1072 = vmatprep.subr.mxu0 0.0
      %1073 = vmatpush2.xpose.msra.mxu0 0.0
      %1074 = vmatprep.subr.mxu0 0.0
      %1075 = vmatpush2.xpose.msra.mxu0 0.0
      %1076 = vmatprep.subr.mxu0 0.0
      %1077 = vmatpush2.xpose.msra.mxu0 0.0
      %1078 = vmatprep.subr.mxu0 0.0
      %1079 = vmatpush2.xpose.msra.mxu0 0.0
      %1080 = vmatprep.subr.mxu0 0.0
      %1081 = vmatpush2.xpose.msra.mxu0 0.0
      %1082 = vmatprep.subr.mxu0 0.0
      %1083 = vmatpush2.xpose.msra.mxu0 0.0
      %1084 = vmatprep.mubr.f32.mxu0 0.0
      %1085 = vmatmul.mubr.f32.gmra.mxu0 %v1014
      %v1086 = vpop.f32.mrf.mxu0
      %v1087 = vadd.f32 %v1005, %v1086
      %v1088 = vpop.f32.mrf.mxu0
      %1089 = vdwg.mxu0
      %v1090 = vmul.f32 %v1087, 0.25
      %v1091 = vsel %vm325, %v1090, -inf
      %1092 = vmax.xlane.f32.xlu0 %v1091
      %v1093 = vpop.xlane.xlu0 %1092
      %v1094 = vsub.f32 %v1090, %v1093
      %v1095 = vmul.f32 %v1094, 1.442695
      %v1096 = vpow.pop %v1095
      %v1097 = vsel %vm325, %v1096, 0.0
      %1098 = vadd.xlane.f32.xlu0 %v1097
      %v1099 = vpop.xlane.xlu0 %1098
      %v1100 = vrcp.pop %v1099
      %v1101 = vmul.f32 %v1096, %v1100
      %1102 = vrot.lane.b32.xlu0 %v160, 40
      %v1103 = vpop.permute.xlu0 %1102
      %1104 = vrot.lane.b32.xlu0 %v161, 40
      %v1105 = vpop.permute.xlu0 %1104
      %v1109 = vsel %vm325, %v1101, 0
      %1111 = vmatprep.subr.mxu0 0.0
      %1112 = vmatpush1.msra.mxu0 0.0
      %1113 = vmatprep.subr.mxu0 0.0
      %1114 = vmatpush1.msra.mxu0 0.0
      %1115 = vmatprep.subr.mxu0 0.0
      %1116 = vmatpush1.msra.mxu0 0.0
      %1117 = vmatprep.subr.mxu0 0.0
      %1118 = vmatpush1.msra.mxu0 0.0
      %1119 = vmatprep.subr.mxu0 0.0
      %1120 = vmatpush1.msra.mxu0 0.0
      %1121 = vmatprep.subr.mxu0 0.0
      %1122 = vmatpush1.msra.mxu0 0.0
      %1123 = vmatprep.subr.mxu0 0.0
      %1124 = vmatpush1.msra.mxu0 0.0
      %1125 = vmatprep.subr.mxu0 0.0
      %1126 = vmatpush1.msra.mxu0 0.0
      %1127 = vmatprep.subr.mxu0 0.0
      %1128 = vmatpush1.msra.mxu0 0.0
      %1129 = vmatprep.subr.mxu0 0.0
      %1130 = vmatpush1.msra.mxu0 0.0
      %1131 = vmatprep.subr.mxu0 0.0
      %1132 = vmatpush1.msra.mxu0 0.0
      %1133 = vmatprep.subr.mxu0 0.0
      %1134 = vmatpush1.msra.mxu0 0.0
      %1135 = vmatprep.subr.mxu0 0.0
      %1136 = vmatpush1.msra.mxu0 0.0
      %1137 = vmatprep.subr.mxu0 0.0
      %1138 = vmatpush1.msra.mxu0 0.0
      %1139 = vmatprep.subr.mxu0 0.0
      %1140 = vmatpush1.msra.mxu0 %v1105
      %1141 = vmatprep.subr.mxu0 0.0
      %1142 = vmatpush1.msra.mxu0 %v1103
      %1143 = vmatprep.subr.mxu0 0.0
      %1144 = vmatpush2.msra.mxu0 0.0
      %1145 = vmatprep.subr.mxu0 0.0
      %1146 = vmatpush2.msra.mxu0 0.0
      %1147 = vmatprep.subr.mxu0 0.0
      %1148 = vmatpush2.msra.mxu0 0.0
      %1149 = vmatprep.subr.mxu0 0.0
      %1150 = vmatpush2.msra.mxu0 0.0
      %1151 = vmatprep.subr.mxu0 0.0
      %1152 = vmatpush2.msra.mxu0 0.0
      %1153 = vmatprep.subr.mxu0 0.0
      %1154 = vmatpush2.msra.mxu0 0.0
      %1155 = vmatprep.subr.mxu0 0.0
      %1156 = vmatpush2.msra.mxu0 0.0
      %1157 = vmatprep.subr.mxu0 0.0
      %1158 = vmatpush2.msra.mxu0 0.0
      %1159 = vmatprep.subr.mxu0 0.0
      %1160 = vmatpush2.msra.mxu0 0.0
      %1161 = vmatprep.subr.mxu0 0.0
      %1162 = vmatpush2.msra.mxu0 0.0
      %1163 = vmatprep.subr.mxu0 0.0
      %1164 = vmatpush2.msra.mxu0 0.0
      %1165 = vmatprep.subr.mxu0 0.0
      %1166 = vmatpush2.msra.mxu0 0.0
      %1167 = vmatprep.subr.mxu0 0.0
      %1168 = vmatpush2.msra.mxu0 0.0
      %1169 = vmatprep.subr.mxu0 0.0
      %1170 = vmatpush2.msra.mxu0 0.0
      %1171 = vmatprep.subr.mxu0 0.0
      %1172 = vmatpush2.msra.mxu0 0.0
      %1173 = vmatprep.subr.mxu0 0.0
      %1174 = vmatpush2.msra.mxu0 0.0
      %1175 = vmatprep.mubr.f32.mxu0 0.0
      %1176 = vmatmul.mubr.f32.gmra.mxu0 %v1109
      %v1177 = vpop.f32.mrf.mxu0
      %v1178 = vadd.f32 0.0, %v1177
      %v1179 = vpop.f32.mrf.mxu0
      %1180 = vdwg.mxu0
      %1182 = vrot.lane.b32.xlu0 %v668, 8
      %v1183 = vpop.permute.xlu0 %1182
      %1186 = vrot.lane.b32.xlu0 %v923, 16
      %v1187 = vpop.permute.xlu0 %1186
      %1190 = vrot.lane.b32.xlu0 %v1178, 24
      %v1191 = vpop.permute.xlu0 %1190
      %v1193 = vsel %vm171, %v413, %v1183
      %v1194 = vsel %vm325, %v1193, %v1187
      %vm1195 = vcmask 195584
      %v1196 = vsel %vm1195, %v1194, %v1191
      %vm1197 = vcmask 261120
      %1198 = vst.msk [vmem:[%s158] sm:$0xff] %vm1197, %v1196
      %p1199 = scmp.lt.s32.totalorder %s13, 1
      %s1200 = scalar_select %p1199, %s13, 1
      %s1201 = smul.addr %s1200, 8
      %s1202 = scalar_lea.vmem %s2, %s1201
      // Predicated region
      $region29: #{vt_decoder_layer.13} parent=27 // pred_check
        %p1203 = pneg %p83
      $region30: #{vt_decoder_layer.13} parent=27 // pred_check_branch
        %1205 = sbr.rel (%p1203) target = $region32
      $region31: #{vt_decoder_layer.13} parent=27 // pred_region
        _
      $region32: #{vt_decoder_layer.13} parent=27 // pred_fallthru
        _
    $region28: #{vt_decoder_layer.13} parent=5 // pred_fallthru
      _
    %p1206 = scmp.le.s32.totalorder 2, %s8
    // Predicated region
    $region33: #{vt_decoder_layer.13} parent=5 // pred_check
      %p1207 = pneg %p1206
    $region34: #{vt_decoder_layer.13} parent=5 // pred_check_branch
      %1209 = sbr.rel (%p1207) target = $region36
    $region35: #{vt_decoder_layer.13} parent=5 // pred_region
      %s1210 = ssub.s32 %s8, 2
      // Predicated region
      $region37: #{vt_decoder_layer.13} parent=35 // pred_check
        %p1211 = pneg %p89
      $region38: #{vt_decoder_layer.13} parent=35 // pred_check_branch
        %1213 = sbr.rel (%p1211) target = $region40
      $region39: #{vt_decoder_layer.13} parent=35 // pred_region
        %p1214 = scmp.lt.s32.totalorder %s14, 1
        %s1215 = scalar_select %p1214, %s14, 1
        %s1216 = smul.addr %s1215, 8
        %s1217 = scalar_lea.vmem %s2, %s1216
      $region40: #{vt_decoder_layer.13} parent=35 // pred_fallthru
        _
    $region36: #{vt_decoder_layer.13} parent=5 // pred_fallthru
      _
  $region6: #{vt_decoder_layer.13} parent=0 // loop_footer
    %s12 = sadd.s32 1, %s8
  $region7: #{vt_decoder_layer.13} parent=0 // loop_footer_branch
    %7 = sbr.rel target = $region3
  $region8: #{vt_decoder_layer.13} parent=0 // loop_exit
    _

</llo_original>
